<compile_context>
chip_gen: v5e
topology: v5e:2x2
jax: 0.10.0
libtpu: 0.0.40
codegen_flags: <defaults>
</compile_context>

<pallas_src>
import jax
import jax.numpy as jnp
from jax import lax
from jax.experimental import pallas as pl
from jax.experimental.pallas import tpu as pltpu


H_PAD = 128      # lane-dense padded hidden dim (logical hidden_dims = 32)
F_PAD = 128      # lane-dense padded input-feature dim
NODE_PAD = 128   # node-set row counts padded to this multiple (lane/K align)
E_PAD = 128      # minimum lane-dense padded edge count for the score row


def _round_up(x, m):
    return ((x + m - 1) // m) * m


def _pad2(x, rows=None, cols=None):
    """Zero-pad a 2-D array up to (rows, cols)."""
    r = x.shape[0] if rows is None else rows
    c = x.shape[1] if cols is None else cols
    out = jnp.zeros((r, c), x.dtype)
    return out.at[: x.shape[0], : x.shape[1]].set(x)


def _vmem():
    return pl.BlockSpec(memory_space=pltpu.MemorySpace.VMEM)


# ---------------------------------------------------------------------------
# One-time preprocessing: pad & cast weights + adjacency (NOT in the call path)
# ---------------------------------------------------------------------------

def prepare_model(params, blocks):
    f32, bf16 = jnp.float32, jnp.bfloat16
    adj_iu = blocks["adj_item_from_user"]   # per layer: (n_item_dst, n_user_src)
    adj_ui = blocks["adj_user_from_item"]   # per layer: (n_user_dst, n_item_src)
    n_layers = len(adj_iu)

    prep = {
        "wp_item": _pad2(params["Wp_item"], F_PAD, H_PAD).astype(bf16),
        "bp_item": _pad2(params["bp_item"], 1, H_PAD).astype(f32),
        "wp_user": _pad2(params["Wp_user"], F_PAD, H_PAD).astype(bf16),
        "bp_user": _pad2(params["bp_user"], 1, H_PAD).astype(f32),
        "adj_iu": [], "adj_ui": [],
        "w_item": [], "b_item": [], "w_user": [], "b_user": [],
    }

    cur_i_rows = _round_up(blocks["x_item_src"].shape[0], NODE_PAD)
    cur_u_rows = _round_up(blocks["x_user_src"].shape[0], NODE_PAD)
    for l in range(n_layers):
        a, b = adj_iu[l], adj_ui[l]
        ri = _round_up(a.shape[0], NODE_PAD)
        ru = _round_up(b.shape[0], NODE_PAD)
        # dst nodes must be a prefix of the current src set (DGL block layout)
        assert ri <= cur_i_rows and ru <= cur_u_rows
        # adjacency kept f32: exact 1/deg mean aggregation (bf16 parity concern)
        prep["adj_iu"].append(_pad2(a, ri, cur_u_rows).astype(f32))
        prep["adj_ui"].append(_pad2(b, ru, cur_i_rows).astype(f32))
        # fused self+neighbor weights: K=256 single MXU pass per node type
        prep["w_item"].append(jnp.concatenate(
            [_pad2(params["Ws_item"][l], H_PAD, H_PAD),
             _pad2(params["Wn_item"][l], H_PAD, H_PAD)], axis=0).astype(bf16))
        prep["b_item"].append(_pad2(params["bl_item"][l], 1, H_PAD).astype(f32))
        prep["w_user"].append(jnp.concatenate(
            [_pad2(params["Ws_user"][l], H_PAD, H_PAD),
             _pad2(params["Wn_user"][l], H_PAD, H_PAD)], axis=0).astype(bf16))
        prep["b_user"].append(_pad2(params["bl_user"][l], 1, H_PAD).astype(f32))
        cur_i_rows, cur_u_rows = ri, ru

    # NOTE: item_bias is positional over the final block's dst items; for real
    # data the caller must pre-gather per-global-item-ID biases.
    prep["item_bias_col"] = _pad2(
        params["item_bias"].reshape(-1, 1), cur_i_rows, 1).astype(f32)
    return prep


# ---------------------------------------------------------------------------
# Fused kernel: proj -> mean-agg SAGE layers -> skip add -> pos/neg edge scores
# ---------------------------------------------------------------------------

def make_fused_kernel(n_layers):

    def kernel(*refs):
        it = iter(refs)
        x_item_ref = next(it)
        x_user_ref = next(it)
        wp_item_ref = next(it)
        bp_item_ref = next(it)
        wp_user_ref = next(it)
        bp_user_ref = next(it)
        layers = [tuple(next(it) for _ in range(6)) for _ in range(n_layers)]
        bias_ref = next(it)      # (ri_fin, 1) per-item bias
        u_idx_ref = next(it)     # (1, E) int32 user endpoint per edge
        i_idx_ref = next(it)     # (1, E) int32 item endpoint per edge
        o_scores_ref = next(it)  # (1, E) f32 lane-dense scores

        f32, bf16 = jnp.float32, jnp.bfloat16

        # --- LinearProjector on blocks[0].srcnodes (bf16 MXU, f32 accumulate)
        h_item = jnp.dot(x_item_ref[...], wp_item_ref[...],
                         preferred_element_type=f32) + bp_item_ref[...]
        h_user = jnp.dot(x_user_ref[...], wp_user_ref[...],
                         preferred_element_type=f32) + bp_user_ref[...]

        # blocks[-1].dstnodes are a prefix of blocks[0].srcnodes, so the
        # skip-connection projection is a row-prefix of the one above.
        # TODO(synk): assert the sampler preserves this cross-block prefix order.
        ri_fin = layers[-1][0].shape[0]
        ru_fin = layers[-1][1].shape[0]
        h_item_skip = h_item[:ri_fin]
        h_user_skip = h_user[:ru_fin]

        # --- stacked hetero SAGE layers (mean aggregation), unrolled;
        #     activations stay VMEM/vreg resident between layers.
        for l in range(n_layers):
            (adj_iu_ref, adj_ui_ref,
             w_item_ref, b_item_ref, w_user_ref, b_user_ref) = layers[l]
            ri = adj_iu_ref.shape[0]
            ru = adj_ui_ref.shape[0]

            # mean aggregation in f32 (exact 1/deg normalization)
            agg_item = jnp.dot(adj_iu_ref[...], h_user,
                               preferred_element_type=f32)   # items <- users
            agg_user = jnp.dot(adj_ui_ref[...], h_item,
                               preferred_element_type=f32)   # users <- items

            # fused self+neighbor matmul: one K=256 MXU pass per node type
            #   z = relu([h_self | agg] @ [Ws ; Wn] + b)
            xi = jnp.concatenate(
                [h_item[:ri].astype(bf16), agg_item.astype(bf16)], axis=-1)
            xu = jnp.concatenate(
                [h_user[:ru].astype(bf16), agg_user.astype(bf16)], axis=-1)
            z_i = jnp.dot(xi, w_item_ref[...],
                          preferred_element_type=f32) + b_item_ref[...]
            z_u = jnp.dot(xu, w_user_ref[...],
                          preferred_element_type=f32) + b_user_ref[...]
            z_i = jnp.maximum(z_i, 0.0)
            z_u = jnp.maximum(z_u, 0.0)

            # L2 normalize: rsqrt (EUP slot) * mul replaces sqrt + VPU divide.
            # TODO(synk): torch F.normalize clamps with max(norm, eps); this
            # uses rsqrt(sum + eps), differing only for near-zero rows.
            h_item = z_i * lax.rsqrt(
                jnp.sum(z_i * z_i, axis=-1, keepdims=True) + 1e-12)
            h_user = z_u * lax.rsqrt(
                jnp.sum(z_u * z_u, axis=-1, keepdims=True) + 1e-12)

        # --- skip connection: proj(blocks[-1].dstnodes) + net output
        h_item_fin = h_item_skip + h_item
        h_user_fin = h_user_skip + h_user

        # --- fused UserToItemScorer (pos + neg edges, one pass, lane-dense out)
        # S_T[i, u] = <h_item[i], h_user[u]>   (dst counts are tiny -> MXU)
        s_t = lax.dot_general(h_item_fin, h_user_fin,
                              dimension_numbers=(((1,), (1,)), ((), ())),
                              preferred_element_type=f32)      # (ri_fin, ru_fin)
        e_pad = u_idx_ref.shape[1]
        u_oh = (lax.broadcasted_iota(jnp.int32, (ru_fin, e_pad), 0)
                == u_idx_ref[...]).astype(f32)                 # (ru_fin, E)
        per_item = jnp.dot(s_t, u_oh,
                           preferred_element_type=f32)         # (ri_fin, E)
        per_item = per_item + bias_ref[...]                    # + item bias
        i_oh = (lax.broadcasted_iota(jnp.int32, (ri_fin, e_pad), 0)
                == i_idx_ref[...]).astype(f32)                 # (ri_fin, E)
        # score[e] = <h_user[u_e], h_item[i_e]> + bias[i_e]
        o_scores_ref[...] = jnp.sum(per_item * i_oh, axis=0, keepdims=True)

    return kernel


# ---------------------------------------------------------------------------
# Forward: per-call glue is only activation padding + edge-index row packing
# ---------------------------------------------------------------------------

def pinsage_forward(prep, x_item, x_user, pos_edges, neg_edges):
    """Returns (pos_score, neg_score), one scalar per edge."""
    f32, bf16 = jnp.float32, jnp.bfloat16
    n_layers = len(prep["adj_iu"])
    ni_rows = prep["adj_ui"][0].shape[1]   # padded item-src rows
    nu_rows = prep["adj_iu"][0].shape[1]   # padded user-src rows

    # activations: padded per call (everything else was padded in prepare_model)
    xi = _pad2(x_item, ni_rows, F_PAD).astype(bf16)
    xu = _pad2(x_user, nu_rows, F_PAD).astype(bf16)

    n_pos = pos_edges.shape[0]
    n_neg = neg_edges.shape[0]
    e_tot = n_pos + n_neg
    e_pad = max(E_PAD, _round_up(e_tot, 128))
    u_all = jnp.concatenate([pos_edges[:, 0], neg_edges[:, 0]]).astype(jnp.int32)
    i_all = jnp.concatenate([pos_edges[:, 1], neg_edges[:, 1]]).astype(jnp.int32)
    u_row = jnp.zeros((1, e_pad), jnp.int32).at[0, :e_tot].set(u_all)
    i_row = jnp.zeros((1, e_pad), jnp.int32).at[0, :e_tot].set(i_all)

    args = [xi, xu,
            prep["wp_item"], prep["bp_item"], prep["wp_user"], prep["bp_user"]]
    for l in range(n_layers):
        args += [prep["adj_iu"][l], prep["adj_ui"][l],
                 prep["w_item"][l], prep["b_item"][l],
                 prep["w_user"][l], prep["b_user"][l]]
    args += [prep["item_bias_col"], u_row, i_row]

    # advisory cost hint so XLA schedules the fused kernel sensibly
    flops = 2 * ni_rows * F_PAD * H_PAD + 2 * nu_rows * F_PAD * H_PAD
    trans = 0
    for l in range(n_layers):
        ri, ci = prep["adj_iu"][l].shape
        ru, cu = prep["adj_ui"][l].shape
        flops += 2 * ri * ci * H_PAD + 2 * ru * cu * H_PAD          # aggregation
        flops += 2 * ri * 2 * H_PAD * H_PAD + 2 * ru * 2 * H_PAD * H_PAD
        trans += ri + ru                                            # rsqrt rows
    ri_fin = prep["adj_iu"][-1].shape[0]
    ru_fin = prep["adj_ui"][-1].shape[0]
    flops += 2 * ri_fin * H_PAD * ru_fin + 2 * ri_fin * ru_fin * e_pad
    bytes_accessed = sum(int(a.size) * a.dtype.itemsize for a in args) + 4 * e_pad

    scores = pl.pallas_call(
        make_fused_kernel(n_layers),
        out_shape=jax.ShapeDtypeStruct((1, e_pad), f32),
        in_specs=[_vmem()] * len(args),
        out_specs=_vmem(),
        compiler_params=pltpu.CompilerParams(vmem_limit_bytes=16 * 1024 * 1024),
        cost_estimate=pl.CostEstimate(flops=int(flops), transcendentals=int(trans),
                                      bytes_accessed=int(bytes_accessed)),
    )(*args)

    return scores[0, :n_pos], scores[0, n_pos:e_tot]


# ---------------------------------------------------------------------------
# Deterministic synthetic construction
# ---------------------------------------------------------------------------

def _row_normalize(adj):
    rowsum = jnp.sum(adj, axis=1, keepdims=True)
    return adj / jnp.maximum(rowsum, 1.0)


def build_example(key):
    HIDDEN = 32          # hidden_dims (logical; padded to 128 lanes on device)
    N_LAYERS = 2         # n_layers
    F_ITEM, F_USER = 24, 20
    N_ITEM_SRC, N_USER_SRC = 32, 32
    DST_SIZES = [(16, 16), (8, 8)]   # (n_item_dst, n_user_dst) per block
    N_POS, N_NEG = 6, 6

    keys = jax.random.split(key, 16)
    ki = iter(keys)

    x_item_src = jax.random.normal(next(ki), (N_ITEM_SRC, F_ITEM), jnp.float32)
    x_user_src = jax.random.normal(next(ki), (N_USER_SRC, F_USER), jnp.float32)

    adj_iu, adj_ui = [], []
    n_i_src, n_u_src = N_ITEM_SRC, N_USER_SRC
    for (n_i_dst, n_u_dst) in DST_SIZES:
        a = (jax.random.uniform(next(ki), (n_i_dst, n_u_src)) < 0.4).astype(jnp.float32)
        b = (jax.random.uniform(next(ki), (n_u_dst, n_i_src)) < 0.4).astype(jnp.float32)
        adj_iu.append(_row_normalize(a))
        adj_ui.append(_row_normalize(b))
        n_i_src, n_u_src = n_i_dst, n_u_dst

    blocks = {
        "x_item_src": x_item_src,
        "x_user_src": x_user_src,
        "adj_item_from_user": adj_iu,
        "adj_user_from_item": adj_ui,
    }

    def init_w(k, shape, scale=0.1):
        return scale * jax.random.normal(k, shape, jnp.float32)

    params = {
        "Wp_item": init_w(next(ki), (F_ITEM, HIDDEN)),
        "bp_item": jnp.zeros((1, HIDDEN), jnp.float32),
        "Wp_user": init_w(next(ki), (F_USER, HIDDEN)),
        "bp_user": jnp.zeros((1, HIDDEN), jnp.float32),
        "Ws_item": [init_w(next(ki), (HIDDEN, HIDDEN)) for _ in range(N_LAYERS)],
        "Wn_item": [init_w(next(ki), (HIDDEN, HIDDEN)) for _ in range(N_LAYERS)],
        "bl_item": [jnp.zeros((1, HIDDEN), jnp.float32) for _ in range(N_LAYERS)],
        "Ws_user": [init_w(next(ki), (HIDDEN, HIDDEN)) for _ in range(N_LAYERS)],
        "Wn_user": [init_w(next(ki), (HIDDEN, HIDDEN)) for _ in range(N_LAYERS)],
        "bl_user": [jnp.zeros((1, HIDDEN), jnp.float32) for _ in range(N_LAYERS)],
        "item_bias": jnp.zeros((1, DST_SIZES[-1][0]), jnp.float32),
    }

    n_item_dst, n_user_dst = DST_SIZES[-1]
    pos_u = jnp.arange(N_POS, dtype=jnp.int32) % n_user_dst
    pos_i = jnp.arange(N_POS, dtype=jnp.int32) % n_item_dst
    neg_u = pos_u
    neg_i = (pos_i + 3) % n_item_dst
    pos_edges = jnp.stack([pos_u, pos_i], axis=1)
    neg_edges = jnp.stack([neg_u, neg_i], axis=1)

    return params, blocks, pos_edges, neg_edges


if __name__ == "__main__":
    params, blocks, pos_edges, neg_edges = build_example(jax.random.PRNGKey(0))
    prep = jax.tree_util.tree_map(jax.block_until_ready,
                                  prepare_model(params, blocks))  # one-time prep
    fwd = jax.jit(pinsage_forward)
    pos_score, neg_score = fwd(prep, blocks["x_item_src"], blocks["x_user_src"],
                               pos_edges, neg_edges)
    jax.block_until_ready((pos_score, neg_score))
    assert pos_score.shape == (6,) and neg_score.shape == (6,)
    assert bool(jnp.all(jnp.isfinite(pos_score))) and bool(jnp.all(jnp.isfinite(neg_score)))
    print("KERNEL_OK")
</pallas_src>

<mosaic_0001>
module attributes {stable_mosaic.version = 11 : i64} {
  func.func @kernel(%arg0: memref<128x128xbf16, #tpu.memory_space<vmem>>, %arg1: memref<128x128xbf16, #tpu.memory_space<vmem>>, %arg2: memref<128x128xbf16, #tpu.memory_space<vmem>>, %arg3: memref<1x128xf32, #tpu.memory_space<vmem>>, %arg4: memref<128x128xbf16, #tpu.memory_space<vmem>>, %arg5: memref<1x128xf32, #tpu.memory_space<vmem>>, %arg6: memref<128x128xf32, #tpu.memory_space<vmem>>, %arg7: memref<128x128xf32, #tpu.memory_space<vmem>>, %arg8: memref<256x128xbf16, #tpu.memory_space<vmem>>, %arg9: memref<1x128xf32, #tpu.memory_space<vmem>>, %arg10: memref<256x128xbf16, #tpu.memory_space<vmem>>, %arg11: memref<1x128xf32, #tpu.memory_space<vmem>>, %arg12: memref<128x128xf32, #tpu.memory_space<vmem>>, %arg13: memref<128x128xf32, #tpu.memory_space<vmem>>, %arg14: memref<256x128xbf16, #tpu.memory_space<vmem>>, %arg15: memref<1x128xf32, #tpu.memory_space<vmem>>, %arg16: memref<256x128xbf16, #tpu.memory_space<vmem>>, %arg17: memref<1x128xf32, #tpu.memory_space<vmem>>, %arg18: memref<128x1xf32, #tpu.memory_space<vmem>>, %arg19: memref<1x128xi32, #tpu.memory_space<vmem>>, %arg20: memref<1x128xi32, #tpu.memory_space<vmem>>, %arg21: memref<1x128xf32, #tpu.memory_space<vmem>>) attributes {dimension_semantics = [], scalar_prefetch = 0 : i64, scratch_operands = 0 : i64, tpu.core_type = #tpu.core_type<tc>} {
    %c0 = arith.constant 0 : index
    %c0_0 = arith.constant 0 : index
    %0 = vector.load %arg0[%c0, %c0_0] : memref<128x128xbf16, #tpu.memory_space<vmem>>, vector<128x128xbf16>
    %c0_1 = arith.constant 0 : index
    %c0_2 = arith.constant 0 : index
    %1 = vector.load %arg2[%c0_1, %c0_2] : memref<128x128xbf16, #tpu.memory_space<vmem>>, vector<128x128xbf16>
    %cst = arith.constant dense<0.000000e+00> : vector<128x128xf32>
    %2 = tpu.matmul %0, %1, %cst {dimension_numbers = #tpu.dot_dimension_numbers<[1], [0], [0], [1], [0, 0, 1, 1], [], []>} : vector<128x128xbf16>, vector<128x128xbf16>, vector<128x128xf32> -> vector<128x128xf32>
    %c0_3 = arith.constant 0 : index
    %c0_4 = arith.constant 0 : index
    %3 = vector.load %arg3[%c0_3, %c0_4] : memref<1x128xf32, #tpu.memory_space<vmem>>, vector<1x128xf32>
    %4 = vector.broadcast %3 : vector<1x128xf32> to vector<128x128xf32>
    %5 = arith.addf %2, %4 : vector<128x128xf32>
    %c0_5 = arith.constant 0 : index
    %c0_6 = arith.constant 0 : index
    %6 = vector.load %arg1[%c0_5, %c0_6] : memref<128x128xbf16, #tpu.memory_space<vmem>>, vector<128x128xbf16>
    %c0_7 = arith.constant 0 : index
    %c0_8 = arith.constant 0 : index
    %7 = vector.load %arg4[%c0_7, %c0_8] : memref<128x128xbf16, #tpu.memory_space<vmem>>, vector<128x128xbf16>
    %cst_9 = arith.constant dense<0.000000e+00> : vector<128x128xf32>
    %8 = tpu.matmul %6, %7, %cst_9 {dimension_numbers = #tpu.dot_dimension_numbers<[1], [0], [0], [1], [0, 0, 1, 1], [], []>} : vector<128x128xbf16>, vector<128x128xbf16>, vector<128x128xf32> -> vector<128x128xf32>
    %c0_10 = arith.constant 0 : index
    %c0_11 = arith.constant 0 : index
    %9 = vector.load %arg5[%c0_10, %c0_11] : memref<1x128xf32, #tpu.memory_space<vmem>>, vector<1x128xf32>
    %10 = vector.broadcast %9 : vector<1x128xf32> to vector<128x128xf32>
    %11 = arith.addf %8, %10 : vector<128x128xf32>
    %c0_12 = arith.constant 0 : index
    %c0_13 = arith.constant 0 : index
    %12 = vector.load %arg6[%c0_12, %c0_13] : memref<128x128xf32, #tpu.memory_space<vmem>>, vector<128x128xf32>
    %cst_14 = arith.constant dense<0.000000e+00> : vector<128x128xf32>
    %13 = tpu.matmul %12, %11, %cst_14 {dimension_numbers = #tpu.dot_dimension_numbers<[1], [0], [0], [1], [0, 0, 1, 1], [], []>} : vector<128x128xf32>, vector<128x128xf32>, vector<128x128xf32> -> vector<128x128xf32>
    %c0_15 = arith.constant 0 : index
    %c0_16 = arith.constant 0 : index
    %14 = vector.load %arg7[%c0_15, %c0_16] : memref<128x128xf32, #tpu.memory_space<vmem>>, vector<128x128xf32>
    %cst_17 = arith.constant dense<0.000000e+00> : vector<128x128xf32>
    %15 = tpu.matmul %14, %5, %cst_17 {dimension_numbers = #tpu.dot_dimension_numbers<[1], [0], [0], [1], [0, 0, 1, 1], [], []>} : vector<128x128xf32>, vector<128x128xf32>, vector<128x128xf32> -> vector<128x128xf32>
    %16 = arith.truncf %5 : vector<128x128xf32> to vector<128x128xbf16>
    %17 = arith.truncf %13 : vector<128x128xf32> to vector<128x128xbf16>
    %18 = tpu.concatenate %16, %17 in 1 : vector<128x128xbf16>, vector<128x128xbf16> -> vector<128x256xbf16>
    %19 = arith.truncf %11 : vector<128x128xf32> to vector<128x128xbf16>
    %20 = arith.truncf %15 : vector<128x128xf32> to vector<128x128xbf16>
    %21 = tpu.concatenate %19, %20 in 1 : vector<128x128xbf16>, vector<128x128xbf16> -> vector<128x256xbf16>
    %c0_18 = arith.constant 0 : index
    %c0_19 = arith.constant 0 : index
    %22 = vector.load %arg8[%c0_18, %c0_19] : memref<256x128xbf16, #tpu.memory_space<vmem>>, vector<256x128xbf16>
    %cst_20 = arith.constant dense<0.000000e+00> : vector<128x128xf32>
    %23 = tpu.matmul %18, %22, %cst_20 {dimension_numbers = #tpu.dot_dimension_numbers<[1], [0], [0], [1], [0, 0, 1, 1], [], []>} : vector<128x256xbf16>, vector<256x128xbf16>, vector<128x128xf32> -> vector<128x128xf32>
    %c0_21 = arith.constant 0 : index
    %c0_22 = arith.constant 0 : index
    %24 = vector.load %arg9[%c0_21, %c0_22] : memref<1x128xf32, #tpu.memory_space<vmem>>, vector<1x128xf32>
    %25 = vector.broadcast %24 : vector<1x128xf32> to vector<128x128xf32>
    %26 = arith.addf %23, %25 : vector<128x128xf32>
    %c0_23 = arith.constant 0 : index
    %c0_24 = arith.constant 0 : index
    %27 = vector.load %arg10[%c0_23, %c0_24] : memref<256x128xbf16, #tpu.memory_space<vmem>>, vector<256x128xbf16>
    %cst_25 = arith.constant dense<0.000000e+00> : vector<128x128xf32>
    %28 = tpu.matmul %21, %27, %cst_25 {dimension_numbers = #tpu.dot_dimension_numbers<[1], [0], [0], [1], [0, 0, 1, 1], [], []>} : vector<128x256xbf16>, vector<256x128xbf16>, vector<128x128xf32> -> vector<128x128xf32>
    %c0_26 = arith.constant 0 : index
    %c0_27 = arith.constant 0 : index
    %29 = vector.load %arg11[%c0_26, %c0_27] : memref<1x128xf32, #tpu.memory_space<vmem>>, vector<1x128xf32>
    %30 = vector.broadcast %29 : vector<1x128xf32> to vector<128x128xf32>
    %31 = arith.addf %28, %30 : vector<128x128xf32>
    %cst_28 = arith.constant 0.000000e+00 : f32
    %32 = vector.broadcast %cst_28 : f32 to vector<128x128xf32>
    %33 = arith.maximumf %26, %32 : vector<128x128xf32>
    %cst_29 = arith.constant 0.000000e+00 : f32
    %34 = vector.broadcast %cst_29 : f32 to vector<128x128xf32>
    %35 = arith.maximumf %31, %34 : vector<128x128xf32>
    %36 = arith.mulf %33, %33 : vector<128x128xf32>
    %cst_30 = arith.constant dense<0.000000e+00> : vector<128xf32>
    %37 = vector.multi_reduction <add>, %36, %cst_30 [1] : vector<128x128xf32> to vector<128xf32>
    %38 = vector.shape_cast %37 : vector<128xf32> to vector<128x1xf32>
    %cst_31 = arith.constant 9.99999996E-13 : f32
    %39 = vector.broadcast %cst_31 : f32 to vector<128x1xf32>
    %40 = arith.addf %38, %39 : vector<128x1xf32>
    %41 = math.rsqrt %40 : vector<128x1xf32>
    %42 = vector.broadcast %41 : vector<128x1xf32> to vector<128x128xf32>
    %43 = arith.mulf %33, %42 : vector<128x128xf32>
    %44 = arith.mulf %35, %35 : vector<128x128xf32>
    %cst_32 = arith.constant dense<0.000000e+00> : vector<128xf32>
    %45 = vector.multi_reduction <add>, %44, %cst_32 [1] : vector<128x128xf32> to vector<128xf32>
    %46 = vector.shape_cast %45 : vector<128xf32> to vector<128x1xf32>
    %cst_33 = arith.constant 9.99999996E-13 : f32
    %47 = vector.broadcast %cst_33 : f32 to vector<128x1xf32>
    %48 = arith.addf %46, %47 : vector<128x1xf32>
    %49 = math.rsqrt %48 : vector<128x1xf32>
    %50 = vector.broadcast %49 : vector<128x1xf32> to vector<128x128xf32>
    %51 = arith.mulf %35, %50 : vector<128x128xf32>
    %c0_34 = arith.constant 0 : index
    %c0_35 = arith.constant 0 : index
    %52 = vector.load %arg12[%c0_34, %c0_35] : memref<128x128xf32, #tpu.memory_space<vmem>>, vector<128x128xf32>
    %cst_36 = arith.constant dense<0.000000e+00> : vector<128x128xf32>
    %53 = tpu.matmul %52, %51, %cst_36 {dimension_numbers = #tpu.dot_dimension_numbers<[1], [0], [0], [1], [0, 0, 1, 1], [], []>} : vector<128x128xf32>, vector<128x128xf32>, vector<128x128xf32> -> vector<128x128xf32>
    %c0_37 = arith.constant 0 : index
    %c0_38 = arith.constant 0 : index
    %54 = vector.load %arg13[%c0_37, %c0_38] : memref<128x128xf32, #tpu.memory_space<vmem>>, vector<128x128xf32>
    %cst_39 = arith.constant dense<0.000000e+00> : vector<128x128xf32>
    %55 = tpu.matmul %54, %43, %cst_39 {dimension_numbers = #tpu.dot_dimension_numbers<[1], [0], [0], [1], [0, 0, 1, 1], [], []>} : vector<128x128xf32>, vector<128x128xf32>, vector<128x128xf32> -> vector<128x128xf32>
    %56 = arith.truncf %43 : vector<128x128xf32> to vector<128x128xbf16>
    %57 = arith.truncf %53 : vector<128x128xf32> to vector<128x128xbf16>
    %58 = tpu.concatenate %56, %57 in 1 : vector<128x128xbf16>, vector<128x128xbf16> -> vector<128x256xbf16>
    %59 = arith.truncf %51 : vector<128x128xf32> to vector<128x128xbf16>
    %60 = arith.truncf %55 : vector<128x128xf32> to vector<128x128xbf16>
    %61 = tpu.concatenate %59, %60 in 1 : vector<128x128xbf16>, vector<128x128xbf16> -> vector<128x256xbf16>
    %c0_40 = arith.constant 0 : index
    %c0_41 = arith.constant 0 : index
    %62 = vector.load %arg14[%c0_40, %c0_41] : memref<256x128xbf16, #tpu.memory_space<vmem>>, vector<256x128xbf16>
    %cst_42 = arith.constant dense<0.000000e+00> : vector<128x128xf32>
    %63 = tpu.matmul %58, %62, %cst_42 {dimension_numbers = #tpu.dot_dimension_numbers<[1], [0], [0], [1], [0, 0, 1, 1], [], []>} : vector<128x256xbf16>, vector<256x128xbf16>, vector<128x128xf32> -> vector<128x128xf32>
    %c0_43 = arith.constant 0 : index
    %c0_44 = arith.constant 0 : index
    %64 = vector.load %arg15[%c0_43, %c0_44] : memref<1x128xf32, #tpu.memory_space<vmem>>, vector<1x128xf32>
    %65 = vector.broadcast %64 : vector<1x128xf32> to vector<128x128xf32>
    %66 = arith.addf %63, %65 : vector<128x128xf32>
    %c0_45 = arith.constant 0 : index
    %c0_46 = arith.constant 0 : index
    %67 = vector.load %arg16[%c0_45, %c0_46] : memref<256x128xbf16, #tpu.memory_space<vmem>>, vector<256x128xbf16>
    %cst_47 = arith.constant dense<0.000000e+00> : vector<128x128xf32>
    %68 = tpu.matmul %61, %67, %cst_47 {dimension_numbers = #tpu.dot_dimension_numbers<[1], [0], [0], [1], [0, 0, 1, 1], [], []>} : vector<128x256xbf16>, vector<256x128xbf16>, vector<128x128xf32> -> vector<128x128xf32>
    %c0_48 = arith.constant 0 : index
    %c0_49 = arith.constant 0 : index
    %69 = vector.load %arg17[%c0_48, %c0_49] : memref<1x128xf32, #tpu.memory_space<vmem>>, vector<1x128xf32>
    %70 = vector.broadcast %69 : vector<1x128xf32> to vector<128x128xf32>
    %71 = arith.addf %68, %70 : vector<128x128xf32>
    %cst_50 = arith.constant 0.000000e+00 : f32
    %72 = vector.broadcast %cst_50 : f32 to vector<128x128xf32>
    %73 = arith.maximumf %66, %72 : vector<128x128xf32>
    %cst_51 = arith.constant 0.000000e+00 : f32
    %74 = vector.broadcast %cst_51 : f32 to vector<128x128xf32>
    %75 = arith.maximumf %71, %74 : vector<128x128xf32>
    %76 = arith.mulf %73, %73 : vector<128x128xf32>
    %cst_52 = arith.constant dense<0.000000e+00> : vector<128xf32>
    %77 = vector.multi_reduction <add>, %76, %cst_52 [1] : vector<128x128xf32> to vector<128xf32>
    %78 = vector.shape_cast %77 : vector<128xf32> to vector<128x1xf32>
    %cst_53 = arith.constant 9.99999996E-13 : f32
    %79 = vector.broadcast %cst_53 : f32 to vector<128x1xf32>
    %80 = arith.addf %78, %79 : vector<128x1xf32>
    %81 = math.rsqrt %80 : vector<128x1xf32>
    %82 = vector.broadcast %81 : vector<128x1xf32> to vector<128x128xf32>
    %83 = arith.mulf %73, %82 : vector<128x128xf32>
    %84 = arith.mulf %75, %75 : vector<128x128xf32>
    %cst_54 = arith.constant dense<0.000000e+00> : vector<128xf32>
    %85 = vector.multi_reduction <add>, %84, %cst_54 [1] : vector<128x128xf32> to vector<128xf32>
    %86 = vector.shape_cast %85 : vector<128xf32> to vector<128x1xf32>
    %cst_55 = arith.constant 9.99999996E-13 : f32
    %87 = vector.broadcast %cst_55 : f32 to vector<128x1xf32>
    %88 = arith.addf %86, %87 : vector<128x1xf32>
    %89 = math.rsqrt %88 : vector<128x1xf32>
    %90 = vector.broadcast %89 : vector<128x1xf32> to vector<128x128xf32>
    %91 = arith.mulf %75, %90 : vector<128x128xf32>
    %92 = arith.addf %5, %83 : vector<128x128xf32>
    %93 = arith.addf %11, %91 : vector<128x128xf32>
    %cst_56 = arith.constant dense<0.000000e+00> : vector<128x128xf32>
    %94 = tpu.matmul %92, %93, %cst_56 {dimension_numbers = #tpu.dot_dimension_numbers<[1], [1], [0], [0], [0, 0, 1, 0], [], []>} : vector<128x128xf32>, vector<128x128xf32>, vector<128x128xf32> -> vector<128x128xf32>
    %95 = tpu.iota {dimensions = array<i32: 0>} : vector<128x128xi32>
    %c0_57 = arith.constant 0 : index
    %c0_58 = arith.constant 0 : index
    %96 = vector.load %arg19[%c0_57, %c0_58] : memref<1x128xi32, #tpu.memory_space<vmem>>, vector<1x128xi32>
    %97 = vector.broadcast %96 : vector<1x128xi32> to vector<128x128xi32>
    %98 = arith.cmpi eq, %95, %97 : vector<128x128xi32>
    %99 = arith.extui %98 : vector<128x128xi1> to vector<128x128xi32>
    %100 = arith.sitofp %99 : vector<128x128xi32> to vector<128x128xf32>
    %cst_59 = arith.constant dense<0.000000e+00> : vector<128x128xf32>
    %101 = tpu.matmul %94, %100, %cst_59 {dimension_numbers = #tpu.dot_dimension_numbers<[1], [0], [0], [1], [0, 0, 1, 1], [], []>} : vector<128x128xf32>, vector<128x128xf32>, vector<128x128xf32> -> vector<128x128xf32>
    %c0_60 = arith.constant 0 : index
    %c0_61 = arith.constant 0 : index
    %102 = vector.load %arg18[%c0_60, %c0_61] : memref<128x1xf32, #tpu.memory_space<vmem>>, vector<128x1xf32>
    %103 = vector.broadcast %102 : vector<128x1xf32> to vector<128x128xf32>
    %104 = arith.addf %101, %103 : vector<128x128xf32>
    %105 = tpu.iota {dimensions = array<i32: 0>} : vector<128x128xi32>
    %c0_62 = arith.constant 0 : index
    %c0_63 = arith.constant 0 : index
    %106 = vector.load %arg20[%c0_62, %c0_63] : memref<1x128xi32, #tpu.memory_space<vmem>>, vector<1x128xi32>
    %107 = vector.broadcast %106 : vector<1x128xi32> to vector<128x128xi32>
    %108 = arith.cmpi eq, %105, %107 : vector<128x128xi32>
    %109 = arith.extui %108 : vector<128x128xi1> to vector<128x128xi32>
    %110 = arith.sitofp %109 : vector<128x128xi32> to vector<128x128xf32>
    %111 = arith.mulf %104, %110 : vector<128x128xf32>
    %cst_64 = arith.constant dense<0.000000e+00> : vector<128xf32>
    %112 = vector.multi_reduction <add>, %111, %cst_64 [0] : vector<128x128xf32> to vector<128xf32>
    %113 = vector.shape_cast %112 : vector<128xf32> to vector<1x128xf32>
    %c0_65 = arith.constant 0 : index
    %c0_66 = arith.constant 0 : index
    %114 = vector.load %arg21[%c0_65, %c0_66] : memref<1x128xf32, #tpu.memory_space<vmem>>, vector<1x128xf32>
    tpu.vector_store %arg21[%c0_65, %c0_66], %113 {strides = array<i32>} : memref<1x128xf32, #tpu.memory_space<vmem>>, vector<1x128xf32>,
    return
  }
}

</mosaic_0001>

<llo_original>
// kernel: pinsage_forward.1
$region0: #{pinsage_forward.1}
  #allocation0 [shape = 'u32[]', space=smem, size = 0x4, offset = 0x4, fixed_abs, tag = 'smem constant byte address 0x4 - core index']
  #allocation1 [shape = 'u32[72,128]{1,0:T(1,128)}', space=vmem, size = 0x9000, scoped, tag = 'internal scratch']
  %s0 = inlined_call_operand.vmem [shape: bf16[128,128], index: 0, kind: input, shape index: {}]
  %s1 = inlined_call_operand.vmem [shape: bf16[128,128], index: 1, kind: input, shape index: {}]
  %s2 = inlined_call_operand.vmem [shape: bf16[128,128], index: 2, kind: input, shape index: {}]
  %s3 = inlined_call_operand.hbm [shape: f32[1,128], index: 3, kind: input, shape index: {}]
  %s4 = inlined_call_operand.hbm [shape: bf16[128,128], index: 4, kind: input, shape index: {}]
  %s5 = inlined_call_operand.vmem [shape: f32[1,128], index: 5, kind: input, shape index: {}]
  %s6 = inlined_call_operand.vmem [shape: f32[128,128], index: 6, kind: input, shape index: {}]
  %s7 = inlined_call_operand.vmem [shape: f32[128,128], index: 7, kind: input, shape index: {}]
  %s8 = inlined_call_operand.vmem [shape: bf16[256,128], index: 8, kind: input, shape index: {}]
  %s9 = inlined_call_operand.hbm [shape: f32[1,128], index: 9, kind: input, shape index: {}]
  %s10 = inlined_call_operand.hbm [shape: bf16[256,128], index: 10, kind: input, shape index: {}]
  %s11 = inlined_call_operand.hbm [shape: f32[1,128], index: 11, kind: input, shape index: {}]
  %s12 = inlined_call_operand.hbm [shape: f32[128,128], index: 12, kind: input, shape index: {}]
  %s13 = inlined_call_operand.hbm [shape: f32[128,128], index: 13, kind: input, shape index: {}]
  %s14 = inlined_call_operand.hbm [shape: bf16[256,128], index: 14, kind: input, shape index: {}]
  %s15 = inlined_call_operand.hbm [shape: f32[1,128], index: 15, kind: input, shape index: {}]
  %s16 = inlined_call_operand.hbm [shape: bf16[256,128], index: 16, kind: input, shape index: {}]
  %s17 = inlined_call_operand.hbm [shape: f32[1,128], index: 17, kind: input, shape index: {}]
  %s18 = inlined_call_operand.vmem [shape: f32[128,1], index: 18, kind: input, shape index: {}]
  %s19 = inlined_call_operand.vmem [shape: s32[1,128], index: 19, kind: input, shape index: {}]
  %s20 = inlined_call_operand.vmem [shape: s32[1,128], index: 20, kind: input, shape index: {}]
  %s21 = inlined_call_operand.vmem [shape: f32[1,128], index: 21, kind: output, shape index: {}]
  %s22 = sld [smem:[#allocation0]]
  $region138: #{pinsage_forward.1} parent=0
    _
  %s24 = ssub.s32 1, %s22
  %s25 = scalar_select 0, %s24, %s22
  $region1: #{pinsage_forward.1} parent=0
    #allocation2 [shape = 'u8[512]{0}', space=vmem, size = 0x400, scoped, tag = 'input window, operand 3, single buffered']
    #allocation3 [shape = 's32[1]{0}', space=sflag, size = 0x4, scoped, tag = 'scoped memory for pinsage_forward.1']
    #allocation4 [shape = 'u8[32768]{0}', space=vmem, size = 0x8000, scoped, tag = 'input window, operand 4, single buffered']
    #allocation5 [shape = 's32[1]{0}', space=sflag, size = 0x4, scoped, tag = 'scoped memory for pinsage_forward.1']
    #allocation6 [shape = 'u8[512]{0}', space=vmem, size = 0x400, scoped, tag = 'input window, operand 9, single buffered']
    #allocation7 [shape = 'u8[65536]{0}', space=vmem, size = 0x10000, scoped, tag = 'input window, operand 10, single buffered']
    #allocation8 [shape = 's32[1]{0}', space=sflag, size = 0x4, scoped, tag = 'scoped memory for pinsage_forward.1']
    #allocation9 [shape = 'u8[512]{0}', space=vmem, size = 0x400, scoped, tag = 'input window, operand 11, single buffered']
    #allocation10 [shape = 'u8[65536]{0}', space=vmem, size = 0x10000, scoped, tag = 'input window, operand 12, single buffered']
    #allocation11 [shape = 's32[1]{0}', space=sflag, size = 0x4, scoped, tag = 'scoped memory for pinsage_forward.1']
    #allocation12 [shape = 'u8[65536]{0}', space=vmem, size = 0x10000, scoped, tag = 'input window, operand 13, single buffered']
    #allocation13 [shape = 'u8[65536]{0}', space=vmem, size = 0x10000, scoped, tag = 'input window, operand 14, single buffered']
    #allocation14 [shape = 's32[1]{0}', space=sflag, size = 0x4, scoped, tag = 'scoped memory for pinsage_forward.1']
    #allocation15 [shape = 'u8[512]{0}', space=vmem, size = 0x400, scoped, tag = 'input window, operand 15, single buffered']
    #allocation16 [shape = 'u8[65536]{0}', space=vmem, size = 0x10000, scoped, tag = 'input window, operand 16, single buffered']
    #allocation17 [shape = 's32[1]{0}', space=sflag, size = 0x4, scoped, tag = 'scoped memory for pinsage_forward.1']
    #allocation18 [shape = 'u8[512]{0}', space=vmem, size = 0x400, scoped, tag = 'input window, operand 17, single buffered']
    %26 = vsyncpa [#allocation3], 0
    %27 = vsyncpa [#allocation5], 0
    %28 = vsyncpa [#allocation8], 0
    %29 = vsyncpa [#allocation11], 0
    %30 = vsyncpa [#allocation14], 0
    %31 = vsyncpa [#allocation17], 0
    // Predicated region
    $region2: #{pinsage_forward.1} parent=1 // pred_check
      _
    $region3: #{pinsage_forward.1} parent=1 // pred_check_branch
      %33 = sbr.rel (0) target = $region5
    $region4: #{pinsage_forward.1} parent=1 // pred_region
      _
    $region5: #{pinsage_forward.1} parent=1 // pred_fallthru
      _
    // Predicated region
    $region6: #{pinsage_forward.1} parent=1 // pred_check
      _
    $region7: #{pinsage_forward.1} parent=1 // pred_check_branch
      %35 = sbr.rel (0) target = $region9
    $region8: #{pinsage_forward.1} parent=1 // pred_region
      _
    $region9: #{pinsage_forward.1} parent=1 // pred_fallthru
      _
    // Predicated region
    $region10: #{pinsage_forward.1} parent=1 // pred_check
      _
    $region11: #{pinsage_forward.1} parent=1 // pred_check_branch
      %37 = sbr.rel (0) target = $region13
    $region12: #{pinsage_forward.1} parent=1 // pred_region
      _
    $region13: #{pinsage_forward.1} parent=1 // pred_fallthru
      _
    // Predicated region
    $region14: #{pinsage_forward.1} parent=1 // pred_check
      _
    $region15: #{pinsage_forward.1} parent=1 // pred_check_branch
      %39 = sbr.rel (0) target = $region17
    $region16: #{pinsage_forward.1} parent=1 // pred_region
      %41 = vsyncadd [#allocation3], 0
      %s43 = sshll.u32 %s3, 4
      %s44 = int_to_ptr.hbm [resolvable:$true] %s43
      %s45 = sshll.u32 [#allocation2], 4
      %s46 = int_to_ptr.vmem [resolvable:$true] %s45
      %48 = dma.hbm_to_vmem [thread:$0]  %s44, 16, %s46, [#allocation3]
    $region17: #{pinsage_forward.1} parent=1 // pred_fallthru
      _
    // Predicated region
    $region18: #{pinsage_forward.1} parent=1 // pred_check
      _
    $region19: #{pinsage_forward.1} parent=1 // pred_check_branch
      %50 = sbr.rel (0) target = $region21
    $region20: #{pinsage_forward.1} parent=1 // pred_region
      %52 = vsyncadd [#allocation5], 0
      %s53 = sshll.u32 %s4, 4
      %s54 = int_to_ptr.hbm [resolvable:$true] %s53
      %s55 = sshll.u32 [#allocation4], 4
      %s56 = int_to_ptr.vmem [resolvable:$true] %s55
      %61 = dma.hbm_to_vmem [thread:$0]  %s54, 1024, %s56, [#allocation5], 64, 64, 4
    $region21: #{pinsage_forward.1} parent=1 // pred_fallthru
      _
    // Predicated region
    $region22: #{pinsage_forward.1} parent=1 // pred_check
      _
    $region23: #{pinsage_forward.1} parent=1 // pred_check_branch
      %63 = sbr.rel (0) target = $region25
    $region24: #{pinsage_forward.1} parent=1 // pred_region
      _
    $region25: #{pinsage_forward.1} parent=1 // pred_fallthru
      _
    // Predicated region
    $region26: #{pinsage_forward.1} parent=1 // pred_check
      _
    $region27: #{pinsage_forward.1} parent=1 // pred_check_branch
      %65 = sbr.rel (0) target = $region29
    $region28: #{pinsage_forward.1} parent=1 // pred_region
      _
    $region29: #{pinsage_forward.1} parent=1 // pred_fallthru
      _
    // Predicated region
    $region30: #{pinsage_forward.1} parent=1 // pred_check
      _
    $region31: #{pinsage_forward.1} parent=1 // pred_check_branch
      %67 = sbr.rel (0) target = $region33
    $region32: #{pinsage_forward.1} parent=1 // pred_region
      _
    $region33: #{pinsage_forward.1} parent=1 // pred_fallthru
      _
    // Predicated region
    $region34: #{pinsage_forward.1} parent=1 // pred_check
      _
    $region35: #{pinsage_forward.1} parent=1 // pred_check_branch
      %69 = sbr.rel (0) target = $region37
    $region36: #{pinsage_forward.1} parent=1 // pred_region
      _
    $region37: #{pinsage_forward.1} parent=1 // pred_fallthru
      _
    // Predicated region
    $region38: #{pinsage_forward.1} parent=1 // pred_check
      _
    $region39: #{pinsage_forward.1} parent=1 // pred_check_branch
      %71 = sbr.rel (0) target = $region41
    $region40: #{pinsage_forward.1} parent=1 // pred_region
      %73 = vsyncadd [#allocation5], 0
      %s75 = sshll.u32 %s9, 4
      %s76 = int_to_ptr.hbm [resolvable:$true] %s75
      %s77 = sshll.u32 [#allocation6], 4
      %s78 = int_to_ptr.vmem [resolvable:$true] %s77
      %80 = dma.hbm_to_vmem [thread:$0]  %s76, 16, %s78, [#allocation5]
    $region41: #{pinsage_forward.1} parent=1 // pred_fallthru
      _
    // Predicated region
    $region42: #{pinsage_forward.1} parent=1 // pred_check
      _
    $region43: #{pinsage_forward.1} parent=1 // pred_check_branch
      %82 = sbr.rel (0) target = $region45
    $region44: #{pinsage_forward.1} parent=1 // pred_region
      %84 = vsyncadd [#allocation8], 0
      %s85 = sshll.u32 %s10, 4
      %s86 = int_to_ptr.hbm [resolvable:$true] %s85
      %s87 = sshll.u32 [#allocation7], 4
      %s88 = int_to_ptr.vmem [resolvable:$true] %s87
      %93 = dma.hbm_to_vmem [thread:$0]  %s86, 2048, %s88, [#allocation8], 64, 64, 4
    $region45: #{pinsage_forward.1} parent=1 // pred_fallthru
      _
    // Predicated region
    $region46: #{pinsage_forward.1} parent=1 // pred_check
      _
    $region47: #{pinsage_forward.1} parent=1 // pred_check_branch
      %95 = sbr.rel (0) target = $region49
    $region48: #{pinsage_forward.1} parent=1 // pred_region
      %97 = vsyncadd [#allocation8], 0
      %s99 = sshll.u32 %s11, 4
      %s100 = int_to_ptr.hbm [resolvable:$true] %s99
      %s101 = sshll.u32 [#allocation9], 4
      %s102 = int_to_ptr.vmem [resolvable:$true] %s101
      %104 = dma.hbm_to_vmem [thread:$0]  %s100, 16, %s102, [#allocation8]
    $region49: #{pinsage_forward.1} parent=1 // pred_fallthru
      _
    // Predicated region
    $region50: #{pinsage_forward.1} parent=1 // pred_check
      _
    $region51: #{pinsage_forward.1} parent=1 // pred_check_branch
      %106 = sbr.rel (0) target = $region53
    $region52: #{pinsage_forward.1} parent=1 // pred_region
      %108 = vsyncadd [#allocation11], 0
      %s109 = sshll.u32 %s12, 4
      %s110 = int_to_ptr.hbm [resolvable:$true] %s109
      %s111 = sshll.u32 [#allocation10], 4
      %s112 = int_to_ptr.vmem [resolvable:$true] %s111
      %117 = dma.hbm_to_vmem [thread:$0]  %s110, 2048, %s112, [#allocation11], 128, 128, 8
    $region53: #{pinsage_forward.1} parent=1 // pred_fallthru
      _
    // Predicated region
    $region54: #{pinsage_forward.1} parent=1 // pred_check
      _
    $region55: #{pinsage_forward.1} parent=1 // pred_check_branch
      %119 = sbr.rel (0) target = $region57
    $region56: #{pinsage_forward.1} parent=1 // pred_region
      %121 = vsyncadd [#allocation11], 0
      %s122 = sshll.u32 %s13, 4
      %s123 = int_to_ptr.hbm [resolvable:$true] %s122
      %s124 = sshll.u32 [#allocation12], 4
      %s125 = int_to_ptr.vmem [resolvable:$true] %s124
      %130 = dma.hbm_to_vmem [thread:$0]  %s123, 2048, %s125, [#allocation11], 128, 128, 8
    $region57: #{pinsage_forward.1} parent=1 // pred_fallthru
      _
    // Predicated region
    $region58: #{pinsage_forward.1} parent=1 // pred_check
      _
    $region59: #{pinsage_forward.1} parent=1 // pred_check_branch
      %132 = sbr.rel (0) target = $region61
    $region60: #{pinsage_forward.1} parent=1 // pred_region
      %134 = vsyncadd [#allocation14], 0
      %s135 = sshll.u32 %s14, 4
      %s136 = int_to_ptr.hbm [resolvable:$true] %s135
      %s137 = sshll.u32 [#allocation13], 4
      %s138 = int_to_ptr.vmem [resolvable:$true] %s137
      %143 = dma.hbm_to_vmem [thread:$0]  %s136, 2048, %s138, [#allocation14], 64, 64, 4
    $region61: #{pinsage_forward.1} parent=1 // pred_fallthru
      _
    // Predicated region
    $region62: #{pinsage_forward.1} parent=1 // pred_check
      _
    $region63: #{pinsage_forward.1} parent=1 // pred_check_branch
      %145 = sbr.rel (0) target = $region65
    $region64: #{pinsage_forward.1} parent=1 // pred_region
      %147 = vsyncadd [#allocation14], 0
      %s149 = sshll.u32 %s15, 4
      %s150 = int_to_ptr.hbm [resolvable:$true] %s149
      %s151 = sshll.u32 [#allocation15], 4
      %s152 = int_to_ptr.vmem [resolvable:$true] %s151
      %154 = dma.hbm_to_vmem [thread:$0]  %s150, 16, %s152, [#allocation14]
    $region65: #{pinsage_forward.1} parent=1 // pred_fallthru
      _
    // Predicated region
    $region66: #{pinsage_forward.1} parent=1 // pred_check
      _
    $region67: #{pinsage_forward.1} parent=1 // pred_check_branch
      %156 = sbr.rel (0) target = $region69
    $region68: #{pinsage_forward.1} parent=1 // pred_region
      %158 = vsyncadd [#allocation17], 0
      %s159 = sshll.u32 %s16, 4
      %s160 = int_to_ptr.hbm [resolvable:$true] %s159
      %s161 = sshll.u32 [#allocation16], 4
      %s162 = int_to_ptr.vmem [resolvable:$true] %s161
      %167 = dma.hbm_to_vmem [thread:$0]  %s160, 2048, %s162, [#allocation17], 64, 64, 4
    $region69: #{pinsage_forward.1} parent=1 // pred_fallthru
      _
    // Predicated region
    $region70: #{pinsage_forward.1} parent=1 // pred_check
      _
    $region71: #{pinsage_forward.1} parent=1 // pred_check_branch
      %169 = sbr.rel (0) target = $region73
    $region72: #{pinsage_forward.1} parent=1 // pred_region
      %171 = vsyncadd [#allocation17], 0
      %s173 = sshll.u32 %s17, 4
      %s174 = int_to_ptr.hbm [resolvable:$true] %s173
      %s175 = sshll.u32 [#allocation18], 4
      %s176 = int_to_ptr.vmem [resolvable:$true] %s175
      %178 = dma.hbm_to_vmem [thread:$0]  %s174, 16, %s176, [#allocation17]
    $region73: #{pinsage_forward.1} parent=1 // pred_fallthru
      _
    // Predicated region
    $region74: #{pinsage_forward.1} parent=1 // pred_check
      _
    $region75: #{pinsage_forward.1} parent=1 // pred_check_branch
      %180 = sbr.rel (0) target = $region77
    $region76: #{pinsage_forward.1} parent=1 // pred_region
      _
    $region77: #{pinsage_forward.1} parent=1 // pred_fallthru
      _
    // Predicated region
    $region78: #{pinsage_forward.1} parent=1 // pred_check
      _
    $region79: #{pinsage_forward.1} parent=1 // pred_check_branch
      %182 = sbr.rel (0) target = $region81
    $region80: #{pinsage_forward.1} parent=1 // pred_region
      _
    $region81: #{pinsage_forward.1} parent=1 // pred_fallthru
      _
    // Predicated region
    $region82: #{pinsage_forward.1} parent=1 // pred_check
      _
    $region83: #{pinsage_forward.1} parent=1 // pred_check_branch
      %184 = sbr.rel (0) target = $region85
    $region84: #{pinsage_forward.1} parent=1 // pred_region
      _
    $region85: #{pinsage_forward.1} parent=1 // pred_fallthru
      _
    // Predicated region
    $region86: #{pinsage_forward.1} parent=1 // pred_check
      _
    $region87: #{pinsage_forward.1} parent=1 // pred_check_branch
      %186 = sbr.rel (0) target = $region89
    $region88: #{pinsage_forward.1} parent=1 // pred_region
      %188 = dma.done [#allocation3], 16
    $region89: #{pinsage_forward.1} parent=1 // pred_fallthru
      _
    // Predicated region
    $region90: #{pinsage_forward.1} parent=1 // pred_check
      _
    $region91: #{pinsage_forward.1} parent=1 // pred_check_branch
      %190 = sbr.rel (0) target = $region93
    $region92: #{pinsage_forward.1} parent=1 // pred_region
      %192 = dma.done [#allocation5], 1024
    $region93: #{pinsage_forward.1} parent=1 // pred_fallthru
      _
    // Predicated region
    $region94: #{pinsage_forward.1} parent=1 // pred_check
      _
    $region95: #{pinsage_forward.1} parent=1 // pred_check_branch
      %194 = sbr.rel (0) target = $region97
    $region96: #{pinsage_forward.1} parent=1 // pred_region
      %196 = dma.done [#allocation5], 16
    $region97: #{pinsage_forward.1} parent=1 // pred_fallthru
      _
    // Predicated region
    $region98: #{pinsage_forward.1} parent=1 // pred_check
      _
    $region99: #{pinsage_forward.1} parent=1 // pred_check_branch
      %198 = sbr.rel (0) target = $region101
    $region100: #{pinsage_forward.1} parent=1 // pred_region
      %200 = dma.done [#allocation8], 2048
    $region101: #{pinsage_forward.1} parent=1 // pred_fallthru
      _
    // Predicated region
    $region102: #{pinsage_forward.1} parent=1 // pred_check
      _
    $region103: #{pinsage_forward.1} parent=1 // pred_check_branch
      %202 = sbr.rel (0) target = $region105
    $region104: #{pinsage_forward.1} parent=1 // pred_region
      %204 = dma.done [#allocation8], 16
    $region105: #{pinsage_forward.1} parent=1 // pred_fallthru
      _
    // Predicated region
    $region106: #{pinsage_forward.1} parent=1 // pred_check
      _
    $region107: #{pinsage_forward.1} parent=1 // pred_check_branch
      %206 = sbr.rel (0) target = $region109
    $region108: #{pinsage_forward.1} parent=1 // pred_region
      %208 = dma.done [#allocation11], 2048
    $region109: #{pinsage_forward.1} parent=1 // pred_fallthru
      _
    // Predicated region
    $region110: #{pinsage_forward.1} parent=1 // pred_check
      _
    $region111: #{pinsage_forward.1} parent=1 // pred_check_branch
      %210 = sbr.rel (0) target = $region113
    $region112: #{pinsage_forward.1} parent=1 // pred_region
      %212 = dma.done [#allocation11], 2048
    $region113: #{pinsage_forward.1} parent=1 // pred_fallthru
      _
    // Predicated region
    $region114: #{pinsage_forward.1} parent=1 // pred_check
      _
    $region115: #{pinsage_forward.1} parent=1 // pred_check_branch
      %214 = sbr.rel (0) target = $region117
    $region116: #{pinsage_forward.1} parent=1 // pred_region
      %216 = dma.done [#allocation14], 2048
    $region117: #{pinsage_forward.1} parent=1 // pred_fallthru
      _
    // Predicated region
    $region118: #{pinsage_forward.1} parent=1 // pred_check
      _
    $region119: #{pinsage_forward.1} parent=1 // pred_check_branch
      %218 = sbr.rel (0) target = $region121
    $region120: #{pinsage_forward.1} parent=1 // pred_region
      %220 = dma.done [#allocation14], 16
    $region121: #{pinsage_forward.1} parent=1 // pred_fallthru
      _
    // Predicated region
    $region122: #{pinsage_forward.1} parent=1 // pred_check
      _
    $region123: #{pinsage_forward.1} parent=1 // pred_check_branch
      %222 = sbr.rel (0) target = $region125
    $region124: #{pinsage_forward.1} parent=1 // pred_region
      %224 = dma.done [#allocation17], 2048
    $region125: #{pinsage_forward.1} parent=1 // pred_fallthru
      _
    // Predicated region
    $region126: #{pinsage_forward.1} parent=1 // pred_check
      _
    $region127: #{pinsage_forward.1} parent=1 // pred_check_branch
      %226 = sbr.rel (0) target = $region129
    $region128: #{pinsage_forward.1} parent=1 // pred_region
      %228 = dma.done [#allocation17], 16
    $region129: #{pinsage_forward.1} parent=1 // pred_fallthru
      _
    %v229 = vld [vmem:[%s0] sm:$0xf]
    %v230 = vld [vmem:[%s0 + $0x4] sm:$0xf]
    %v231 = vld [vmem:[%s0 + $0x8] sm:$0xf]
    %v232 = vld [vmem:[%s0 + $0xc] sm:$0xf]
    %v233 = vld [vmem:[%s0 + $0x10] sm:$0xf]
    %v234 = vld [vmem:[%s0 + $0x14] sm:$0xf]
    %v235 = vld [vmem:[%s0 + $0x18] sm:$0xf]
    %v236 = vld [vmem:[%s0 + $0x1c] sm:$0xf]
    %v237 = vld [vmem:[%s0 + $0x20] sm:$0xf]
    %v238 = vld [vmem:[%s0 + $0x24] sm:$0xf]
    %v239 = vld [vmem:[%s0 + $0x28] sm:$0xf]
    %v240 = vld [vmem:[%s0 + $0x2c] sm:$0xf]
    %v241 = vld [vmem:[%s0 + $0x30] sm:$0xf]
    %v242 = vld [vmem:[%s0 + $0x34] sm:$0xf]
    %v243 = vld [vmem:[%s0 + $0x38] sm:$0xf]
    %v244 = vld [vmem:[%s0 + $0x3c] sm:$0xf]
    %v245 = vld [vmem:[%s2] sm:$0xf]
    %v246 = vld [vmem:[%s2 + $0x4] sm:$0xf]
    %v247 = vld [vmem:[%s2 + $0x8] sm:$0xf]
    %v248 = vld [vmem:[%s2 + $0xc] sm:$0xf]
    %v249 = vld [vmem:[%s2 + $0x10] sm:$0xf]
    %v250 = vld [vmem:[%s2 + $0x14] sm:$0xf]
    %v251 = vld [vmem:[%s2 + $0x18] sm:$0xf]
    %v252 = vld [vmem:[%s2 + $0x1c] sm:$0xf]
    %v253 = vld [vmem:[%s2 + $0x20] sm:$0xf]
    %v254 = vld [vmem:[%s2 + $0x24] sm:$0xf]
    %v255 = vld [vmem:[%s2 + $0x28] sm:$0xf]
    %v256 = vld [vmem:[%s2 + $0x2c] sm:$0xf]
    %v257 = vld [vmem:[%s2 + $0x30] sm:$0xf]
    %v258 = vld [vmem:[%s2 + $0x34] sm:$0xf]
    %v259 = vld [vmem:[%s2 + $0x38] sm:$0xf]
    %v260 = vld [vmem:[%s2 + $0x3c] sm:$0xf]
    %v261 = vld [vmem:[#allocation2] sm:$0x1]
    %v263 = vperm.slane %v261, 0
    %v281 = vunpack.c.l.b16 %v229
    %v282 = vunpack.c.l.b16 %v230
    %v283 = vunpack.c.l.b16 %v231
    %v284 = vunpack.c.l.b16 %v232
    %v285 = vunpack.c.l.b16 %v233
    %v286 = vunpack.c.l.b16 %v234
    %v287 = vunpack.c.l.b16 %v235
    %v288 = vunpack.c.l.b16 %v236
    %v289 = vunpack.c.l.b16 %v237
    %v290 = vunpack.c.l.b16 %v238
    %v291 = vunpack.c.l.b16 %v239
    %v292 = vunpack.c.l.b16 %v240
    %v293 = vunpack.c.l.b16 %v241
    %v294 = vunpack.c.l.b16 %v242
    %v295 = vunpack.c.l.b16 %v243
    %v296 = vunpack.c.l.b16 %v244
    %v297 = vpack.c.b16 %v282, %v281
    %v298 = vpack.c.b16 %v284, %v283
    %v299 = vpack.c.b16 %v286, %v285
    %v300 = vpack.c.b16 %v288, %v287
    %v301 = vpack.c.b16 %v290, %v289
    %v302 = vpack.c.b16 %v292, %v291
    %v303 = vpack.c.b16 %v294, %v293
    %v304 = vpack.c.b16 %v296, %v295
    %v329 = vunpack.c.l.b16 %v245
    %v330 = vunpack.c.l.b16 %v246
    %v331 = vunpack.c.l.b16 %v247
    %v332 = vunpack.c.l.b16 %v248
    %v333 = vunpack.c.l.b16 %v249
    %v334 = vunpack.c.l.b16 %v250
    %v335 = vunpack.c.l.b16 %v251
    %v336 = vunpack.c.l.b16 %v252
    %v337 = vunpack.c.l.b16 %v253
    %v338 = vunpack.c.l.b16 %v254
    %v339 = vunpack.c.l.b16 %v255
    %v340 = vunpack.c.l.b16 %v256
    %v341 = vunpack.c.l.b16 %v257
    %v342 = vunpack.c.l.b16 %v258
    %v343 = vunpack.c.l.b16 %v259
    %v344 = vunpack.c.l.b16 %v260
    %v345 = vpack.c.b16 %v330, %v329
    %v346 = vpack.c.b16 %v332, %v331
    %v347 = vpack.c.b16 %v334, %v333
    %v348 = vpack.c.b16 %v336, %v335
    %v349 = vpack.c.b16 %v338, %v337
    %v350 = vpack.c.b16 %v340, %v339
    %v351 = vpack.c.b16 %v342, %v341
    %v352 = vpack.c.b16 %v344, %v343
    %361 = vmatpush.bf16.msra.mxu0 %v352
    %362 = vmatpush.bf16.msra.mxu0 %v351
    %363 = vmatpush.bf16.msra.mxu0 %v350
    %364 = vmatpush.bf16.msra.mxu0 %v349
    %365 = vmatpush.bf16.msra.mxu0 %v348
    %366 = vmatpush.bf16.msra.mxu0 %v347
    %367 = vmatpush.bf16.msra.mxu0 %v346
    %368 = vmatpush.bf16.msra.mxu0 %v345
    %369 = vmatmul.bf16.gmra.mxu0 %v297
    %v370 = vpop.f32.mrf.mxu0
    %v371 = vadd.f32 %v263, %v370
    %v372 = vpop.f32.mrf.mxu0
    %v373 = vadd.f32 %v263, %v372
    %374 = vmatmul.bf16.gmra.mxu0 %v298
    %v375 = vpop.f32.mrf.mxu0
    %v376 = vadd.f32 %v263, %v375
    %v377 = vpop.f32.mrf.mxu0
    %v378 = vadd.f32 %v263, %v377
    %379 = vmatmul.bf16.gmra.mxu0 %v299
    %v380 = vpop.f32.mrf.mxu0
    %v381 = vadd.f32 %v263, %v380
    %v382 = vpop.f32.mrf.mxu0
    %v383 = vadd.f32 %v263, %v382
    %384 = vmatmul.bf16.gmra.mxu0 %v300
    %v385 = vpop.f32.mrf.mxu0
    %v386 = vadd.f32 %v263, %v385
    %v387 = vpop.f32.mrf.mxu0
    %v388 = vadd.f32 %v263, %v387
    %389 = vmatmul.bf16.gmra.mxu0 %v301
    %v390 = vpop.f32.mrf.mxu0
    %v391 = vadd.f32 %v263, %v390
    %v392 = vpop.f32.mrf.mxu0
    %v393 = vadd.f32 %v263, %v392
    %394 = vmatmul.bf16.gmra.mxu0 %v302
    %v395 = vpop.f32.mrf.mxu0
    %v396 = vadd.f32 %v263, %v395
    %v397 = vpop.f32.mrf.mxu0
    %v398 = vadd.f32 %v263, %v397
    %399 = vmatmul.bf16.gmra.mxu0 %v303
    %v400 = vpop.f32.mrf.mxu0
    %v401 = vadd.f32 %v263, %v400
    %v402 = vpop.f32.mrf.mxu0
    %v403 = vadd.f32 %v263, %v402
    %404 = vmatmul.bf16.gmra.mxu0 %v304
    %v405 = vpop.f32.mrf.mxu0
    %v406 = vadd.f32 %v263, %v405
    %v407 = vpop.f32.mrf.mxu0
    %v408 = vadd.f32 %v263, %v407
    %409 = vdwg.mxu0
    %v410 = vld [vmem:[%s1] sm:$0xf]
    %v411 = vld [vmem:[%s1 + $0x4] sm:$0xf]
    %v412 = vld [vmem:[%s1 + $0x8] sm:$0xf]
    %v413 = vld [vmem:[%s1 + $0xc] sm:$0xf]
    %v414 = vld [vmem:[%s1 + $0x10] sm:$0xf]
    %v415 = vld [vmem:[%s1 + $0x14] sm:$0xf]
    %v416 = vld [vmem:[%s1 + $0x18] sm:$0xf]
    %v417 = vld [vmem:[%s1 + $0x1c] sm:$0xf]
    %v418 = vld [vmem:[%s1 + $0x20] sm:$0xf]
    %v419 = vld [vmem:[%s1 + $0x24] sm:$0xf]
    %v420 = vld [vmem:[%s1 + $0x28] sm:$0xf]
    %v421 = vld [vmem:[%s1 + $0x2c] sm:$0xf]
    %v422 = vld [vmem:[%s1 + $0x30] sm:$0xf]
    %v423 = vld [vmem:[%s1 + $0x34] sm:$0xf]
    %v424 = vld [vmem:[%s1 + $0x38] sm:$0xf]
    %v425 = vld [vmem:[%s1 + $0x3c] sm:$0xf]
    %v426 = vld [vmem:[#allocation4] sm:$0xf]
    %v427 = vld [vmem:[#allocation4 + $0x4] sm:$0xf]
    %v428 = vld [vmem:[#allocation4 + $0x8] sm:$0xf]
    %v429 = vld [vmem:[#allocation4 + $0xc] sm:$0xf]
    %v430 = vld [vmem:[#allocation4 + $0x10] sm:$0xf]
    %v431 = vld [vmem:[#allocation4 + $0x14] sm:$0xf]
    %v432 = vld [vmem:[#allocation4 + $0x18] sm:$0xf]
    %v433 = vld [vmem:[#allocation4 + $0x1c] sm:$0xf]
    %v434 = vld [vmem:[#allocation4 + $0x20] sm:$0xf]
    %v435 = vld [vmem:[#allocation4 + $0x24] sm:$0xf]
    %v436 = vld [vmem:[#allocation4 + $0x28] sm:$0xf]
    %v437 = vld [vmem:[#allocation4 + $0x2c] sm:$0xf]
    %v438 = vld [vmem:[#allocation4 + $0x30] sm:$0xf]
    %v439 = vld [vmem:[#allocation4 + $0x34] sm:$0xf]
    %v440 = vld [vmem:[#allocation4 + $0x38] sm:$0xf]
    %v441 = vld [vmem:[#allocation4 + $0x3c] sm:$0xf]
    %v442 = vld [vmem:[%s5] sm:$0x1]
    %v444 = vperm.slane %v442, 0
    %v462 = vunpack.c.l.b16 %v410
    %v463 = vunpack.c.l.b16 %v411
    %v464 = vunpack.c.l.b16 %v412
    %v465 = vunpack.c.l.b16 %v413
    %v466 = vunpack.c.l.b16 %v414
    %v467 = vunpack.c.l.b16 %v415
    %v468 = vunpack.c.l.b16 %v416
    %v469 = vunpack.c.l.b16 %v417
    %v470 = vunpack.c.l.b16 %v418
    %v471 = vunpack.c.l.b16 %v419
    %v472 = vunpack.c.l.b16 %v420
    %v473 = vunpack.c.l.b16 %v421
    %v474 = vunpack.c.l.b16 %v422
    %v475 = vunpack.c.l.b16 %v423
    %v476 = vunpack.c.l.b16 %v424
    %v477 = vunpack.c.l.b16 %v425
    %v478 = vpack.c.b16 %v463, %v462
    %v479 = vpack.c.b16 %v465, %v464
    %v480 = vpack.c.b16 %v467, %v466
    %v481 = vpack.c.b16 %v469, %v468
    %v482 = vpack.c.b16 %v471, %v470
    %v483 = vpack.c.b16 %v473, %v472
    %v484 = vpack.c.b16 %v475, %v474
    %v485 = vpack.c.b16 %v477, %v476
    %v510 = vunpack.c.l.b16 %v426
    %v511 = vunpack.c.l.b16 %v427
    %v512 = vunpack.c.l.b16 %v428
    %v513 = vunpack.c.l.b16 %v429
    %v514 = vunpack.c.l.b16 %v430
    %v515 = vunpack.c.l.b16 %v431
    %v516 = vunpack.c.l.b16 %v432
    %v517 = vunpack.c.l.b16 %v433
    %v518 = vunpack.c.l.b16 %v434
    %v519 = vunpack.c.l.b16 %v435
    %v520 = vunpack.c.l.b16 %v436
    %v521 = vunpack.c.l.b16 %v437
    %v522 = vunpack.c.l.b16 %v438
    %v523 = vunpack.c.l.b16 %v439
    %v524 = vunpack.c.l.b16 %v440
    %v525 = vunpack.c.l.b16 %v441
    %v526 = vpack.c.b16 %v511, %v510
    %v527 = vpack.c.b16 %v513, %v512
    %v528 = vpack.c.b16 %v515, %v514
    %v529 = vpack.c.b16 %v517, %v516
    %v530 = vpack.c.b16 %v519, %v518
    %v531 = vpack.c.b16 %v521, %v520
    %v532 = vpack.c.b16 %v523, %v522
    %v533 = vpack.c.b16 %v525, %v524
    %542 = vmatpush.bf16.msra.mxu0 %v533
    %543 = vmatpush.bf16.msra.mxu0 %v532
    %544 = vmatpush.bf16.msra.mxu0 %v531
    %545 = vmatpush.bf16.msra.mxu0 %v530
    %546 = vmatpush.bf16.msra.mxu0 %v529
    %547 = vmatpush.bf16.msra.mxu0 %v528
    %548 = vmatpush.bf16.msra.mxu0 %v527
    %549 = vmatpush.bf16.msra.mxu0 %v526
    %550 = vmatmul.bf16.gmra.mxu0 %v478
    %v551 = vpop.f32.mrf.mxu0
    %v552 = vadd.f32 %v444, %v551
    %v553 = vpop.f32.mrf.mxu0
    %v554 = vadd.f32 %v444, %v553
    %555 = vmatmul.bf16.gmra.mxu0 %v479
    %v556 = vpop.f32.mrf.mxu0
    %v557 = vadd.f32 %v444, %v556
    %v558 = vpop.f32.mrf.mxu0
    %v559 = vadd.f32 %v444, %v558
    %560 = vmatmul.bf16.gmra.mxu0 %v480
    %v561 = vpop.f32.mrf.mxu0
    %v562 = vadd.f32 %v444, %v561
    %v563 = vpop.f32.mrf.mxu0
    %v564 = vadd.f32 %v444, %v563
    %565 = vmatmul.bf16.gmra.mxu0 %v481
    %v566 = vpop.f32.mrf.mxu0
    %v567 = vadd.f32 %v444, %v566
    %v568 = vpop.f32.mrf.mxu0
    %v569 = vadd.f32 %v444, %v568
    %570 = vmatmul.bf16.gmra.mxu0 %v482
    %v571 = vpop.f32.mrf.mxu0
    %v572 = vadd.f32 %v444, %v571
    %v573 = vpop.f32.mrf.mxu0
    %v574 = vadd.f32 %v444, %v573
    %575 = vmatmul.bf16.gmra.mxu0 %v483
    %v576 = vpop.f32.mrf.mxu0
    %v577 = vadd.f32 %v444, %v576
    %v578 = vpop.f32.mrf.mxu0
    %v579 = vadd.f32 %v444, %v578
    %580 = vmatmul.bf16.gmra.mxu0 %v484
    %v581 = vpop.f32.mrf.mxu0
    %v582 = vadd.f32 %v444, %v581
    %v583 = vpop.f32.mrf.mxu0
    %v584 = vadd.f32 %v444, %v583
    %585 = vmatmul.bf16.gmra.mxu0 %v485
    %v586 = vpop.f32.mrf.mxu0
    %v587 = vadd.f32 %v444, %v586
    %v588 = vpop.f32.mrf.mxu0
    %v589 = vadd.f32 %v444, %v588
    %590 = vdwg.mxu0
    %v591 = vld [vmem:[%s6] sm:$0xff]
    %v592 = vld [vmem:[%s6 + $0x8] sm:$0xff]
    %v593 = vld [vmem:[%s6 + $0x10] sm:$0xff]
    %v594 = vld [vmem:[%s6 + $0x18] sm:$0xff]
    %v595 = vld [vmem:[%s6 + $0x20] sm:$0xff]
    %v596 = vld [vmem:[%s6 + $0x28] sm:$0xff]
    %v597 = vld [vmem:[%s6 + $0x30] sm:$0xff]
    %v598 = vld [vmem:[%s6 + $0x38] sm:$0xff]
    %v599 = vld [vmem:[%s6 + $0x40] sm:$0xff]
    %v600 = vld [vmem:[%s6 + $0x48] sm:$0xff]
    %v601 = vld [vmem:[%s6 + $0x50] sm:$0xff]
    %v602 = vld [vmem:[%s6 + $0x58] sm:$0xff]
    %v603 = vld [vmem:[%s6 + $0x60] sm:$0xff]
    %v604 = vld [vmem:[%s6 + $0x68] sm:$0xff]
    %v605 = vld [vmem:[%s6 + $0x70] sm:$0xff]
    %v606 = vld [vmem:[%s6 + $0x78] sm:$0xff]
    %607 = vmatpush.msra.mxu0 %v589
    %608 = vmatpush.msra.mxu0 %v587
    %609 = vmatpush.msra.mxu0 %v584
    %610 = vmatpush.msra.mxu0 %v582
    %611 = vmatpush.msra.mxu0 %v579
    %612 = vmatpush.msra.mxu0 %v577
    %613 = vmatpush.msra.mxu0 %v574
    %614 = vmatpush.msra.mxu0 %v572
    %615 = vmatpush.msra.mxu0 %v569
    %616 = vmatpush.msra.mxu0 %v567
    %617 = vmatpush.msra.mxu0 %v564
    %618 = vmatpush.msra.mxu0 %v562
    %619 = vmatpush.msra.mxu0 %v559
    %620 = vmatpush.msra.mxu0 %v557
    %621 = vmatpush.msra.mxu0 %v554
    %622 = vmatpush.msra.mxu0 %v552
    %623 = vmatmul.f32.gmra.mxu0 %v591
    %v624 = vpop.f32.mrf.mxu0
    %v625 = vadd.f32 0.0, %v624
    %626 = vmatmul.f32.gmra.mxu0 %v592
    %v627 = vpop.f32.mrf.mxu0
    %v628 = vadd.f32 0.0, %v627
    %629 = vmatmul.f32.gmra.mxu0 %v593
    %v630 = vpop.f32.mrf.mxu0
    %v631 = vadd.f32 0.0, %v630
    %632 = vmatmul.f32.gmra.mxu0 %v594
    %v633 = vpop.f32.mrf.mxu0
    %v634 = vadd.f32 0.0, %v633
    %635 = vmatmul.f32.gmra.mxu0 %v595
    %v636 = vpop.f32.mrf.mxu0
    %v637 = vadd.f32 0.0, %v636
    %638 = vmatmul.f32.gmra.mxu0 %v596
    %v639 = vpop.f32.mrf.mxu0
    %v640 = vadd.f32 0.0, %v639
    %641 = vmatmul.f32.gmra.mxu0 %v597
    %v642 = vpop.f32.mrf.mxu0
    %v643 = vadd.f32 0.0, %v642
    %644 = vmatmul.f32.gmra.mxu0 %v598
    %v645 = vpop.f32.mrf.mxu0
    %v646 = vadd.f32 0.0, %v645
    %647 = vmatmul.f32.gmra.mxu0 %v599
    %v648 = vpop.f32.mrf.mxu0
    %v649 = vadd.f32 0.0, %v648
    %650 = vmatmul.f32.gmra.mxu0 %v600
    %v651 = vpop.f32.mrf.mxu0
    %v652 = vadd.f32 0.0, %v651
    %653 = vmatmul.f32.gmra.mxu0 %v601
    %v654 = vpop.f32.mrf.mxu0
    %v655 = vadd.f32 0.0, %v654
    %656 = vmatmul.f32.gmra.mxu0 %v602
    %v657 = vpop.f32.mrf.mxu0
    %v658 = vadd.f32 0.0, %v657
    %659 = vmatmul.f32.gmra.mxu0 %v603
    %v660 = vpop.f32.mrf.mxu0
    %v661 = vadd.f32 0.0, %v660
    %662 = vmatmul.f32.gmra.mxu0 %v604
    %v663 = vpop.f32.mrf.mxu0
    %v664 = vadd.f32 0.0, %v663
    %665 = vmatmul.f32.gmra.mxu0 %v605
    %v666 = vpop.f32.mrf.mxu0
    %v667 = vadd.f32 0.0, %v666
    %668 = vmatmul.f32.gmra.mxu0 %v606
    %v669 = vpop.f32.mrf.mxu0
    %v670 = vadd.f32 0.0, %v669
    %671 = vdwg.mxu0
    %v672 = vld [vmem:[%s7] sm:$0xff]
    %v673 = vld [vmem:[%s7 + $0x8] sm:$0xff]
    %v674 = vld [vmem:[%s7 + $0x10] sm:$0xff]
    %v675 = vld [vmem:[%s7 + $0x18] sm:$0xff]
    %v676 = vld [vmem:[%s7 + $0x20] sm:$0xff]
    %v677 = vld [vmem:[%s7 + $0x28] sm:$0xff]
    %v678 = vld [vmem:[%s7 + $0x30] sm:$0xff]
    %v679 = vld [vmem:[%s7 + $0x38] sm:$0xff]
    %v680 = vld [vmem:[%s7 + $0x40] sm:$0xff]
    %v681 = vld [vmem:[%s7 + $0x48] sm:$0xff]
    %v682 = vld [vmem:[%s7 + $0x50] sm:$0xff]
    %v683 = vld [vmem:[%s7 + $0x58] sm:$0xff]
    %v684 = vld [vmem:[%s7 + $0x60] sm:$0xff]
    %v685 = vld [vmem:[%s7 + $0x68] sm:$0xff]
    %v686 = vld [vmem:[%s7 + $0x70] sm:$0xff]
    %v687 = vld [vmem:[%s7 + $0x78] sm:$0xff]
    %688 = vmatpush.msra.mxu0 %v408
    %689 = vmatpush.msra.mxu0 %v406
    %690 = vmatpush.msra.mxu0 %v403
    %691 = vmatpush.msra.mxu0 %v401
    %692 = vmatpush.msra.mxu0 %v398
    %693 = vmatpush.msra.mxu0 %v396
    %694 = vmatpush.msra.mxu0 %v393
    %695 = vmatpush.msra.mxu0 %v391
    %696 = vmatpush.msra.mxu0 %v388
    %697 = vmatpush.msra.mxu0 %v386
    %698 = vmatpush.msra.mxu0 %v383
    %699 = vmatpush.msra.mxu0 %v381
    %700 = vmatpush.msra.mxu0 %v378
    %701 = vmatpush.msra.mxu0 %v376
    %702 = vmatpush.msra.mxu0 %v373
    %703 = vmatpush.msra.mxu0 %v371
    %704 = vmatmul.f32.gmra.mxu0 %v672
    %v705 = vpop.f32.mrf.mxu0
    %v706 = vadd.f32 0.0, %v705
    %707 = vmatmul.f32.gmra.mxu0 %v673
    %v708 = vpop.f32.mrf.mxu0
    %v709 = vadd.f32 0.0, %v708
    %710 = vmatmul.f32.gmra.mxu0 %v674
    %v711 = vpop.f32.mrf.mxu0
    %v712 = vadd.f32 0.0, %v711
    %713 = vmatmul.f32.gmra.mxu0 %v675
    %v714 = vpop.f32.mrf.mxu0
    %v715 = vadd.f32 0.0, %v714
    %716 = vmatmul.f32.gmra.mxu0 %v676
    %v717 = vpop.f32.mrf.mxu0
    %v718 = vadd.f32 0.0, %v717
    %719 = vmatmul.f32.gmra.mxu0 %v677
    %v720 = vpop.f32.mrf.mxu0
    %v721 = vadd.f32 0.0, %v720
    %722 = vmatmul.f32.gmra.mxu0 %v678
    %v723 = vpop.f32.mrf.mxu0
    %v724 = vadd.f32 0.0, %v723
    %725 = vmatmul.f32.gmra.mxu0 %v679
    %v726 = vpop.f32.mrf.mxu0
    %v727 = vadd.f32 0.0, %v726
    %728 = vmatmul.f32.gmra.mxu0 %v680
    %v729 = vpop.f32.mrf.mxu0
    %v730 = vadd.f32 0.0, %v729
    %731 = vmatmul.f32.gmra.mxu0 %v681
    %v732 = vpop.f32.mrf.mxu0
    %v733 = vadd.f32 0.0, %v732
    %734 = vmatmul.f32.gmra.mxu0 %v682
    %v735 = vpop.f32.mrf.mxu0
    %v736 = vadd.f32 0.0, %v735
    %737 = vmatmul.f32.gmra.mxu0 %v683
    %v738 = vpop.f32.mrf.mxu0
    %v739 = vadd.f32 0.0, %v738
    %740 = vmatmul.f32.gmra.mxu0 %v684
    %v741 = vpop.f32.mrf.mxu0
    %v742 = vadd.f32 0.0, %v741
    %743 = vmatmul.f32.gmra.mxu0 %v685
    %v744 = vpop.f32.mrf.mxu0
    %v745 = vadd.f32 0.0, %v744
    %746 = vmatmul.f32.gmra.mxu0 %v686
    %v747 = vpop.f32.mrf.mxu0
    %v748 = vadd.f32 0.0, %v747
    %749 = vmatmul.f32.gmra.mxu0 %v687
    %v750 = vpop.f32.mrf.mxu0
    %v751 = vadd.f32 0.0, %v750
    %752 = vdwg.mxu0
    %v753 = vpack.c.bf16 %v371, %v371
    %v754 = vpack.c.bf16 %v373, %v373
    %v755 = vpack.c.bf16 %v376, %v376
    %v756 = vpack.c.bf16 %v378, %v378
    %v757 = vpack.c.bf16 %v381, %v381
    %v758 = vpack.c.bf16 %v383, %v383
    %v759 = vpack.c.bf16 %v386, %v386
    %v760 = vpack.c.bf16 %v388, %v388
    %v761 = vpack.c.bf16 %v391, %v391
    %v762 = vpack.c.bf16 %v393, %v393
    %v763 = vpack.c.bf16 %v396, %v396
    %v764 = vpack.c.bf16 %v398, %v398
    %v765 = vpack.c.bf16 %v401, %v401
    %v766 = vpack.c.bf16 %v403, %v403
    %v767 = vpack.c.bf16 %v406, %v406
    %v768 = vpack.c.bf16 %v408, %v408
    %v769 = vpack.c.bf16 %v625, %v625
    %v770 = vpack.c.bf16 %v628, %v628
    %v771 = vpack.c.bf16 %v631, %v631
    %v772 = vpack.c.bf16 %v634, %v634
    %v773 = vpack.c.bf16 %v637, %v637
    %v774 = vpack.c.bf16 %v640, %v640
    %v775 = vpack.c.bf16 %v643, %v643
    %v776 = vpack.c.bf16 %v646, %v646
    %v777 = vpack.c.bf16 %v649, %v649
    %v778 = vpack.c.bf16 %v652, %v652
    %v779 = vpack.c.bf16 %v655, %v655
    %v780 = vpack.c.bf16 %v658, %v658
    %v781 = vpack.c.bf16 %v661, %v661
    %v782 = vpack.c.bf16 %v664, %v664
    %v783 = vpack.c.bf16 %v667, %v667
    %v784 = vpack.c.bf16 %v670, %v670
    %v801 = vunpack.c.l.b16 %v753
    %v802 = vunpack.c.l.b16 %v754
    %v803 = vunpack.c.l.b16 %v755
    %v804 = vunpack.c.l.b16 %v756
    %v805 = vunpack.c.l.b16 %v757
    %v806 = vunpack.c.l.b16 %v758
    %v807 = vunpack.c.l.b16 %v759
    %v808 = vunpack.c.l.b16 %v760
    %v809 = vunpack.c.l.b16 %v761
    %v810 = vunpack.c.l.b16 %v762
    %v811 = vunpack.c.l.b16 %v763
    %v812 = vunpack.c.l.b16 %v764
    %v813 = vunpack.c.l.b16 %v765
    %v814 = vunpack.c.l.b16 %v766
    %v815 = vunpack.c.l.b16 %v767
    %v816 = vunpack.c.l.b16 %v768
    %v817 = vpack.c.b16 %v802, %v801
    %v818 = vpack.c.b16 %v804, %v803
    %v819 = vpack.c.b16 %v806, %v805
    %v820 = vpack.c.b16 %v808, %v807
    %v821 = vpack.c.b16 %v810, %v809
    %v822 = vpack.c.b16 %v812, %v811
    %v823 = vpack.c.b16 %v814, %v813
    %v824 = vpack.c.b16 %v816, %v815
    %v849 = vunpack.c.l.b16 %v769
    %v850 = vunpack.c.l.b16 %v770
    %v851 = vunpack.c.l.b16 %v771
    %v852 = vunpack.c.l.b16 %v772
    %v853 = vunpack.c.l.b16 %v773
    %v854 = vunpack.c.l.b16 %v774
    %v855 = vunpack.c.l.b16 %v775
    %v856 = vunpack.c.l.b16 %v776
    %v857 = vunpack.c.l.b16 %v777
    %v858 = vunpack.c.l.b16 %v778
    %v859 = vunpack.c.l.b16 %v779
    %v860 = vunpack.c.l.b16 %v780
    %v861 = vunpack.c.l.b16 %v781
    %v862 = vunpack.c.l.b16 %v782
    %v863 = vunpack.c.l.b16 %v783
    %v864 = vunpack.c.l.b16 %v784
    %v865 = vpack.c.b16 %v850, %v849
    %v866 = vpack.c.b16 %v852, %v851
    %v867 = vpack.c.b16 %v854, %v853
    %v868 = vpack.c.b16 %v856, %v855
    %v869 = vpack.c.b16 %v858, %v857
    %v870 = vpack.c.b16 %v860, %v859
    %v871 = vpack.c.b16 %v862, %v861
    %v872 = vpack.c.b16 %v864, %v863
    %v881 = vpack.c.bf16 %v552, %v552
    %v882 = vpack.c.bf16 %v554, %v554
    %v883 = vpack.c.bf16 %v557, %v557
    %v884 = vpack.c.bf16 %v559, %v559
    %v885 = vpack.c.bf16 %v562, %v562
    %v886 = vpack.c.bf16 %v564, %v564
    %v887 = vpack.c.bf16 %v567, %v567
    %v888 = vpack.c.bf16 %v569, %v569
    %v889 = vpack.c.bf16 %v572, %v572
    %v890 = vpack.c.bf16 %v574, %v574
    %v891 = vpack.c.bf16 %v577, %v577
    %v892 = vpack.c.bf16 %v579, %v579
    %v893 = vpack.c.bf16 %v582, %v582
    %v894 = vpack.c.bf16 %v584, %v584
    %v895 = vpack.c.bf16 %v587, %v587
    %v896 = vpack.c.bf16 %v589, %v589
    %v897 = vpack.c.bf16 %v706, %v706
    %v898 = vpack.c.bf16 %v709, %v709
    %v899 = vpack.c.bf16 %v712, %v712
    %v900 = vpack.c.bf16 %v715, %v715
    %v901 = vpack.c.bf16 %v718, %v718
    %v902 = vpack.c.bf16 %v721, %v721
    %v903 = vpack.c.bf16 %v724, %v724
    %v904 = vpack.c.bf16 %v727, %v727
    %v905 = vpack.c.bf16 %v730, %v730
    %v906 = vpack.c.bf16 %v733, %v733
    %v907 = vpack.c.bf16 %v736, %v736
    %v908 = vpack.c.bf16 %v739, %v739
    %v909 = vpack.c.bf16 %v742, %v742
    %v910 = vpack.c.bf16 %v745, %v745
    %v911 = vpack.c.bf16 %v748, %v748
    %v912 = vpack.c.bf16 %v751, %v751
    %v929 = vunpack.c.l.b16 %v881
    %v930 = vunpack.c.l.b16 %v882
    %v931 = vunpack.c.l.b16 %v883
    %v932 = vunpack.c.l.b16 %v884
    %v933 = vunpack.c.l.b16 %v885
    %v934 = vunpack.c.l.b16 %v886
    %v935 = vunpack.c.l.b16 %v887
    %v936 = vunpack.c.l.b16 %v888
    %v937 = vunpack.c.l.b16 %v889
    %v938 = vunpack.c.l.b16 %v890
    %v939 = vunpack.c.l.b16 %v891
    %v940 = vunpack.c.l.b16 %v892
    %v941 = vunpack.c.l.b16 %v893
    %v942 = vunpack.c.l.b16 %v894
    %v943 = vunpack.c.l.b16 %v895
    %v944 = vunpack.c.l.b16 %v896
    %v945 = vpack.c.b16 %v930, %v929
    %v946 = vpack.c.b16 %v932, %v931
    %v947 = vpack.c.b16 %v934, %v933
    %v948 = vpack.c.b16 %v936, %v935
    %v949 = vpack.c.b16 %v938, %v937
    %v950 = vpack.c.b16 %v940, %v939
    %v951 = vpack.c.b16 %v942, %v941
    %v952 = vpack.c.b16 %v944, %v943
    %v977 = vunpack.c.l.b16 %v897
    %v978 = vunpack.c.l.b16 %v898
    %v979 = vunpack.c.l.b16 %v899
    %v980 = vunpack.c.l.b16 %v900
    %v981 = vunpack.c.l.b16 %v901
    %v982 = vunpack.c.l.b16 %v902
    %v983 = vunpack.c.l.b16 %v903
    %v984 = vunpack.c.l.b16 %v904
    %v985 = vunpack.c.l.b16 %v905
    %v986 = vunpack.c.l.b16 %v906
    %v987 = vunpack.c.l.b16 %v907
    %v988 = vunpack.c.l.b16 %v908
    %v989 = vunpack.c.l.b16 %v909
    %v990 = vunpack.c.l.b16 %v910
    %v991 = vunpack.c.l.b16 %v911
    %v992 = vunpack.c.l.b16 %v912
    %v993 = vpack.c.b16 %v978, %v977
    %v994 = vpack.c.b16 %v980, %v979
    %v995 = vpack.c.b16 %v982, %v981
    %v996 = vpack.c.b16 %v984, %v983
    %v997 = vpack.c.b16 %v986, %v985
    %v998 = vpack.c.b16 %v988, %v987
    %v999 = vpack.c.b16 %v990, %v989
    %v1000 = vpack.c.b16 %v992, %v991
    %v1009 = vld [vmem:[%s8] sm:$0xf]
    %v1010 = vld [vmem:[%s8 + $0x4] sm:$0xf]
    %v1011 = vld [vmem:[%s8 + $0x8] sm:$0xf]
    %v1012 = vld [vmem:[%s8 + $0xc] sm:$0xf]
    %v1013 = vld [vmem:[%s8 + $0x10] sm:$0xf]
    %v1014 = vld [vmem:[%s8 + $0x14] sm:$0xf]
    %v1015 = vld [vmem:[%s8 + $0x18] sm:$0xf]
    %v1016 = vld [vmem:[%s8 + $0x1c] sm:$0xf]
    %v1017 = vld [vmem:[%s8 + $0x20] sm:$0xf]
    %v1018 = vld [vmem:[%s8 + $0x24] sm:$0xf]
    %v1019 = vld [vmem:[%s8 + $0x28] sm:$0xf]
    %v1020 = vld [vmem:[%s8 + $0x2c] sm:$0xf]
    %v1021 = vld [vmem:[%s8 + $0x30] sm:$0xf]
    %v1022 = vld [vmem:[%s8 + $0x34] sm:$0xf]
    %v1023 = vld [vmem:[%s8 + $0x38] sm:$0xf]
    %v1024 = vld [vmem:[%s8 + $0x3c] sm:$0xf]
    %v1025 = vld [vmem:[%s8 + $0x40] sm:$0xf]
    %v1026 = vld [vmem:[%s8 + $0x44] sm:$0xf]
    %v1027 = vld [vmem:[%s8 + $0x48] sm:$0xf]
    %v1028 = vld [vmem:[%s8 + $0x4c] sm:$0xf]
    %v1029 = vld [vmem:[%s8 + $0x50] sm:$0xf]
    %v1030 = vld [vmem:[%s8 + $0x54] sm:$0xf]
    %v1031 = vld [vmem:[%s8 + $0x58] sm:$0xf]
    %v1032 = vld [vmem:[%s8 + $0x5c] sm:$0xf]
    %v1033 = vld [vmem:[%s8 + $0x60] sm:$0xf]
    %v1034 = vld [vmem:[%s8 + $0x64] sm:$0xf]
    %v1035 = vld [vmem:[%s8 + $0x68] sm:$0xf]
    %v1036 = vld [vmem:[%s8 + $0x6c] sm:$0xf]
    %v1037 = vld [vmem:[%s8 + $0x70] sm:$0xf]
    %v1038 = vld [vmem:[%s8 + $0x74] sm:$0xf]
    %v1039 = vld [vmem:[%s8 + $0x78] sm:$0xf]
    %v1040 = vld [vmem:[%s8 + $0x7c] sm:$0xf]
    %v1041 = vld [vmem:[#allocation6] sm:$0x1]
    %v1043 = vperm.slane %v1041, 0
    %v1077 = vunpack.c.l.b16 %v1009
    %v1078 = vunpack.c.l.b16 %v1010
    %v1079 = vunpack.c.l.b16 %v1011
    %v1080 = vunpack.c.l.b16 %v1012
    %v1081 = vunpack.c.l.b16 %v1013
    %v1082 = vunpack.c.l.b16 %v1014
    %v1083 = vunpack.c.l.b16 %v1015
    %v1084 = vunpack.c.l.b16 %v1016
    %v1085 = vunpack.c.l.b16 %v1017
    %v1086 = vunpack.c.l.b16 %v1018
    %v1087 = vunpack.c.l.b16 %v1019
    %v1088 = vunpack.c.l.b16 %v1020
    %v1089 = vunpack.c.l.b16 %v1021
    %v1090 = vunpack.c.l.b16 %v1022
    %v1091 = vunpack.c.l.b16 %v1023
    %v1092 = vunpack.c.l.b16 %v1024
    %v1093 = vunpack.c.l.b16 %v1025
    %v1094 = vunpack.c.l.b16 %v1026
    %v1095 = vunpack.c.l.b16 %v1027
    %v1096 = vunpack.c.l.b16 %v1028
    %v1097 = vunpack.c.l.b16 %v1029
    %v1098 = vunpack.c.l.b16 %v1030
    %v1099 = vunpack.c.l.b16 %v1031
    %v1100 = vunpack.c.l.b16 %v1032
    %v1101 = vunpack.c.l.b16 %v1033
    %v1102 = vunpack.c.l.b16 %v1034
    %v1103 = vunpack.c.l.b16 %v1035
    %v1104 = vunpack.c.l.b16 %v1036
    %v1105 = vunpack.c.l.b16 %v1037
    %v1106 = vunpack.c.l.b16 %v1038
    %v1107 = vunpack.c.l.b16 %v1039
    %v1108 = vunpack.c.l.b16 %v1040
    %v1109 = vpack.c.b16 %v1078, %v1077
    %v1110 = vpack.c.b16 %v1080, %v1079
    %v1111 = vpack.c.b16 %v1082, %v1081
    %v1112 = vpack.c.b16 %v1084, %v1083
    %v1113 = vpack.c.b16 %v1086, %v1085
    %v1114 = vpack.c.b16 %v1088, %v1087
    %v1115 = vpack.c.b16 %v1090, %v1089
    %v1116 = vpack.c.b16 %v1092, %v1091
    %v1117 = vpack.c.b16 %v1094, %v1093
    %v1118 = vpack.c.b16 %v1096, %v1095
    %v1119 = vpack.c.b16 %v1098, %v1097
    %v1120 = vpack.c.b16 %v1100, %v1099
    %v1121 = vpack.c.b16 %v1102, %v1101
    %v1122 = vpack.c.b16 %v1104, %v1103
    %v1123 = vpack.c.b16 %v1106, %v1105
    %v1124 = vpack.c.b16 %v1108, %v1107
    %1141 = vmatpush.bf16.msra.mxu0 %v1116
    %1142 = vmatpush.bf16.msra.mxu0 %v1115
    %1143 = vmatpush.bf16.msra.mxu0 %v1114
    %1144 = vmatpush.bf16.msra.mxu0 %v1113
    %1145 = vmatpush.bf16.msra.mxu0 %v1112
    %1146 = vmatpush.bf16.msra.mxu0 %v1111
    %1147 = vmatpush.bf16.msra.mxu0 %v1110
    %1148 = vmatpush.bf16.msra.mxu0 %v1109
    %1149 = vmatmul.bf16.gmra.mxu0 %v817
    %v1150 = vpop.f32.mrf.mxu0
    %v1151 = vadd.f32 %v1043, %v1150
    %v1152 = vpop.f32.mrf.mxu0
    %v1153 = vadd.f32 %v1043, %v1152
    %1154 = vmatmul.bf16.gmra.mxu0 %v818
    %v1155 = vpop.f32.mrf.mxu0
    %v1156 = vadd.f32 %v1043, %v1155
    %v1157 = vpop.f32.mrf.mxu0
    %v1158 = vadd.f32 %v1043, %v1157
    %1159 = vmatmul.bf16.gmra.mxu0 %v819
    %v1160 = vpop.f32.mrf.mxu0
    %v1161 = vadd.f32 %v1043, %v1160
    %v1162 = vpop.f32.mrf.mxu0
    %v1163 = vadd.f32 %v1043, %v1162
    %1164 = vmatmul.bf16.gmra.mxu0 %v820
    %v1165 = vpop.f32.mrf.mxu0
    %v1166 = vadd.f32 %v1043, %v1165
    %v1167 = vpop.f32.mrf.mxu0
    %v1168 = vadd.f32 %v1043, %v1167
    %1169 = vmatmul.bf16.gmra.mxu0 %v821
    %v1170 = vpop.f32.mrf.mxu0
    %v1171 = vadd.f32 %v1043, %v1170
    %v1172 = vpop.f32.mrf.mxu0
    %v1173 = vadd.f32 %v1043, %v1172
    %1174 = vmatmul.bf16.gmra.mxu0 %v822
    %v1175 = vpop.f32.mrf.mxu0
    %v1176 = vadd.f32 %v1043, %v1175
    %v1177 = vpop.f32.mrf.mxu0
    %v1178 = vadd.f32 %v1043, %v1177
    %1179 = vmatmul.bf16.gmra.mxu0 %v823
    %v1180 = vpop.f32.mrf.mxu0
    %v1181 = vadd.f32 %v1043, %v1180
    %v1182 = vpop.f32.mrf.mxu0
    %v1183 = vadd.f32 %v1043, %v1182
    %1184 = vmatmul.bf16.gmra.mxu0 %v824
    %v1185 = vpop.f32.mrf.mxu0
    %v1186 = vadd.f32 %v1043, %v1185
    %v1187 = vpop.f32.mrf.mxu0
    %v1188 = vadd.f32 %v1043, %v1187
    %1189 = vdwg.mxu0
    %1190 = vmatpush.bf16.msra.mxu0 %v1124
    %1191 = vmatpush.bf16.msra.mxu0 %v1123
    %1192 = vmatpush.bf16.msra.mxu0 %v1122
    %1193 = vmatpush.bf16.msra.mxu0 %v1121
    %1194 = vmatpush.bf16.msra.mxu0 %v1120
    %1195 = vmatpush.bf16.msra.mxu0 %v1119
    %1196 = vmatpush.bf16.msra.mxu0 %v1118
    %1197 = vmatpush.bf16.msra.mxu0 %v1117
    %1198 = vmatmul.bf16.gmra.mxu0 %v865
    %v1199 = vpop.f32.mrf.mxu0
    %v1200 = vadd.f32 %v1151, %v1199
    %v1201 = vpop.f32.mrf.mxu0
    %v1202 = vadd.f32 %v1153, %v1201
    %1203 = vmatmul.bf16.gmra.mxu0 %v866
    %v1204 = vpop.f32.mrf.mxu0
    %v1205 = vadd.f32 %v1156, %v1204
    %v1206 = vpop.f32.mrf.mxu0
    %v1207 = vadd.f32 %v1158, %v1206
    %1208 = vmatmul.bf16.gmra.mxu0 %v867
    %v1209 = vpop.f32.mrf.mxu0
    %v1210 = vadd.f32 %v1161, %v1209
    %v1211 = vpop.f32.mrf.mxu0
    %v1212 = vadd.f32 %v1163, %v1211
    %1213 = vmatmul.bf16.gmra.mxu0 %v868
    %v1214 = vpop.f32.mrf.mxu0
    %v1215 = vadd.f32 %v1166, %v1214
    %v1216 = vpop.f32.mrf.mxu0
    %v1217 = vadd.f32 %v1168, %v1216
    %1218 = vmatmul.bf16.gmra.mxu0 %v869
    %v1219 = vpop.f32.mrf.mxu0
    %v1220 = vadd.f32 %v1171, %v1219
    %v1221 = vpop.f32.mrf.mxu0
    %v1222 = vadd.f32 %v1173, %v1221
    %1223 = vmatmul.bf16.gmra.mxu0 %v870
    %v1224 = vpop.f32.mrf.mxu0
    %v1225 = vadd.f32 %v1176, %v1224
    %v1226 = vpop.f32.mrf.mxu0
    %v1227 = vadd.f32 %v1178, %v1226
    %1228 = vmatmul.bf16.gmra.mxu0 %v871
    %v1229 = vpop.f32.mrf.mxu0
    %v1230 = vadd.f32 %v1181, %v1229
    %v1231 = vpop.f32.mrf.mxu0
    %v1232 = vadd.f32 %v1183, %v1231
    %1233 = vmatmul.bf16.gmra.mxu0 %v872
    %v1234 = vpop.f32.mrf.mxu0
    %v1235 = vadd.f32 %v1186, %v1234
    %v1236 = vpop.f32.mrf.mxu0
    %v1237 = vadd.f32 %v1188, %v1236
    %1238 = vdwg.mxu0
    %v1239 = vld [vmem:[#allocation7] sm:$0xf]
    %v1240 = vld [vmem:[#allocation7 + $0x4] sm:$0xf]
    %v1241 = vld [vmem:[#allocation7 + $0x8] sm:$0xf]
    %v1242 = vld [vmem:[#allocation7 + $0xc] sm:$0xf]
    %v1243 = vld [vmem:[#allocation7 + $0x10] sm:$0xf]
    %v1244 = vld [vmem:[#allocation7 + $0x14] sm:$0xf]
    %v1245 = vld [vmem:[#allocation7 + $0x18] sm:$0xf]
    %v1246 = vld [vmem:[#allocation7 + $0x1c] sm:$0xf]
    %v1247 = vld [vmem:[#allocation7 + $0x20] sm:$0xf]
    %v1248 = vld [vmem:[#allocation7 + $0x24] sm:$0xf]
    %v1249 = vld [vmem:[#allocation7 + $0x28] sm:$0xf]
    %v1250 = vld [vmem:[#allocation7 + $0x2c] sm:$0xf]
    %v1251 = vld [vmem:[#allocation7 + $0x30] sm:$0xf]
    %v1252 = vld [vmem:[#allocation7 + $0x34] sm:$0xf]
    %v1253 = vld [vmem:[#allocation7 + $0x38] sm:$0xf]
    %v1254 = vld [vmem:[#allocation7 + $0x3c] sm:$0xf]
    %v1255 = vld [vmem:[#allocation7 + $0x40] sm:$0xf]
    %v1256 = vld [vmem:[#allocation7 + $0x44] sm:$0xf]
    %v1257 = vld [vmem:[#allocation7 + $0x48] sm:$0xf]
    %v1258 = vld [vmem:[#allocation7 + $0x4c] sm:$0xf]
    %v1259 = vld [vmem:[#allocation7 + $0x50] sm:$0xf]
    %v1260 = vld [vmem:[#allocation7 + $0x54] sm:$0xf]
    %v1261 = vld [vmem:[#allocation7 + $0x58] sm:$0xf]
    %v1262 = vld [vmem:[#allocation7 + $0x5c] sm:$0xf]
    %v1263 = vld [vmem:[#allocation7 + $0x60] sm:$0xf]
    %v1264 = vld [vmem:[#allocation7 + $0x64] sm:$0xf]
    %v1265 = vld [vmem:[#allocation7 + $0x68] sm:$0xf]
    %v1266 = vld [vmem:[#allocation7 + $0x6c] sm:$0xf]
    %v1267 = vld [vmem:[#allocation7 + $0x70] sm:$0xf]
    %v1268 = vld [vmem:[#allocation7 + $0x74] sm:$0xf]
    %v1269 = vld [vmem:[#allocation7 + $0x78] sm:$0xf]
    %v1270 = vld [vmem:[#allocation7 + $0x7c] sm:$0xf]
    %v1271 = vld [vmem:[#allocation9] sm:$0x1]
    %v1273 = vperm.slane %v1271, 0
    %v1307 = vunpack.c.l.b16 %v1239
    %v1308 = vunpack.c.l.b16 %v1240
    %v1309 = vunpack.c.l.b16 %v1241
    %v1310 = vunpack.c.l.b16 %v1242
    %v1311 = vunpack.c.l.b16 %v1243
    %v1312 = vunpack.c.l.b16 %v1244
    %v1313 = vunpack.c.l.b16 %v1245
    %v1314 = vunpack.c.l.b16 %v1246
    %v1315 = vunpack.c.l.b16 %v1247
    %v1316 = vunpack.c.l.b16 %v1248
    %v1317 = vunpack.c.l.b16 %v1249
    %v1318 = vunpack.c.l.b16 %v1250
    %v1319 = vunpack.c.l.b16 %v1251
    %v1320 = vunpack.c.l.b16 %v1252
    %v1321 = vunpack.c.l.b16 %v1253
    %v1322 = vunpack.c.l.b16 %v1254
    %v1323 = vunpack.c.l.b16 %v1255
    %v1324 = vunpack.c.l.b16 %v1256
    %v1325 = vunpack.c.l.b16 %v1257
    %v1326 = vunpack.c.l.b16 %v1258
    %v1327 = vunpack.c.l.b16 %v1259
    %v1328 = vunpack.c.l.b16 %v1260
    %v1329 = vunpack.c.l.b16 %v1261
    %v1330 = vunpack.c.l.b16 %v1262
    %v1331 = vunpack.c.l.b16 %v1263
    %v1332 = vunpack.c.l.b16 %v1264
    %v1333 = vunpack.c.l.b16 %v1265
    %v1334 = vunpack.c.l.b16 %v1266
    %v1335 = vunpack.c.l.b16 %v1267
    %v1336 = vunpack.c.l.b16 %v1268
    %v1337 = vunpack.c.l.b16 %v1269
    %v1338 = vunpack.c.l.b16 %v1270
    %v1339 = vpack.c.b16 %v1308, %v1307
    %v1340 = vpack.c.b16 %v1310, %v1309
    %v1341 = vpack.c.b16 %v1312, %v1311
    %v1342 = vpack.c.b16 %v1314, %v1313
    %v1343 = vpack.c.b16 %v1316, %v1315
    %v1344 = vpack.c.b16 %v1318, %v1317
    %v1345 = vpack.c.b16 %v1320, %v1319
    %v1346 = vpack.c.b16 %v1322, %v1321
    %v1347 = vpack.c.b16 %v1324, %v1323
    %v1348 = vpack.c.b16 %v1326, %v1325
    %v1349 = vpack.c.b16 %v1328, %v1327
    %v1350 = vpack.c.b16 %v1330, %v1329
    %v1351 = vpack.c.b16 %v1332, %v1331
    %v1352 = vpack.c.b16 %v1334, %v1333
    %v1353 = vpack.c.b16 %v1336, %v1335
    %v1354 = vpack.c.b16 %v1338, %v1337
    %1371 = vmatpush.bf16.msra.mxu0 %v1346
    %1372 = vmatpush.bf16.msra.mxu0 %v1345
    %1373 = vmatpush.bf16.msra.mxu0 %v1344
    %1374 = vmatpush.bf16.msra.mxu0 %v1343
    %1375 = vmatpush.bf16.msra.mxu0 %v1342
    %1376 = vmatpush.bf16.msra.mxu0 %v1341
    %1377 = vmatpush.bf16.msra.mxu0 %v1340
    %1378 = vmatpush.bf16.msra.mxu0 %v1339
    %1379 = vmatmul.bf16.gmra.mxu0 %v945
    %v1380 = vpop.f32.mrf.mxu0
    %v1381 = vadd.f32 %v1273, %v1380
    %v1382 = vpop.f32.mrf.mxu0
    %v1383 = vadd.f32 %v1273, %v1382
    %1384 = vmatmul.bf16.gmra.mxu0 %v946
    %v1385 = vpop.f32.mrf.mxu0
    %v1386 = vadd.f32 %v1273, %v1385
    %v1387 = vpop.f32.mrf.mxu0
    %v1388 = vadd.f32 %v1273, %v1387
    %1389 = vmatmul.bf16.gmra.mxu0 %v947
    %v1390 = vpop.f32.mrf.mxu0
    %v1391 = vadd.f32 %v1273, %v1390
    %v1392 = vpop.f32.mrf.mxu0
    %v1393 = vadd.f32 %v1273, %v1392
    %1394 = vmatmul.bf16.gmra.mxu0 %v948
    %v1395 = vpop.f32.mrf.mxu0
    %v1396 = vadd.f32 %v1273, %v1395
    %v1397 = vpop.f32.mrf.mxu0
    %v1398 = vadd.f32 %v1273, %v1397
    %1399 = vmatmul.bf16.gmra.mxu0 %v949
    %v1400 = vpop.f32.mrf.mxu0
    %v1401 = vadd.f32 %v1273, %v1400
    %v1402 = vpop.f32.mrf.mxu0
    %v1403 = vadd.f32 %v1273, %v1402
    %1404 = vmatmul.bf16.gmra.mxu0 %v950
    %v1405 = vpop.f32.mrf.mxu0
    %v1406 = vadd.f32 %v1273, %v1405
    %v1407 = vpop.f32.mrf.mxu0
    %v1408 = vadd.f32 %v1273, %v1407
    %1409 = vmatmul.bf16.gmra.mxu0 %v951
    %v1410 = vpop.f32.mrf.mxu0
    %v1411 = vadd.f32 %v1273, %v1410
    %v1412 = vpop.f32.mrf.mxu0
    %v1413 = vadd.f32 %v1273, %v1412
    %1414 = vmatmul.bf16.gmra.mxu0 %v952
    %v1415 = vpop.f32.mrf.mxu0
    %v1416 = vadd.f32 %v1273, %v1415
    %v1417 = vpop.f32.mrf.mxu0
    %v1418 = vadd.f32 %v1273, %v1417
    %1419 = vdwg.mxu0
    %1420 = vmatpush.bf16.msra.mxu0 %v1354
    %1421 = vmatpush.bf16.msra.mxu0 %v1353
    %1422 = vmatpush.bf16.msra.mxu0 %v1352
    %1423 = vmatpush.bf16.msra.mxu0 %v1351
    %1424 = vmatpush.bf16.msra.mxu0 %v1350
    %1425 = vmatpush.bf16.msra.mxu0 %v1349
    %1426 = vmatpush.bf16.msra.mxu0 %v1348
    %1427 = vmatpush.bf16.msra.mxu0 %v1347
    %1428 = vmatmul.bf16.gmra.mxu0 %v993
    %v1429 = vpop.f32.mrf.mxu0
    %v1430 = vadd.f32 %v1381, %v1429
    %v1431 = vpop.f32.mrf.mxu0
    %v1432 = vadd.f32 %v1383, %v1431
    %1433 = vmatmul.bf16.gmra.mxu0 %v994
    %v1434 = vpop.f32.mrf.mxu0
    %v1435 = vadd.f32 %v1386, %v1434
    %v1436 = vpop.f32.mrf.mxu0
    %v1437 = vadd.f32 %v1388, %v1436
    %1438 = vmatmul.bf16.gmra.mxu0 %v995
    %v1439 = vpop.f32.mrf.mxu0
    %v1440 = vadd.f32 %v1391, %v1439
    %v1441 = vpop.f32.mrf.mxu0
    %v1442 = vadd.f32 %v1393, %v1441
    %1443 = vmatmul.bf16.gmra.mxu0 %v996
    %v1444 = vpop.f32.mrf.mxu0
    %v1445 = vadd.f32 %v1396, %v1444
    %v1446 = vpop.f32.mrf.mxu0
    %v1447 = vadd.f32 %v1398, %v1446
    %1448 = vmatmul.bf16.gmra.mxu0 %v997
    %v1449 = vpop.f32.mrf.mxu0
    %v1450 = vadd.f32 %v1401, %v1449
    %v1451 = vpop.f32.mrf.mxu0
    %v1452 = vadd.f32 %v1403, %v1451
    %1453 = vmatmul.bf16.gmra.mxu0 %v998
    %v1454 = vpop.f32.mrf.mxu0
    %v1455 = vadd.f32 %v1406, %v1454
    %v1456 = vpop.f32.mrf.mxu0
    %v1457 = vadd.f32 %v1408, %v1456
    %1458 = vmatmul.bf16.gmra.mxu0 %v999
    %v1459 = vpop.f32.mrf.mxu0
    %v1460 = vadd.f32 %v1411, %v1459
    %v1461 = vpop.f32.mrf.mxu0
    %v1462 = vadd.f32 %v1413, %v1461
    %1463 = vmatmul.bf16.gmra.mxu0 %v1000
    %v1464 = vpop.f32.mrf.mxu0
    %v1465 = vadd.f32 %v1416, %v1464
    %v1466 = vpop.f32.mrf.mxu0
    %v1467 = vadd.f32 %v1418, %v1466
    %1468 = vdwg.mxu0
    %v1469 = vmax.f32 %v1200, 0.0
    %v1470 = vmax.f32 %v1202, 0.0
    %v1471 = vmax.f32 %v1205, 0.0
    %v1472 = vmax.f32 %v1207, 0.0
    %v1473 = vmax.f32 %v1210, 0.0
    %v1474 = vmax.f32 %v1212, 0.0
    %v1475 = vmax.f32 %v1215, 0.0
    %v1476 = vmax.f32 %v1217, 0.0
    %v1477 = vmax.f32 %v1220, 0.0
    %v1478 = vmax.f32 %v1222, 0.0
    %v1479 = vmax.f32 %v1225, 0.0
    %v1480 = vmax.f32 %v1227, 0.0
    %v1481 = vmax.f32 %v1230, 0.0
    %v1482 = vmax.f32 %v1232, 0.0
    %v1483 = vmax.f32 %v1235, 0.0
    %v1484 = vmax.f32 %v1237, 0.0
    %v1485 = vmax.f32 %v1430, 0.0
    %v1486 = vmax.f32 %v1432, 0.0
    %v1487 = vmax.f32 %v1435, 0.0
    %v1488 = vmax.f32 %v1437, 0.0
    %v1489 = vmax.f32 %v1440, 0.0
    %v1490 = vmax.f32 %v1442, 0.0
    %v1491 = vmax.f32 %v1445, 0.0
    %v1492 = vmax.f32 %v1447, 0.0
    %v1493 = vmax.f32 %v1450, 0.0
    %v1494 = vmax.f32 %v1452, 0.0
    %v1495 = vmax.f32 %v1455, 0.0
    %v1496 = vmax.f32 %v1457, 0.0
    %v1497 = vmax.f32 %v1460, 0.0
    %v1498 = vmax.f32 %v1462, 0.0
    %v1499 = vmax.f32 %v1465, 0.0
    %v1500 = vmax.f32 %v1467, 0.0
    %v1501 = vmul.f32 %v1469, %v1469
    %v1502 = vmul.f32 %v1470, %v1470
    %v1503 = vmul.f32 %v1471, %v1471
    %v1504 = vmul.f32 %v1472, %v1472
    %v1505 = vmul.f32 %v1473, %v1473
    %v1506 = vmul.f32 %v1474, %v1474
    %v1507 = vmul.f32 %v1475, %v1475
    %v1508 = vmul.f32 %v1476, %v1476
    %v1509 = vmul.f32 %v1477, %v1477
    %v1510 = vmul.f32 %v1478, %v1478
    %v1511 = vmul.f32 %v1479, %v1479
    %v1512 = vmul.f32 %v1480, %v1480
    %v1513 = vmul.f32 %v1481, %v1481
    %v1514 = vmul.f32 %v1482, %v1482
    %v1515 = vmul.f32 %v1483, %v1483
    %v1516 = vmul.f32 %v1484, %v1484
    %1517 = vadd.xlane.f32.xlu0 %v1501
    %v1518 = vpop.xlane.xlu0 %1517
    %1519 = vadd.xlane.f32.xlu0 %v1502
    %v1520 = vpop.xlane.xlu0 %1519
    %1521 = vadd.xlane.f32.xlu0 %v1503
    %v1522 = vpop.xlane.xlu0 %1521
    %1523 = vadd.xlane.f32.xlu0 %v1504
    %v1524 = vpop.xlane.xlu0 %1523
    %1525 = vadd.xlane.f32.xlu0 %v1505
    %v1526 = vpop.xlane.xlu0 %1525
    %1527 = vadd.xlane.f32.xlu0 %v1506
    %v1528 = vpop.xlane.xlu0 %1527
    %1529 = vadd.xlane.f32.xlu0 %v1507
    %v1530 = vpop.xlane.xlu0 %1529
    %1531 = vadd.xlane.f32.xlu0 %v1508
    %v1532 = vpop.xlane.xlu0 %1531
    %1533 = vadd.xlane.f32.xlu0 %v1509
    %v1534 = vpop.xlane.xlu0 %1533
    %1535 = vadd.xlane.f32.xlu0 %v1510
    %v1536 = vpop.xlane.xlu0 %1535
    %1537 = vadd.xlane.f32.xlu0 %v1511
    %v1538 = vpop.xlane.xlu0 %1537
    %1539 = vadd.xlane.f32.xlu0 %v1512
    %v1540 = vpop.xlane.xlu0 %1539
    %1541 = vadd.xlane.f32.xlu0 %v1513
    %v1542 = vpop.xlane.xlu0 %1541
    %1543 = vadd.xlane.f32.xlu0 %v1514
    %v1544 = vpop.xlane.xlu0 %1543
    %1545 = vadd.xlane.f32.xlu0 %v1515
    %v1546 = vpop.xlane.xlu0 %1545
    %1547 = vadd.xlane.f32.xlu0 %v1516
    %v1548 = vpop.xlane.xlu0 %1547
    %v1549 = vadd.f32 %v1518, 1e-12
    %v1550 = vadd.f32 %v1520, 1e-12
    %v1551 = vadd.f32 %v1522, 1e-12
    %v1552 = vadd.f32 %v1524, 1e-12
    %v1553 = vadd.f32 %v1526, 1e-12
    %v1554 = vadd.f32 %v1528, 1e-12
    %v1555 = vadd.f32 %v1530, 1e-12
    %v1556 = vadd.f32 %v1532, 1e-12
    %v1557 = vadd.f32 %v1534, 1e-12
    %v1558 = vadd.f32 %v1536, 1e-12
    %v1559 = vadd.f32 %v1538, 1e-12
    %v1560 = vadd.f32 %v1540, 1e-12
    %v1561 = vadd.f32 %v1542, 1e-12
    %v1562 = vadd.f32 %v1544, 1e-12
    %v1563 = vadd.f32 %v1546, 1e-12
    %v1564 = vadd.f32 %v1548, 1e-12
    %v1565 = vrsqrt.pop %v1549
    %v1566 = vmul.f32 %v1565, %v1549
    %v1567 = vmul.f32 %v1566, %v1565
    %v1568 = vmul.f32 0.5, %v1567
    %v1569 = vsub.f32 1.5, %v1568
    %v1570 = vmul.f32 %v1565, %v1569
    %vm1571 = vweird.f32 %v1549
    %vm1572 = vweird.f32 %v1565
    %vm1573 = vmor %vm1571, %vm1572
    %v1574 = vsel %vm1573, %v1565, %v1570
    %v1575 = vrsqrt.pop %v1550
    %v1576 = vmul.f32 %v1575, %v1550
    %v1577 = vmul.f32 %v1576, %v1575
    %v1578 = vmul.f32 0.5, %v1577
    %v1579 = vsub.f32 1.5, %v1578
    %v1580 = vmul.f32 %v1575, %v1579
    %vm1581 = vweird.f32 %v1550
    %vm1582 = vweird.f32 %v1575
    %vm1583 = vmor %vm1581, %vm1582
    %v1584 = vsel %vm1583, %v1575, %v1580
    %v1585 = vrsqrt.pop %v1551
    %v1586 = vmul.f32 %v1585, %v1551
    %v1587 = vmul.f32 %v1586, %v1585
    %v1588 = vmul.f32 0.5, %v1587
    %v1589 = vsub.f32 1.5, %v1588
    %v1590 = vmul.f32 %v1585, %v1589
    %vm1591 = vweird.f32 %v1551
    %vm1592 = vweird.f32 %v1585
    %vm1593 = vmor %vm1591, %vm1592
    %v1594 = vsel %vm1593, %v1585, %v1590
    %v1595 = vrsqrt.pop %v1552
    %v1596 = vmul.f32 %v1595, %v1552
    %v1597 = vmul.f32 %v1596, %v1595
    %v1598 = vmul.f32 0.5, %v1597
    %v1599 = vsub.f32 1.5, %v1598
    %v1600 = vmul.f32 %v1595, %v1599
    %vm1601 = vweird.f32 %v1552
    %vm1602 = vweird.f32 %v1595
    %vm1603 = vmor %vm1601, %vm1602
    %v1604 = vsel %vm1603, %v1595, %v1600
    %v1605 = vrsqrt.pop %v1553
    %v1606 = vmul.f32 %v1605, %v1553
    %v1607 = vmul.f32 %v1606, %v1605
    %v1608 = vmul.f32 0.5, %v1607
    %v1609 = vsub.f32 1.5, %v1608
    %v1610 = vmul.f32 %v1605, %v1609
    %vm1611 = vweird.f32 %v1553
    %vm1612 = vweird.f32 %v1605
    %vm1613 = vmor %vm1611, %vm1612
    %v1614 = vsel %vm1613, %v1605, %v1610
    %v1615 = vrsqrt.pop %v1554
    %v1616 = vmul.f32 %v1615, %v1554
    %v1617 = vmul.f32 %v1616, %v1615
    %v1618 = vmul.f32 0.5, %v1617
    %v1619 = vsub.f32 1.5, %v1618
    %v1620 = vmul.f32 %v1615, %v1619
    %vm1621 = vweird.f32 %v1554
    %vm1622 = vweird.f32 %v1615
    %vm1623 = vmor %vm1621, %vm1622
    %v1624 = vsel %vm1623, %v1615, %v1620
    %v1625 = vrsqrt.pop %v1555
    %v1626 = vmul.f32 %v1625, %v1555
    %v1627 = vmul.f32 %v1626, %v1625
    %v1628 = vmul.f32 0.5, %v1627
    %v1629 = vsub.f32 1.5, %v1628
    %v1630 = vmul.f32 %v1625, %v1629
    %vm1631 = vweird.f32 %v1555
    %vm1632 = vweird.f32 %v1625
    %vm1633 = vmor %vm1631, %vm1632
    %v1634 = vsel %vm1633, %v1625, %v1630
    %v1635 = vrsqrt.pop %v1556
    %v1636 = vmul.f32 %v1635, %v1556
    %v1637 = vmul.f32 %v1636, %v1635
    %v1638 = vmul.f32 0.5, %v1637
    %v1639 = vsub.f32 1.5, %v1638
    %v1640 = vmul.f32 %v1635, %v1639
    %vm1641 = vweird.f32 %v1556
    %vm1642 = vweird.f32 %v1635
    %vm1643 = vmor %vm1641, %vm1642
    %v1644 = vsel %vm1643, %v1635, %v1640
    %v1645 = vrsqrt.pop %v1557
    %v1646 = vmul.f32 %v1645, %v1557
    %v1647 = vmul.f32 %v1646, %v1645
    %v1648 = vmul.f32 0.5, %v1647
    %v1649 = vsub.f32 1.5, %v1648
    %v1650 = vmul.f32 %v1645, %v1649
    %vm1651 = vweird.f32 %v1557
    %vm1652 = vweird.f32 %v1645
    %vm1653 = vmor %vm1651, %vm1652
    %v1654 = vsel %vm1653, %v1645, %v1650
    %v1655 = vrsqrt.pop %v1558
    %v1656 = vmul.f32 %v1655, %v1558
    %v1657 = vmul.f32 %v1656, %v1655
    %v1658 = vmul.f32 0.5, %v1657
    %v1659 = vsub.f32 1.5, %v1658
    %v1660 = vmul.f32 %v1655, %v1659
    %vm1661 = vweird.f32 %v1558
    %vm1662 = vweird.f32 %v1655
    %vm1663 = vmor %vm1661, %vm1662
    %v1664 = vsel %vm1663, %v1655, %v1660
    %v1665 = vrsqrt.pop %v1559
    %v1666 = vmul.f32 %v1665, %v1559
    %v1667 = vmul.f32 %v1666, %v1665
    %v1668 = vmul.f32 0.5, %v1667
    %v1669 = vsub.f32 1.5, %v1668
    %v1670 = vmul.f32 %v1665, %v1669
    %vm1671 = vweird.f32 %v1559
    %vm1672 = vweird.f32 %v1665
    %vm1673 = vmor %vm1671, %vm1672
    %v1674 = vsel %vm1673, %v1665, %v1670
    %v1675 = vrsqrt.pop %v1560
    %v1676 = vmul.f32 %v1675, %v1560
    %v1677 = vmul.f32 %v1676, %v1675
    %v1678 = vmul.f32 0.5, %v1677
    %v1679 = vsub.f32 1.5, %v1678
    %v1680 = vmul.f32 %v1675, %v1679
    %vm1681 = vweird.f32 %v1560
    %vm1682 = vweird.f32 %v1675
    %vm1683 = vmor %vm1681, %vm1682
    %v1684 = vsel %vm1683, %v1675, %v1680
    %v1685 = vrsqrt.pop %v1561
    %v1686 = vmul.f32 %v1685, %v1561
    %v1687 = vmul.f32 %v1686, %v1685
    %v1688 = vmul.f32 0.5, %v1687
    %v1689 = vsub.f32 1.5, %v1688
    %v1690 = vmul.f32 %v1685, %v1689
    %vm1691 = vweird.f32 %v1561
    %vm1692 = vweird.f32 %v1685
    %vm1693 = vmor %vm1691, %vm1692
    %v1694 = vsel %vm1693, %v1685, %v1690
    %v1695 = vrsqrt.pop %v1562
    %v1696 = vmul.f32 %v1695, %v1562
    %v1697 = vmul.f32 %v1696, %v1695
    %v1698 = vmul.f32 0.5, %v1697
    %v1699 = vsub.f32 1.5, %v1698
    %v1700 = vmul.f32 %v1695, %v1699
    %vm1701 = vweird.f32 %v1562
    %vm1702 = vweird.f32 %v1695
    %vm1703 = vmor %vm1701, %vm1702
    %v1704 = vsel %vm1703, %v1695, %v1700
    %v1705 = vrsqrt.pop %v1563
    %v1706 = vmul.f32 %v1705, %v1563
    %v1707 = vmul.f32 %v1706, %v1705
    %v1708 = vmul.f32 0.5, %v1707
    %v1709 = vsub.f32 1.5, %v1708
    %v1710 = vmul.f32 %v1705, %v1709
    %vm1711 = vweird.f32 %v1563
    %vm1712 = vweird.f32 %v1705
    %vm1713 = vmor %vm1711, %vm1712
    %v1714 = vsel %vm1713, %v1705, %v1710
    %v1715 = vrsqrt.pop %v1564
    %v1716 = vmul.f32 %v1715, %v1564
    %v1717 = vmul.f32 %v1716, %v1715
    %v1718 = vmul.f32 0.5, %v1717
    %v1719 = vsub.f32 1.5, %v1718
    %v1720 = vmul.f32 %v1715, %v1719
    %vm1721 = vweird.f32 %v1564
    %vm1722 = vweird.f32 %v1715
    %vm1723 = vmor %vm1721, %vm1722
    %v1724 = vsel %vm1723, %v1715, %v1720
    %v1725 = vmul.f32 %v1469, %v1574
    %v1726 = vmul.f32 %v1470, %v1584
    %v1727 = vmul.f32 %v1471, %v1594
    %v1728 = vmul.f32 %v1472, %v1604
    %v1729 = vmul.f32 %v1473, %v1614
    %v1730 = vmul.f32 %v1474, %v1624
    %v1731 = vmul.f32 %v1475, %v1634
    %v1732 = vmul.f32 %v1476, %v1644
    %v1733 = vmul.f32 %v1477, %v1654
    %v1734 = vmul.f32 %v1478, %v1664
    %v1735 = vmul.f32 %v1479, %v1674
    %v1736 = vmul.f32 %v1480, %v1684
    %v1737 = vmul.f32 %v1481, %v1694
    %v1738 = vmul.f32 %v1482, %v1704
    %v1739 = vmul.f32 %v1483, %v1714
    %v1740 = vmul.f32 %v1484, %v1724
    %v1741 = vmul.f32 %v1485, %v1485
    %v1742 = vmul.f32 %v1486, %v1486
    %v1743 = vmul.f32 %v1487, %v1487
    %v1744 = vmul.f32 %v1488, %v1488
    %v1745 = vmul.f32 %v1489, %v1489
    %v1746 = vmul.f32 %v1490, %v1490
    %v1747 = vmul.f32 %v1491, %v1491
    %v1748 = vmul.f32 %v1492, %v1492
    %v1749 = vmul.f32 %v1493, %v1493
    %v1750 = vmul.f32 %v1494, %v1494
    %v1751 = vmul.f32 %v1495, %v1495
    %v1752 = vmul.f32 %v1496, %v1496
    %v1753 = vmul.f32 %v1497, %v1497
    %v1754 = vmul.f32 %v1498, %v1498
    %v1755 = vmul.f32 %v1499, %v1499
    %v1756 = vmul.f32 %v1500, %v1500
    %1757 = vadd.xlane.f32.xlu0 %v1741
    %v1758 = vpop.xlane.xlu0 %1757
    %1759 = vadd.xlane.f32.xlu0 %v1742
    %v1760 = vpop.xlane.xlu0 %1759
    %1761 = vadd.xlane.f32.xlu0 %v1743
    %v1762 = vpop.xlane.xlu0 %1761
    %1763 = vadd.xlane.f32.xlu0 %v1744
    %v1764 = vpop.xlane.xlu0 %1763
    %1765 = vadd.xlane.f32.xlu0 %v1745
    %v1766 = vpop.xlane.xlu0 %1765
    %1767 = vadd.xlane.f32.xlu0 %v1746
    %v1768 = vpop.xlane.xlu0 %1767
    %1769 = vadd.xlane.f32.xlu0 %v1747
    %v1770 = vpop.xlane.xlu0 %1769
    %1771 = vadd.xlane.f32.xlu0 %v1748
    %v1772 = vpop.xlane.xlu0 %1771
    %1773 = vadd.xlane.f32.xlu0 %v1749
    %v1774 = vpop.xlane.xlu0 %1773
    %1775 = vadd.xlane.f32.xlu0 %v1750
    %v1776 = vpop.xlane.xlu0 %1775
    %1777 = vadd.xlane.f32.xlu0 %v1751
    %v1778 = vpop.xlane.xlu0 %1777
    %1779 = vadd.xlane.f32.xlu0 %v1752
    %v1780 = vpop.xlane.xlu0 %1779
    %1781 = vadd.xlane.f32.xlu0 %v1753
    %v1782 = vpop.xlane.xlu0 %1781
    %1783 = vadd.xlane.f32.xlu0 %v1754
    %v1784 = vpop.xlane.xlu0 %1783
    %1785 = vadd.xlane.f32.xlu0 %v1755
    %v1786 = vpop.xlane.xlu0 %1785
    %1787 = vadd.xlane.f32.xlu0 %v1756
    %v1788 = vpop.xlane.xlu0 %1787
    %v1789 = vadd.f32 %v1758, 1e-12
    %v1790 = vadd.f32 %v1760, 1e-12
    %v1791 = vadd.f32 %v1762, 1e-12
    %v1792 = vadd.f32 %v1764, 1e-12
    %v1793 = vadd.f32 %v1766, 1e-12
    %v1794 = vadd.f32 %v1768, 1e-12
    %v1795 = vadd.f32 %v1770, 1e-12
    %v1796 = vadd.f32 %v1772, 1e-12
    %v1797 = vadd.f32 %v1774, 1e-12
    %v1798 = vadd.f32 %v1776, 1e-12
    %v1799 = vadd.f32 %v1778, 1e-12
    %v1800 = vadd.f32 %v1780, 1e-12
    %v1801 = vadd.f32 %v1782, 1e-12
    %v1802 = vadd.f32 %v1784, 1e-12
    %v1803 = vadd.f32 %v1786, 1e-12
    %v1804 = vadd.f32 %v1788, 1e-12
    %v1805 = vrsqrt.pop %v1789
    %v1806 = vmul.f32 %v1805, %v1789
    %v1807 = vmul.f32 %v1806, %v1805
    %v1808 = vmul.f32 0.5, %v1807
    %v1809 = vsub.f32 1.5, %v1808
    %v1810 = vmul.f32 %v1805, %v1809
    %vm1811 = vweird.f32 %v1789
    %vm1812 = vweird.f32 %v1805
    %vm1813 = vmor %vm1811, %vm1812
    %v1814 = vsel %vm1813, %v1805, %v1810
    %v1815 = vrsqrt.pop %v1790
    %v1816 = vmul.f32 %v1815, %v1790
    %v1817 = vmul.f32 %v1816, %v1815
    %v1818 = vmul.f32 0.5, %v1817
    %v1819 = vsub.f32 1.5, %v1818
    %v1820 = vmul.f32 %v1815, %v1819
    %vm1821 = vweird.f32 %v1790
    %vm1822 = vweird.f32 %v1815
    %vm1823 = vmor %vm1821, %vm1822
    %v1824 = vsel %vm1823, %v1815, %v1820
    %v1825 = vrsqrt.pop %v1791
    %v1826 = vmul.f32 %v1825, %v1791
    %v1827 = vmul.f32 %v1826, %v1825
    %v1828 = vmul.f32 0.5, %v1827
    %v1829 = vsub.f32 1.5, %v1828
    %v1830 = vmul.f32 %v1825, %v1829
    %vm1831 = vweird.f32 %v1791
    %vm1832 = vweird.f32 %v1825
    %vm1833 = vmor %vm1831, %vm1832
    %v1834 = vsel %vm1833, %v1825, %v1830
    %v1835 = vrsqrt.pop %v1792
    %v1836 = vmul.f32 %v1835, %v1792
    %v1837 = vmul.f32 %v1836, %v1835
    %v1838 = vmul.f32 0.5, %v1837
    %v1839 = vsub.f32 1.5, %v1838
    %v1840 = vmul.f32 %v1835, %v1839
    %vm1841 = vweird.f32 %v1792
    %vm1842 = vweird.f32 %v1835
    %vm1843 = vmor %vm1841, %vm1842
    %v1844 = vsel %vm1843, %v1835, %v1840
    %v1845 = vrsqrt.pop %v1793
    %v1846 = vmul.f32 %v1845, %v1793
    %v1847 = vmul.f32 %v1846, %v1845
    %v1848 = vmul.f32 0.5, %v1847
    %v1849 = vsub.f32 1.5, %v1848
    %v1850 = vmul.f32 %v1845, %v1849
    %vm1851 = vweird.f32 %v1793
    %vm1852 = vweird.f32 %v1845
    %vm1853 = vmor %vm1851, %vm1852
    %v1854 = vsel %vm1853, %v1845, %v1850
    %v1855 = vrsqrt.pop %v1794
    %v1856 = vmul.f32 %v1855, %v1794
    %v1857 = vmul.f32 %v1856, %v1855
    %v1858 = vmul.f32 0.5, %v1857
    %v1859 = vsub.f32 1.5, %v1858
    %v1860 = vmul.f32 %v1855, %v1859
    %vm1861 = vweird.f32 %v1794
    %vm1862 = vweird.f32 %v1855
    %vm1863 = vmor %vm1861, %vm1862
    %v1864 = vsel %vm1863, %v1855, %v1860
    %v1865 = vrsqrt.pop %v1795
    %v1866 = vmul.f32 %v1865, %v1795
    %v1867 = vmul.f32 %v1866, %v1865
    %v1868 = vmul.f32 0.5, %v1867
    %v1869 = vsub.f32 1.5, %v1868
    %v1870 = vmul.f32 %v1865, %v1869
    %vm1871 = vweird.f32 %v1795
    %vm1872 = vweird.f32 %v1865
    %vm1873 = vmor %vm1871, %vm1872
    %v1874 = vsel %vm1873, %v1865, %v1870
    %v1875 = vrsqrt.pop %v1796
    %v1876 = vmul.f32 %v1875, %v1796
    %v1877 = vmul.f32 %v1876, %v1875
    %v1878 = vmul.f32 0.5, %v1877
    %v1879 = vsub.f32 1.5, %v1878
    %v1880 = vmul.f32 %v1875, %v1879
    %vm1881 = vweird.f32 %v1796
    %vm1882 = vweird.f32 %v1875
    %vm1883 = vmor %vm1881, %vm1882
    %v1884 = vsel %vm1883, %v1875, %v1880
    %v1885 = vrsqrt.pop %v1797
    %v1886 = vmul.f32 %v1885, %v1797
    %v1887 = vmul.f32 %v1886, %v1885
    %v1888 = vmul.f32 0.5, %v1887
    %v1889 = vsub.f32 1.5, %v1888
    %v1890 = vmul.f32 %v1885, %v1889
    %vm1891 = vweird.f32 %v1797
    %vm1892 = vweird.f32 %v1885
    %vm1893 = vmor %vm1891, %vm1892
    %v1894 = vsel %vm1893, %v1885, %v1890
    %v1895 = vrsqrt.pop %v1798
    %v1896 = vmul.f32 %v1895, %v1798
    %v1897 = vmul.f32 %v1896, %v1895
    %v1898 = vmul.f32 0.5, %v1897
    %v1899 = vsub.f32 1.5, %v1898
    %v1900 = vmul.f32 %v1895, %v1899
    %vm1901 = vweird.f32 %v1798
    %vm1902 = vweird.f32 %v1895
    %vm1903 = vmor %vm1901, %vm1902
    %v1904 = vsel %vm1903, %v1895, %v1900
    %v1905 = vrsqrt.pop %v1799
    %v1906 = vmul.f32 %v1905, %v1799
    %v1907 = vmul.f32 %v1906, %v1905
    %v1908 = vmul.f32 0.5, %v1907
    %v1909 = vsub.f32 1.5, %v1908
    %v1910 = vmul.f32 %v1905, %v1909
    %vm1911 = vweird.f32 %v1799
    %vm1912 = vweird.f32 %v1905
    %vm1913 = vmor %vm1911, %vm1912
    %v1914 = vsel %vm1913, %v1905, %v1910
    %v1915 = vrsqrt.pop %v1800
    %v1916 = vmul.f32 %v1915, %v1800
    %v1917 = vmul.f32 %v1916, %v1915
    %v1918 = vmul.f32 0.5, %v1917
    %v1919 = vsub.f32 1.5, %v1918
    %v1920 = vmul.f32 %v1915, %v1919
    %vm1921 = vweird.f32 %v1800
    %vm1922 = vweird.f32 %v1915
    %vm1923 = vmor %vm1921, %vm1922
    %v1924 = vsel %vm1923, %v1915, %v1920
    %v1925 = vrsqrt.pop %v1801
    %v1926 = vmul.f32 %v1925, %v1801
    %v1927 = vmul.f32 %v1926, %v1925
    %v1928 = vmul.f32 0.5, %v1927
    %v1929 = vsub.f32 1.5, %v1928
    %v1930 = vmul.f32 %v1925, %v1929
    %vm1931 = vweird.f32 %v1801
    %vm1932 = vweird.f32 %v1925
    %vm1933 = vmor %vm1931, %vm1932
    %v1934 = vsel %vm1933, %v1925, %v1930
    %v1935 = vrsqrt.pop %v1802
    %v1936 = vmul.f32 %v1935, %v1802
    %v1937 = vmul.f32 %v1936, %v1935
    %v1938 = vmul.f32 0.5, %v1937
    %v1939 = vsub.f32 1.5, %v1938
    %v1940 = vmul.f32 %v1935, %v1939
    %vm1941 = vweird.f32 %v1802
    %vm1942 = vweird.f32 %v1935
    %vm1943 = vmor %vm1941, %vm1942
    %v1944 = vsel %vm1943, %v1935, %v1940
    %v1945 = vrsqrt.pop %v1803
    %v1946 = vmul.f32 %v1945, %v1803
    %v1947 = vmul.f32 %v1946, %v1945
    %v1948 = vmul.f32 0.5, %v1947
    %v1949 = vsub.f32 1.5, %v1948
    %v1950 = vmul.f32 %v1945, %v1949
    %vm1951 = vweird.f32 %v1803
    %vm1952 = vweird.f32 %v1945
    %vm1953 = vmor %vm1951, %vm1952
    %v1954 = vsel %vm1953, %v1945, %v1950
    %v1955 = vrsqrt.pop %v1804
    %v1956 = vmul.f32 %v1955, %v1804
    %v1957 = vmul.f32 %v1956, %v1955
    %v1958 = vmul.f32 0.5, %v1957
    %v1959 = vsub.f32 1.5, %v1958
    %v1960 = vmul.f32 %v1955, %v1959
    %vm1961 = vweird.f32 %v1804
    %vm1962 = vweird.f32 %v1955
    %vm1963 = vmor %vm1961, %vm1962
    %v1964 = vsel %vm1963, %v1955, %v1960
    %v1965 = vmul.f32 %v1485, %v1814
    %v1966 = vmul.f32 %v1486, %v1824
    %v1967 = vmul.f32 %v1487, %v1834
    %v1968 = vmul.f32 %v1488, %v1844
    %v1969 = vmul.f32 %v1489, %v1854
    %v1970 = vmul.f32 %v1490, %v1864
    %v1971 = vmul.f32 %v1491, %v1874
    %v1972 = vmul.f32 %v1492, %v1884
    %v1973 = vmul.f32 %v1493, %v1894
    %v1974 = vmul.f32 %v1494, %v1904
    %v1975 = vmul.f32 %v1495, %v1914
    %v1976 = vmul.f32 %v1496, %v1924
    %v1977 = vmul.f32 %v1497, %v1934
    %v1978 = vmul.f32 %v1498, %v1944
    %v1979 = vmul.f32 %v1499, %v1954
    %v1980 = vmul.f32 %v1500, %v1964
    %v1981 = vld [vmem:[#allocation10] sm:$0xff]
    %v1982 = vld [vmem:[#allocation10 + $0x8] sm:$0xff]
    %v1983 = vld [vmem:[#allocation10 + $0x10] sm:$0xff]
    %v1984 = vld [vmem:[#allocation10 + $0x18] sm:$0xff]
    %v1985 = vld [vmem:[#allocation10 + $0x20] sm:$0xff]
    %v1986 = vld [vmem:[#allocation10 + $0x28] sm:$0xff]
    %v1987 = vld [vmem:[#allocation10 + $0x30] sm:$0xff]
    %v1988 = vld [vmem:[#allocation10 + $0x38] sm:$0xff]
    %v1989 = vld [vmem:[#allocation10 + $0x40] sm:$0xff]
    %v1990 = vld [vmem:[#allocation10 + $0x48] sm:$0xff]
    %v1991 = vld [vmem:[#allocation10 + $0x50] sm:$0xff]
    %v1992 = vld [vmem:[#allocation10 + $0x58] sm:$0xff]
    %v1993 = vld [vmem:[#allocation10 + $0x60] sm:$0xff]
    %v1994 = vld [vmem:[#allocation10 + $0x68] sm:$0xff]
    %v1995 = vld [vmem:[#allocation10 + $0x70] sm:$0xff]
    %v1996 = vld [vmem:[#allocation10 + $0x78] sm:$0xff]
    %1997 = vmatpush.msra.mxu0 %v1980
    %1998 = vmatpush.msra.mxu0 %v1979
    %1999 = vmatpush.msra.mxu0 %v1978
    %2000 = vmatpush.msra.mxu0 %v1977
    %2001 = vmatpush.msra.mxu0 %v1976
    %2002 = vmatpush.msra.mxu0 %v1975
    %2003 = vmatpush.msra.mxu0 %v1974
    %2004 = vmatpush.msra.mxu0 %v1973
    %2005 = vmatpush.msra.mxu0 %v1972
    %2006 = vmatpush.msra.mxu0 %v1971
    %2007 = vmatpush.msra.mxu0 %v1970
    %2008 = vmatpush.msra.mxu0 %v1969
    %2009 = vmatpush.msra.mxu0 %v1968
    %2010 = vmatpush.msra.mxu0 %v1967
    %2011 = vmatpush.msra.mxu0 %v1966
    %2012 = vmatpush.msra.mxu0 %v1965
    %2013 = vmatmul.f32.gmra.mxu0 %v1981
    %v2014 = vpop.f32.mrf.mxu0
    %v2015 = vadd.f32 0.0, %v2014
    %2016 = vmatmul.f32.gmra.mxu0 %v1982
    %v2017 = vpop.f32.mrf.mxu0
    %v2018 = vadd.f32 0.0, %v2017
    %2019 = vmatmul.f32.gmra.mxu0 %v1983
    %v2020 = vpop.f32.mrf.mxu0
    %v2021 = vadd.f32 0.0, %v2020
    %2022 = vmatmul.f32.gmra.mxu0 %v1984
    %v2023 = vpop.f32.mrf.mxu0
    %v2024 = vadd.f32 0.0, %v2023
    %2025 = vmatmul.f32.gmra.mxu0 %v1985
    %v2026 = vpop.f32.mrf.mxu0
    %v2027 = vadd.f32 0.0, %v2026
    %2028 = vmatmul.f32.gmra.mxu0 %v1986
    %v2029 = vpop.f32.mrf.mxu0
    %v2030 = vadd.f32 0.0, %v2029
    %2031 = vmatmul.f32.gmra.mxu0 %v1987
    %v2032 = vpop.f32.mrf.mxu0
    %v2033 = vadd.f32 0.0, %v2032
    %2034 = vmatmul.f32.gmra.mxu0 %v1988
    %v2035 = vpop.f32.mrf.mxu0
    %v2036 = vadd.f32 0.0, %v2035
    %2037 = vmatmul.f32.gmra.mxu0 %v1989
    %v2038 = vpop.f32.mrf.mxu0
    %v2039 = vadd.f32 0.0, %v2038
    %2040 = vmatmul.f32.gmra.mxu0 %v1990
    %v2041 = vpop.f32.mrf.mxu0
    %v2042 = vadd.f32 0.0, %v2041
    %2043 = vmatmul.f32.gmra.mxu0 %v1991
    %v2044 = vpop.f32.mrf.mxu0
    %v2045 = vadd.f32 0.0, %v2044
    %2046 = vmatmul.f32.gmra.mxu0 %v1992
    %v2047 = vpop.f32.mrf.mxu0
    %v2048 = vadd.f32 0.0, %v2047
    %2049 = vmatmul.f32.gmra.mxu0 %v1993
    %v2050 = vpop.f32.mrf.mxu0
    %v2051 = vadd.f32 0.0, %v2050
    %2052 = vmatmul.f32.gmra.mxu0 %v1994
    %v2053 = vpop.f32.mrf.mxu0
    %v2054 = vadd.f32 0.0, %v2053
    %2055 = vmatmul.f32.gmra.mxu0 %v1995
    %v2056 = vpop.f32.mrf.mxu0
    %v2057 = vadd.f32 0.0, %v2056
    %2058 = vmatmul.f32.gmra.mxu0 %v1996
    %v2059 = vpop.f32.mrf.mxu0
    %v2060 = vadd.f32 0.0, %v2059
    %2061 = vdwg.mxu0
    %v2062 = vld [vmem:[#allocation12] sm:$0xff]
    %v2063 = vld [vmem:[#allocation12 + $0x8] sm:$0xff]
    %v2064 = vld [vmem:[#allocation12 + $0x10] sm:$0xff]
    %v2065 = vld [vmem:[#allocation12 + $0x18] sm:$0xff]
    %v2066 = vld [vmem:[#allocation12 + $0x20] sm:$0xff]
    %v2067 = vld [vmem:[#allocation12 + $0x28] sm:$0xff]
    %v2068 = vld [vmem:[#allocation12 + $0x30] sm:$0xff]
    %v2069 = vld [vmem:[#allocation12 + $0x38] sm:$0xff]
    %v2070 = vld [vmem:[#allocation12 + $0x40] sm:$0xff]
    %v2071 = vld [vmem:[#allocation12 + $0x48] sm:$0xff]
    %v2072 = vld [vmem:[#allocation12 + $0x50] sm:$0xff]
    %v2073 = vld [vmem:[#allocation12 + $0x58] sm:$0xff]
    %v2074 = vld [vmem:[#allocation12 + $0x60] sm:$0xff]
    %v2075 = vld [vmem:[#allocation12 + $0x68] sm:$0xff]
    %v2076 = vld [vmem:[#allocation12 + $0x70] sm:$0xff]
    %v2077 = vld [vmem:[#allocation12 + $0x78] sm:$0xff]
    %2078 = vmatpush.msra.mxu0 %v1740
    %2079 = vmatpush.msra.mxu0 %v1739
    %2080 = vmatpush.msra.mxu0 %v1738
    %2081 = vmatpush.msra.mxu0 %v1737
    %2082 = vmatpush.msra.mxu0 %v1736
    %2083 = vmatpush.msra.mxu0 %v1735
    %2084 = vmatpush.msra.mxu0 %v1734
    %2085 = vmatpush.msra.mxu0 %v1733
    %2086 = vmatpush.msra.mxu0 %v1732
    %2087 = vmatpush.msra.mxu0 %v1731
    %2088 = vmatpush.msra.mxu0 %v1730
    %2089 = vmatpush.msra.mxu0 %v1729
    %2090 = vmatpush.msra.mxu0 %v1728
    %2091 = vmatpush.msra.mxu0 %v1727
    %2092 = vmatpush.msra.mxu0 %v1726
    %2093 = vmatpush.msra.mxu0 %v1725
    %2094 = vmatmul.f32.gmra.mxu0 %v2062
    %v2095 = vpop.f32.mrf.mxu0
    %v2096 = vadd.f32 0.0, %v2095
    %2097 = vmatmul.f32.gmra.mxu0 %v2063
    %v2098 = vpop.f32.mrf.mxu0
    %v2099 = vadd.f32 0.0, %v2098
    %2100 = vmatmul.f32.gmra.mxu0 %v2064
    %v2101 = vpop.f32.mrf.mxu0
    %v2102 = vadd.f32 0.0, %v2101
    %2103 = vmatmul.f32.gmra.mxu0 %v2065
    %v2104 = vpop.f32.mrf.mxu0
    %v2105 = vadd.f32 0.0, %v2104
    %2106 = vmatmul.f32.gmra.mxu0 %v2066
    %v2107 = vpop.f32.mrf.mxu0
    %v2108 = vadd.f32 0.0, %v2107
    %2109 = vmatmul.f32.gmra.mxu0 %v2067
    %v2110 = vpop.f32.mrf.mxu0
    %v2111 = vadd.f32 0.0, %v2110
    %2112 = vmatmul.f32.gmra.mxu0 %v2068
    %v2113 = vpop.f32.mrf.mxu0
    %v2114 = vadd.f32 0.0, %v2113
    %2115 = vmatmul.f32.gmra.mxu0 %v2069
    %v2116 = vpop.f32.mrf.mxu0
    %v2117 = vadd.f32 0.0, %v2116
    %2118 = vmatmul.f32.gmra.mxu0 %v2070
    %v2119 = vpop.f32.mrf.mxu0
    %v2120 = vadd.f32 0.0, %v2119
    %2121 = vmatmul.f32.gmra.mxu0 %v2071
    %v2122 = vpop.f32.mrf.mxu0
    %v2123 = vadd.f32 0.0, %v2122
    %2124 = vmatmul.f32.gmra.mxu0 %v2072
    %v2125 = vpop.f32.mrf.mxu0
    %v2126 = vadd.f32 0.0, %v2125
    %2127 = vmatmul.f32.gmra.mxu0 %v2073
    %v2128 = vpop.f32.mrf.mxu0
    %v2129 = vadd.f32 0.0, %v2128
    %2130 = vmatmul.f32.gmra.mxu0 %v2074
    %v2131 = vpop.f32.mrf.mxu0
    %v2132 = vadd.f32 0.0, %v2131
    %2133 = vmatmul.f32.gmra.mxu0 %v2075
    %v2134 = vpop.f32.mrf.mxu0
    %v2135 = vadd.f32 0.0, %v2134
    %2136 = vmatmul.f32.gmra.mxu0 %v2076
    %v2137 = vpop.f32.mrf.mxu0
    %v2138 = vadd.f32 0.0, %v2137
    %2139 = vmatmul.f32.gmra.mxu0 %v2077
    %v2140 = vpop.f32.mrf.mxu0
    %v2141 = vadd.f32 0.0, %v2140
    %2142 = vdwg.mxu0
    %v2143 = vpack.c.bf16 %v1725, %v1725
    %v2144 = vpack.c.bf16 %v1726, %v1726
    %v2145 = vpack.c.bf16 %v1727, %v1727
    %v2146 = vpack.c.bf16 %v1728, %v1728
    %v2147 = vpack.c.bf16 %v1729, %v1729
    %v2148 = vpack.c.bf16 %v1730, %v1730
    %v2149 = vpack.c.bf16 %v1731, %v1731
    %v2150 = vpack.c.bf16 %v1732, %v1732
    %v2151 = vpack.c.bf16 %v1733, %v1733
    %v2152 = vpack.c.bf16 %v1734, %v1734
    %v2153 = vpack.c.bf16 %v1735, %v1735
    %v2154 = vpack.c.bf16 %v1736, %v1736
    %v2155 = vpack.c.bf16 %v1737, %v1737
    %v2156 = vpack.c.bf16 %v1738, %v1738
    %v2157 = vpack.c.bf16 %v1739, %v1739
    %v2158 = vpack.c.bf16 %v1740, %v1740
    %v2159 = vpack.c.bf16 %v2015, %v2015
    %v2160 = vpack.c.bf16 %v2018, %v2018
    %v2161 = vpack.c.bf16 %v2021, %v2021
    %v2162 = vpack.c.bf16 %v2024, %v2024
    %v2163 = vpack.c.bf16 %v2027, %v2027
    %v2164 = vpack.c.bf16 %v2030, %v2030
    %v2165 = vpack.c.bf16 %v2033, %v2033
    %v2166 = vpack.c.bf16 %v2036, %v2036
    %v2167 = vpack.c.bf16 %v2039, %v2039
    %v2168 = vpack.c.bf16 %v2042, %v2042
    %v2169 = vpack.c.bf16 %v2045, %v2045
    %v2170 = vpack.c.bf16 %v2048, %v2048
    %v2171 = vpack.c.bf16 %v2051, %v2051
    %v2172 = vpack.c.bf16 %v2054, %v2054
    %v2173 = vpack.c.bf16 %v2057, %v2057
    %v2174 = vpack.c.bf16 %v2060, %v2060
    %v2191 = vunpack.c.l.b16 %v2143
    %v2192 = vunpack.c.l.b16 %v2144
    %v2193 = vunpack.c.l.b16 %v2145
    %v2194 = vunpack.c.l.b16 %v2146
    %v2195 = vunpack.c.l.b16 %v2147
    %v2196 = vunpack.c.l.b16 %v2148
    %v2197 = vunpack.c.l.b16 %v2149
    %v2198 = vunpack.c.l.b16 %v2150
    %v2199 = vunpack.c.l.b16 %v2151
    %v2200 = vunpack.c.l.b16 %v2152
    %v2201 = vunpack.c.l.b16 %v2153
    %v2202 = vunpack.c.l.b16 %v2154
    %v2203 = vunpack.c.l.b16 %v2155
    %v2204 = vunpack.c.l.b16 %v2156
    %v2205 = vunpack.c.l.b16 %v2157
    %v2206 = vunpack.c.l.b16 %v2158
    %v2207 = vpack.c.b16 %v2192, %v2191
    %v2208 = vpack.c.b16 %v2194, %v2193
    %v2209 = vpack.c.b16 %v2196, %v2195
    %v2210 = vpack.c.b16 %v2198, %v2197
    %v2211 = vpack.c.b16 %v2200, %v2199
    %v2212 = vpack.c.b16 %v2202, %v2201
    %v2213 = vpack.c.b16 %v2204, %v2203
    %v2214 = vpack.c.b16 %v2206, %v2205
    %v2239 = vunpack.c.l.b16 %v2159
    %v2240 = vunpack.c.l.b16 %v2160
    %v2241 = vunpack.c.l.b16 %v2161
    %v2242 = vunpack.c.l.b16 %v2162
    %v2243 = vunpack.c.l.b16 %v2163
    %v2244 = vunpack.c.l.b16 %v2164
    %v2245 = vunpack.c.l.b16 %v2165
    %v2246 = vunpack.c.l.b16 %v2166
    %v2247 = vunpack.c.l.b16 %v2167
    %v2248 = vunpack.c.l.b16 %v2168
    %v2249 = vunpack.c.l.b16 %v2169
    %v2250 = vunpack.c.l.b16 %v2170
    %v2251 = vunpack.c.l.b16 %v2171
    %v2252 = vunpack.c.l.b16 %v2172
    %v2253 = vunpack.c.l.b16 %v2173
    %v2254 = vunpack.c.l.b16 %v2174
    %v2255 = vpack.c.b16 %v2240, %v2239
    %v2256 = vpack.c.b16 %v2242, %v2241
    %v2257 = vpack.c.b16 %v2244, %v2243
    %v2258 = vpack.c.b16 %v2246, %v2245
    %v2259 = vpack.c.b16 %v2248, %v2247
    %v2260 = vpack.c.b16 %v2250, %v2249
    %v2261 = vpack.c.b16 %v2252, %v2251
    %v2262 = vpack.c.b16 %v2254, %v2253
    %v2271 = vpack.c.bf16 %v1965, %v1965
    %v2272 = vpack.c.bf16 %v1966, %v1966
    %v2273 = vpack.c.bf16 %v1967, %v1967
    %v2274 = vpack.c.bf16 %v1968, %v1968
    %v2275 = vpack.c.bf16 %v1969, %v1969
    %v2276 = vpack.c.bf16 %v1970, %v1970
    %v2277 = vpack.c.bf16 %v1971, %v1971
    %v2278 = vpack.c.bf16 %v1972, %v1972
    %v2279 = vpack.c.bf16 %v1973, %v1973
    %v2280 = vpack.c.bf16 %v1974, %v1974
    %v2281 = vpack.c.bf16 %v1975, %v1975
    %v2282 = vpack.c.bf16 %v1976, %v1976
    %v2283 = vpack.c.bf16 %v1977, %v1977
    %v2284 = vpack.c.bf16 %v1978, %v1978
    %v2285 = vpack.c.bf16 %v1979, %v1979
    %v2286 = vpack.c.bf16 %v1980, %v1980
    %v2287 = vpack.c.bf16 %v2096, %v2096
    %v2288 = vpack.c.bf16 %v2099, %v2099
    %v2289 = vpack.c.bf16 %v2102, %v2102
    %v2290 = vpack.c.bf16 %v2105, %v2105
    %v2291 = vpack.c.bf16 %v2108, %v2108
    %v2292 = vpack.c.bf16 %v2111, %v2111
    %v2293 = vpack.c.bf16 %v2114, %v2114
    %v2294 = vpack.c.bf16 %v2117, %v2117
    %v2295 = vpack.c.bf16 %v2120, %v2120
    %v2296 = vpack.c.bf16 %v2123, %v2123
    %v2297 = vpack.c.bf16 %v2126, %v2126
    %v2298 = vpack.c.bf16 %v2129, %v2129
    %v2299 = vpack.c.bf16 %v2132, %v2132
    %v2300 = vpack.c.bf16 %v2135, %v2135
    %v2301 = vpack.c.bf16 %v2138, %v2138
    %v2302 = vpack.c.bf16 %v2141, %v2141
    %v2319 = vunpack.c.l.b16 %v2271
    %v2320 = vunpack.c.l.b16 %v2272
    %v2321 = vunpack.c.l.b16 %v2273
    %v2322 = vunpack.c.l.b16 %v2274
    %v2323 = vunpack.c.l.b16 %v2275
    %v2324 = vunpack.c.l.b16 %v2276
    %v2325 = vunpack.c.l.b16 %v2277
    %v2326 = vunpack.c.l.b16 %v2278
    %v2327 = vunpack.c.l.b16 %v2279
    %v2328 = vunpack.c.l.b16 %v2280
    %v2329 = vunpack.c.l.b16 %v2281
    %v2330 = vunpack.c.l.b16 %v2282
    %v2331 = vunpack.c.l.b16 %v2283
    %v2332 = vunpack.c.l.b16 %v2284
    %v2333 = vunpack.c.l.b16 %v2285
    %v2334 = vunpack.c.l.b16 %v2286
    %v2335 = vpack.c.b16 %v2320, %v2319
    %v2336 = vpack.c.b16 %v2322, %v2321
    %v2337 = vpack.c.b16 %v2324, %v2323
    %v2338 = vpack.c.b16 %v2326, %v2325
    %v2339 = vpack.c.b16 %v2328, %v2327
    %v2340 = vpack.c.b16 %v2330, %v2329
    %v2341 = vpack.c.b16 %v2332, %v2331
    %v2342 = vpack.c.b16 %v2334, %v2333
    %v2367 = vunpack.c.l.b16 %v2287
    %v2368 = vunpack.c.l.b16 %v2288
    %v2369 = vunpack.c.l.b16 %v2289
    %v2370 = vunpack.c.l.b16 %v2290
    %v2371 = vunpack.c.l.b16 %v2291
    %v2372 = vunpack.c.l.b16 %v2292
    %v2373 = vunpack.c.l.b16 %v2293
    %v2374 = vunpack.c.l.b16 %v2294
    %v2375 = vunpack.c.l.b16 %v2295
    %v2376 = vunpack.c.l.b16 %v2296
    %v2377 = vunpack.c.l.b16 %v2297
    %v2378 = vunpack.c.l.b16 %v2298
    %v2379 = vunpack.c.l.b16 %v2299
    %v2380 = vunpack.c.l.b16 %v2300
    %v2381 = vunpack.c.l.b16 %v2301
    %v2382 = vunpack.c.l.b16 %v2302
    %v2383 = vpack.c.b16 %v2368, %v2367
    %v2384 = vpack.c.b16 %v2370, %v2369
    %v2385 = vpack.c.b16 %v2372, %v2371
    %v2386 = vpack.c.b16 %v2374, %v2373
    %v2387 = vpack.c.b16 %v2376, %v2375
    %v2388 = vpack.c.b16 %v2378, %v2377
    %v2389 = vpack.c.b16 %v2380, %v2379
    %v2390 = vpack.c.b16 %v2382, %v2381
    %v2399 = vld [vmem:[#allocation13] sm:$0xf]
    %v2400 = vld [vmem:[#allocation13 + $0x4] sm:$0xf]
    %v2401 = vld [vmem:[#allocation13 + $0x8] sm:$0xf]
    %v2402 = vld [vmem:[#allocation13 + $0xc] sm:$0xf]
    %v2403 = vld [vmem:[#allocation13 + $0x10] sm:$0xf]
    %v2404 = vld [vmem:[#allocation13 + $0x14] sm:$0xf]
    %v2405 = vld [vmem:[#allocation13 + $0x18] sm:$0xf]
    %v2406 = vld [vmem:[#allocation13 + $0x1c] sm:$0xf]
    %v2407 = vld [vmem:[#allocation13 + $0x20] sm:$0xf]
    %v2408 = vld [vmem:[#allocation13 + $0x24] sm:$0xf]
    %v2409 = vld [vmem:[#allocation13 + $0x28] sm:$0xf]
    %v2410 = vld [vmem:[#allocation13 + $0x2c] sm:$0xf]
    %v2411 = vld [vmem:[#allocation13 + $0x30] sm:$0xf]
    %v2412 = vld [vmem:[#allocation13 + $0x34] sm:$0xf]
    %v2413 = vld [vmem:[#allocation13 + $0x38] sm:$0xf]
    %v2414 = vld [vmem:[#allocation13 + $0x3c] sm:$0xf]
    %v2415 = vld [vmem:[#allocation13 + $0x40] sm:$0xf]
    %v2416 = vld [vmem:[#allocation13 + $0x44] sm:$0xf]
    %v2417 = vld [vmem:[#allocation13 + $0x48] sm:$0xf]
    %v2418 = vld [vmem:[#allocation13 + $0x4c] sm:$0xf]
    %v2419 = vld [vmem:[#allocation13 + $0x50] sm:$0xf]
    %v2420 = vld [vmem:[#allocation13 + $0x54] sm:$0xf]
    %v2421 = vld [vmem:[#allocation13 + $0x58] sm:$0xf]
    %v2422 = vld [vmem:[#allocation13 + $0x5c] sm:$0xf]
    %v2423 = vld [vmem:[#allocation13 + $0x60] sm:$0xf]
    %v2424 = vld [vmem:[#allocation13 + $0x64] sm:$0xf]
    %v2425 = vld [vmem:[#allocation13 + $0x68] sm:$0xf]
    %v2426 = vld [vmem:[#allocation13 + $0x6c] sm:$0xf]
    %v2427 = vld [vmem:[#allocation13 + $0x70] sm:$0xf]
    %v2428 = vld [vmem:[#allocation13 + $0x74] sm:$0xf]
    %v2429 = vld [vmem:[#allocation13 + $0x78] sm:$0xf]
    %v2430 = vld [vmem:[#allocation13 + $0x7c] sm:$0xf]
    %v2431 = vld [vmem:[#allocation15] sm:$0x1]
    %v2433 = vperm.slane %v2431, 0
    %v2467 = vunpack.c.l.b16 %v2399
    %v2468 = vunpack.c.l.b16 %v2400
    %v2469 = vunpack.c.l.b16 %v2401
    %v2470 = vunpack.c.l.b16 %v2402
    %v2471 = vunpack.c.l.b16 %v2403
    %v2472 = vunpack.c.l.b16 %v2404
    %v2473 = vunpack.c.l.b16 %v2405
    %v2474 = vunpack.c.l.b16 %v2406
    %v2475 = vunpack.c.l.b16 %v2407
    %v2476 = vunpack.c.l.b16 %v2408
    %v2477 = vunpack.c.l.b16 %v2409
    %v2478 = vunpack.c.l.b16 %v2410
    %v2479 = vunpack.c.l.b16 %v2411
    %v2480 = vunpack.c.l.b16 %v2412
    %v2481 = vunpack.c.l.b16 %v2413
    %v2482 = vunpack.c.l.b16 %v2414
    %v2483 = vunpack.c.l.b16 %v2415
    %v2484 = vunpack.c.l.b16 %v2416
    %v2485 = vunpack.c.l.b16 %v2417
    %v2486 = vunpack.c.l.b16 %v2418
    %v2487 = vunpack.c.l.b16 %v2419
    %v2488 = vunpack.c.l.b16 %v2420
    %v2489 = vunpack.c.l.b16 %v2421
    %v2490 = vunpack.c.l.b16 %v2422
    %v2491 = vunpack.c.l.b16 %v2423
    %v2492 = vunpack.c.l.b16 %v2424
    %v2493 = vunpack.c.l.b16 %v2425
    %v2494 = vunpack.c.l.b16 %v2426
    %v2495 = vunpack.c.l.b16 %v2427
    %v2496 = vunpack.c.l.b16 %v2428
    %v2497 = vunpack.c.l.b16 %v2429
    %v2498 = vunpack.c.l.b16 %v2430
    %v2499 = vpack.c.b16 %v2468, %v2467
    %v2500 = vpack.c.b16 %v2470, %v2469
    %v2501 = vpack.c.b16 %v2472, %v2471
    %v2502 = vpack.c.b16 %v2474, %v2473
    %v2503 = vpack.c.b16 %v2476, %v2475
    %v2504 = vpack.c.b16 %v2478, %v2477
    %v2505 = vpack.c.b16 %v2480, %v2479
    %v2506 = vpack.c.b16 %v2482, %v2481
    %v2507 = vpack.c.b16 %v2484, %v2483
    %v2508 = vpack.c.b16 %v2486, %v2485
    %v2509 = vpack.c.b16 %v2488, %v2487
    %v2510 = vpack.c.b16 %v2490, %v2489
    %v2511 = vpack.c.b16 %v2492, %v2491
    %v2512 = vpack.c.b16 %v2494, %v2493
    %v2513 = vpack.c.b16 %v2496, %v2495
    %v2514 = vpack.c.b16 %v2498, %v2497
    %2531 = vmatpush.bf16.msra.mxu0 %v2506
    %2532 = vmatpush.bf16.msra.mxu0 %v2505
    %2533 = vmatpush.bf16.msra.mxu0 %v2504
    %2534 = vmatpush.bf16.msra.mxu0 %v2503
    %2535 = vmatpush.bf16.msra.mxu0 %v2502
    %2536 = vmatpush.bf16.msra.mxu0 %v2501
    %2537 = vmatpush.bf16.msra.mxu0 %v2500
    %2538 = vmatpush.bf16.msra.mxu0 %v2499
    %2539 = vmatmul.bf16.gmra.mxu0 %v2207
    %v2540 = vpop.f32.mrf.mxu0
    %v2541 = vadd.f32 %v2433, %v2540
    %v2542 = vpop.f32.mrf.mxu0
    %v2543 = vadd.f32 %v2433, %v2542
    %2544 = vmatmul.bf16.gmra.mxu0 %v2208
    %v2545 = vpop.f32.mrf.mxu0
    %v2546 = vadd.f32 %v2433, %v2545
    %v2547 = vpop.f32.mrf.mxu0
    %v2548 = vadd.f32 %v2433, %v2547
    %2549 = vmatmul.bf16.gmra.mxu0 %v2209
    %v2550 = vpop.f32.mrf.mxu0
    %v2551 = vadd.f32 %v2433, %v2550
    %v2552 = vpop.f32.mrf.mxu0
    %v2553 = vadd.f32 %v2433, %v2552
    %2554 = vmatmul.bf16.gmra.mxu0 %v2210
    %v2555 = vpop.f32.mrf.mxu0
    %v2556 = vadd.f32 %v2433, %v2555
    %v2557 = vpop.f32.mrf.mxu0
    %v2558 = vadd.f32 %v2433, %v2557
    %2559 = vmatmul.bf16.gmra.mxu0 %v2211
    %v2560 = vpop.f32.mrf.mxu0
    %v2561 = vadd.f32 %v2433, %v2560
    %v2562 = vpop.f32.mrf.mxu0
    %v2563 = vadd.f32 %v2433, %v2562
    %2564 = vmatmul.bf16.gmra.mxu0 %v2212
    %v2565 = vpop.f32.mrf.mxu0
    %v2566 = vadd.f32 %v2433, %v2565
    %v2567 = vpop.f32.mrf.mxu0
    %v2568 = vadd.f32 %v2433, %v2567
    %2569 = vmatmul.bf16.gmra.mxu0 %v2213
    %v2570 = vpop.f32.mrf.mxu0
    %v2571 = vadd.f32 %v2433, %v2570
    %v2572 = vpop.f32.mrf.mxu0
    %v2573 = vadd.f32 %v2433, %v2572
    %2574 = vmatmul.bf16.gmra.mxu0 %v2214
    %v2575 = vpop.f32.mrf.mxu0
    %v2576 = vadd.f32 %v2433, %v2575
    %v2577 = vpop.f32.mrf.mxu0
    %v2578 = vadd.f32 %v2433, %v2577
    %2579 = vdwg.mxu0
    %2580 = vmatpush.bf16.msra.mxu0 %v2514
    %2581 = vmatpush.bf16.msra.mxu0 %v2513
    %2582 = vmatpush.bf16.msra.mxu0 %v2512
    %2583 = vmatpush.bf16.msra.mxu0 %v2511
    %2584 = vmatpush.bf16.msra.mxu0 %v2510
    %2585 = vmatpush.bf16.msra.mxu0 %v2509
    %2586 = vmatpush.bf16.msra.mxu0 %v2508
    %2587 = vmatpush.bf16.msra.mxu0 %v2507
    %2588 = vmatmul.bf16.gmra.mxu0 %v2255
    %v2589 = vpop.f32.mrf.mxu0
    %v2590 = vadd.f32 %v2541, %v2589
    %v2591 = vpop.f32.mrf.mxu0
    %v2592 = vadd.f32 %v2543, %v2591
    %2593 = vmatmul.bf16.gmra.mxu0 %v2256
    %v2594 = vpop.f32.mrf.mxu0
    %v2595 = vadd.f32 %v2546, %v2594
    %v2596 = vpop.f32.mrf.mxu0
    %v2597 = vadd.f32 %v2548, %v2596
    %2598 = vmatmul.bf16.gmra.mxu0 %v2257
    %v2599 = vpop.f32.mrf.mxu0
    %v2600 = vadd.f32 %v2551, %v2599
    %v2601 = vpop.f32.mrf.mxu0
    %v2602 = vadd.f32 %v2553, %v2601
    %2603 = vmatmul.bf16.gmra.mxu0 %v2258
    %v2604 = vpop.f32.mrf.mxu0
    %v2605 = vadd.f32 %v2556, %v2604
    %v2606 = vpop.f32.mrf.mxu0
    %v2607 = vadd.f32 %v2558, %v2606
    %2608 = vmatmul.bf16.gmra.mxu0 %v2259
    %v2609 = vpop.f32.mrf.mxu0
    %v2610 = vadd.f32 %v2561, %v2609
    %v2611 = vpop.f32.mrf.mxu0
    %v2612 = vadd.f32 %v2563, %v2611
    %2613 = vmatmul.bf16.gmra.mxu0 %v2260
    %v2614 = vpop.f32.mrf.mxu0
    %v2615 = vadd.f32 %v2566, %v2614
    %v2616 = vpop.f32.mrf.mxu0
    %v2617 = vadd.f32 %v2568, %v2616
    %2618 = vmatmul.bf16.gmra.mxu0 %v2261
    %v2619 = vpop.f32.mrf.mxu0
    %v2620 = vadd.f32 %v2571, %v2619
    %v2621 = vpop.f32.mrf.mxu0
    %v2622 = vadd.f32 %v2573, %v2621
    %2623 = vmatmul.bf16.gmra.mxu0 %v2262
    %v2624 = vpop.f32.mrf.mxu0
    %v2625 = vadd.f32 %v2576, %v2624
    %v2626 = vpop.f32.mrf.mxu0
    %v2627 = vadd.f32 %v2578, %v2626
    %2628 = vdwg.mxu0
    %v2629 = vld [vmem:[#allocation16] sm:$0xf]
    %v2630 = vld [vmem:[#allocation16 + $0x4] sm:$0xf]
    %v2631 = vld [vmem:[#allocation16 + $0x8] sm:$0xf]
    %v2632 = vld [vmem:[#allocation16 + $0xc] sm:$0xf]
    %v2633 = vld [vmem:[#allocation16 + $0x10] sm:$0xf]
    %v2634 = vld [vmem:[#allocation16 + $0x14] sm:$0xf]
    %v2635 = vld [vmem:[#allocation16 + $0x18] sm:$0xf]
    %v2636 = vld [vmem:[#allocation16 + $0x1c] sm:$0xf]
    %v2637 = vld [vmem:[#allocation16 + $0x20] sm:$0xf]
    %v2638 = vld [vmem:[#allocation16 + $0x24] sm:$0xf]
    %v2639 = vld [vmem:[#allocation16 + $0x28] sm:$0xf]
    %v2640 = vld [vmem:[#allocation16 + $0x2c] sm:$0xf]
    %v2641 = vld [vmem:[#allocation16 + $0x30] sm:$0xf]
    %v2642 = vld [vmem:[#allocation16 + $0x34] sm:$0xf]
    %v2643 = vld [vmem:[#allocation16 + $0x38] sm:$0xf]
    %v2644 = vld [vmem:[#allocation16 + $0x3c] sm:$0xf]
    %v2645 = vld [vmem:[#allocation16 + $0x40] sm:$0xf]
    %v2646 = vld [vmem:[#allocation16 + $0x44] sm:$0xf]
    %v2647 = vld [vmem:[#allocation16 + $0x48] sm:$0xf]
    %v2648 = vld [vmem:[#allocation16 + $0x4c] sm:$0xf]
    %v2649 = vld [vmem:[#allocation16 + $0x50] sm:$0xf]
    %v2650 = vld [vmem:[#allocation16 + $0x54] sm:$0xf]
    %v2651 = vld [vmem:[#allocation16 + $0x58] sm:$0xf]
    %v2652 = vld [vmem:[#allocation16 + $0x5c] sm:$0xf]
    %v2653 = vld [vmem:[#allocation16 + $0x60] sm:$0xf]
    %v2654 = vld [vmem:[#allocation16 + $0x64] sm:$0xf]
    %v2655 = vld [vmem:[#allocation16 + $0x68] sm:$0xf]
    %v2656 = vld [vmem:[#allocation16 + $0x6c] sm:$0xf]
    %v2657 = vld [vmem:[#allocation16 + $0x70] sm:$0xf]
    %v2658 = vld [vmem:[#allocation16 + $0x74] sm:$0xf]
    %v2659 = vld [vmem:[#allocation16 + $0x78] sm:$0xf]
    %v2660 = vld [vmem:[#allocation16 + $0x7c] sm:$0xf]
    %v2661 = vld [vmem:[#allocation18] sm:$0x1]
    %v2663 = vperm.slane %v2661, 0
    %v2697 = vunpack.c.l.b16 %v2629
    %v2698 = vunpack.c.l.b16 %v2630
    %v2699 = vunpack.c.l.b16 %v2631
    %v2700 = vunpack.c.l.b16 %v2632
    %v2701 = vunpack.c.l.b16 %v2633
    %v2702 = vunpack.c.l.b16 %v2634
    %v2703 = vunpack.c.l.b16 %v2635
    %v2704 = vunpack.c.l.b16 %v2636
    %v2705 = vunpack.c.l.b16 %v2637
    %v2706 = vunpack.c.l.b16 %v2638
    %v2707 = vunpack.c.l.b16 %v2639
    %v2708 = vunpack.c.l.b16 %v2640
    %v2709 = vunpack.c.l.b16 %v2641
    %v2710 = vunpack.c.l.b16 %v2642
    %v2711 = vunpack.c.l.b16 %v2643
    %v2712 = vunpack.c.l.b16 %v2644
    %v2713 = vunpack.c.l.b16 %v2645
    %v2714 = vunpack.c.l.b16 %v2646
    %v2715 = vunpack.c.l.b16 %v2647
    %v2716 = vunpack.c.l.b16 %v2648
    %v2717 = vunpack.c.l.b16 %v2649
    %v2718 = vunpack.c.l.b16 %v2650
    %v2719 = vunpack.c.l.b16 %v2651
    %v2720 = vunpack.c.l.b16 %v2652
    %v2721 = vunpack.c.l.b16 %v2653
    %v2722 = vunpack.c.l.b16 %v2654
    %v2723 = vunpack.c.l.b16 %v2655
    %v2724 = vunpack.c.l.b16 %v2656
    %v2725 = vunpack.c.l.b16 %v2657
    %v2726 = vunpack.c.l.b16 %v2658
    %v2727 = vunpack.c.l.b16 %v2659
    %v2728 = vunpack.c.l.b16 %v2660
    %v2729 = vpack.c.b16 %v2698, %v2697
    %v2730 = vpack.c.b16 %v2700, %v2699
    %v2731 = vpack.c.b16 %v2702, %v2701
    %v2732 = vpack.c.b16 %v2704, %v2703
    %v2733 = vpack.c.b16 %v2706, %v2705
    %v2734 = vpack.c.b16 %v2708, %v2707
    %v2735 = vpack.c.b16 %v2710, %v2709
    %v2736 = vpack.c.b16 %v2712, %v2711
    %v2737 = vpack.c.b16 %v2714, %v2713
    %v2738 = vpack.c.b16 %v2716, %v2715
    %v2739 = vpack.c.b16 %v2718, %v2717
    %v2740 = vpack.c.b16 %v2720, %v2719
    %v2741 = vpack.c.b16 %v2722, %v2721
    %v2742 = vpack.c.b16 %v2724, %v2723
    %v2743 = vpack.c.b16 %v2726, %v2725
    %v2744 = vpack.c.b16 %v2728, %v2727
    %2761 = vmatpush.bf16.msra.mxu0 %v2736
    %2762 = vmatpush.bf16.msra.mxu0 %v2735
    %2763 = vmatpush.bf16.msra.mxu0 %v2734
    %2764 = vmatpush.bf16.msra.mxu0 %v2733
    %2765 = vmatpush.bf16.msra.mxu0 %v2732
    %2766 = vmatpush.bf16.msra.mxu0 %v2731
    %2767 = vmatpush.bf16.msra.mxu0 %v2730
    %2768 = vmatpush.bf16.msra.mxu0 %v2729
    %2769 = vmatmul.bf16.gmra.mxu0 %v2335
    %v2770 = vpop.f32.mrf.mxu0
    %v2771 = vadd.f32 %v2663, %v2770
    %v2772 = vpop.f32.mrf.mxu0
    %v2773 = vadd.f32 %v2663, %v2772
    %2774 = vmatmul.bf16.gmra.mxu0 %v2336
    %v2775 = vpop.f32.mrf.mxu0
    %v2776 = vadd.f32 %v2663, %v2775
    %v2777 = vpop.f32.mrf.mxu0
    %v2778 = vadd.f32 %v2663, %v2777
    %2779 = vmatmul.bf16.gmra.mxu0 %v2337
    %v2780 = vpop.f32.mrf.mxu0
    %v2781 = vadd.f32 %v2663, %v2780
    %v2782 = vpop.f32.mrf.mxu0
    %v2783 = vadd.f32 %v2663, %v2782
    %2784 = vmatmul.bf16.gmra.mxu0 %v2338
    %v2785 = vpop.f32.mrf.mxu0
    %v2786 = vadd.f32 %v2663, %v2785
    %v2787 = vpop.f32.mrf.mxu0
    %v2788 = vadd.f32 %v2663, %v2787
    %2789 = vmatmul.bf16.gmra.mxu0 %v2339
    %v2790 = vpop.f32.mrf.mxu0
    %v2791 = vadd.f32 %v2663, %v2790
    %v2792 = vpop.f32.mrf.mxu0
    %v2793 = vadd.f32 %v2663, %v2792
    %2794 = vmatmul.bf16.gmra.mxu0 %v2340
    %v2795 = vpop.f32.mrf.mxu0
    %v2796 = vadd.f32 %v2663, %v2795
    %v2797 = vpop.f32.mrf.mxu0
    %v2798 = vadd.f32 %v2663, %v2797
    %2799 = vmatmul.bf16.gmra.mxu0 %v2341
    %v2800 = vpop.f32.mrf.mxu0
    %v2801 = vadd.f32 %v2663, %v2800
    %v2802 = vpop.f32.mrf.mxu0
    %v2803 = vadd.f32 %v2663, %v2802
    %2804 = vmatmul.bf16.gmra.mxu0 %v2342
    %v2805 = vpop.f32.mrf.mxu0
    %v2806 = vadd.f32 %v2663, %v2805
    %v2807 = vpop.f32.mrf.mxu0
    %v2808 = vadd.f32 %v2663, %v2807
    %2809 = vdwg.mxu0
    %2810 = vmatpush.bf16.msra.mxu0 %v2744
    %2811 = vmatpush.bf16.msra.mxu0 %v2743
    %2812 = vmatpush.bf16.msra.mxu0 %v2742
    %2813 = vmatpush.bf16.msra.mxu0 %v2741
    %2814 = vmatpush.bf16.msra.mxu0 %v2740
    %2815 = vmatpush.bf16.msra.mxu0 %v2739
    %2816 = vmatpush.bf16.msra.mxu0 %v2738
    %2817 = vmatpush.bf16.msra.mxu0 %v2737
    %2818 = vmatmul.bf16.gmra.mxu0 %v2383
    %v2819 = vpop.f32.mrf.mxu0
    %v2820 = vadd.f32 %v2771, %v2819
    %v2821 = vpop.f32.mrf.mxu0
    %v2822 = vadd.f32 %v2773, %v2821
    %2823 = vmatmul.bf16.gmra.mxu0 %v2384
    %v2824 = vpop.f32.mrf.mxu0
    %v2825 = vadd.f32 %v2776, %v2824
    %v2826 = vpop.f32.mrf.mxu0
    %v2827 = vadd.f32 %v2778, %v2826
    %2828 = vmatmul.bf16.gmra.mxu0 %v2385
    %v2829 = vpop.f32.mrf.mxu0
    %v2830 = vadd.f32 %v2781, %v2829
    %v2831 = vpop.f32.mrf.mxu0
    %v2832 = vadd.f32 %v2783, %v2831
    %2833 = vmatmul.bf16.gmra.mxu0 %v2386
    %v2834 = vpop.f32.mrf.mxu0
    %v2835 = vadd.f32 %v2786, %v2834
    %v2836 = vpop.f32.mrf.mxu0
    %v2837 = vadd.f32 %v2788, %v2836
    %2838 = vmatmul.bf16.gmra.mxu0 %v2387
    %v2839 = vpop.f32.mrf.mxu0
    %v2840 = vadd.f32 %v2791, %v2839
    %v2841 = vpop.f32.mrf.mxu0
    %v2842 = vadd.f32 %v2793, %v2841
    %2843 = vmatmul.bf16.gmra.mxu0 %v2388
    %v2844 = vpop.f32.mrf.mxu0
    %v2845 = vadd.f32 %v2796, %v2844
    %v2846 = vpop.f32.mrf.mxu0
    %v2847 = vadd.f32 %v2798, %v2846
    %2848 = vmatmul.bf16.gmra.mxu0 %v2389
    %v2849 = vpop.f32.mrf.mxu0
    %v2850 = vadd.f32 %v2801, %v2849
    %v2851 = vpop.f32.mrf.mxu0
    %v2852 = vadd.f32 %v2803, %v2851
    %2853 = vmatmul.bf16.gmra.mxu0 %v2390
    %v2854 = vpop.f32.mrf.mxu0
    %v2855 = vadd.f32 %v2806, %v2854
    %v2856 = vpop.f32.mrf.mxu0
    %v2857 = vadd.f32 %v2808, %v2856
    %2858 = vdwg.mxu0
    %v2859 = vmax.f32 %v2590, 0.0
    %v2860 = vmax.f32 %v2592, 0.0
    %v2861 = vmax.f32 %v2595, 0.0
    %v2862 = vmax.f32 %v2597, 0.0
    %v2863 = vmax.f32 %v2600, 0.0
    %v2864 = vmax.f32 %v2602, 0.0
    %v2865 = vmax.f32 %v2605, 0.0
    %v2866 = vmax.f32 %v2607, 0.0
    %v2867 = vmax.f32 %v2610, 0.0
    %v2868 = vmax.f32 %v2612, 0.0
    %v2869 = vmax.f32 %v2615, 0.0
    %v2870 = vmax.f32 %v2617, 0.0
    %v2871 = vmax.f32 %v2620, 0.0
    %v2872 = vmax.f32 %v2622, 0.0
    %v2873 = vmax.f32 %v2625, 0.0
    %v2874 = vmax.f32 %v2627, 0.0
    %v2875 = vmax.f32 %v2820, 0.0
    %v2876 = vmax.f32 %v2822, 0.0
    %v2877 = vmax.f32 %v2825, 0.0
    %v2878 = vmax.f32 %v2827, 0.0
    %v2879 = vmax.f32 %v2830, 0.0
    %v2880 = vmax.f32 %v2832, 0.0
    %v2881 = vmax.f32 %v2835, 0.0
    %v2882 = vmax.f32 %v2837, 0.0
    %v2883 = vmax.f32 %v2840, 0.0
    %v2884 = vmax.f32 %v2842, 0.0
    %v2885 = vmax.f32 %v2845, 0.0
    %v2886 = vmax.f32 %v2847, 0.0
    %v2887 = vmax.f32 %v2850, 0.0
    %v2888 = vmax.f32 %v2852, 0.0
    %v2889 = vmax.f32 %v2855, 0.0
    %v2890 = vmax.f32 %v2857, 0.0
    %v2891 = vmul.f32 %v2859, %v2859
    %v2892 = vmul.f32 %v2860, %v2860
    %v2893 = vmul.f32 %v2861, %v2861
    %v2894 = vmul.f32 %v2862, %v2862
    %v2895 = vmul.f32 %v2863, %v2863
    %v2896 = vmul.f32 %v2864, %v2864
    %v2897 = vmul.f32 %v2865, %v2865
    %v2898 = vmul.f32 %v2866, %v2866
    %v2899 = vmul.f32 %v2867, %v2867
    %v2900 = vmul.f32 %v2868, %v2868
    %v2901 = vmul.f32 %v2869, %v2869
    %v2902 = vmul.f32 %v2870, %v2870
    %v2903 = vmul.f32 %v2871, %v2871
    %v2904 = vmul.f32 %v2872, %v2872
    %v2905 = vmul.f32 %v2873, %v2873
    %v2906 = vmul.f32 %v2874, %v2874
    %2907 = vadd.xlane.f32.xlu0 %v2891
    %v2908 = vpop.xlane.xlu0 %2907
    %2909 = vadd.xlane.f32.xlu0 %v2892
    %v2910 = vpop.xlane.xlu0 %2909
    %2911 = vadd.xlane.f32.xlu0 %v2893
    %v2912 = vpop.xlane.xlu0 %2911
    %2913 = vadd.xlane.f32.xlu0 %v2894
    %v2914 = vpop.xlane.xlu0 %2913
    %2915 = vadd.xlane.f32.xlu0 %v2895
    %v2916 = vpop.xlane.xlu0 %2915
    %2917 = vadd.xlane.f32.xlu0 %v2896
    %v2918 = vpop.xlane.xlu0 %2917
    %2919 = vadd.xlane.f32.xlu0 %v2897
    %v2920 = vpop.xlane.xlu0 %2919
    %2921 = vadd.xlane.f32.xlu0 %v2898
    %v2922 = vpop.xlane.xlu0 %2921
    %2923 = vadd.xlane.f32.xlu0 %v2899
    %v2924 = vpop.xlane.xlu0 %2923
    %2925 = vadd.xlane.f32.xlu0 %v2900
    %v2926 = vpop.xlane.xlu0 %2925
    %2927 = vadd.xlane.f32.xlu0 %v2901
    %v2928 = vpop.xlane.xlu0 %2927
    %2929 = vadd.xlane.f32.xlu0 %v2902
    %v2930 = vpop.xlane.xlu0 %2929
    %2931 = vadd.xlane.f32.xlu0 %v2903
    %v2932 = vpop.xlane.xlu0 %2931
    %2933 = vadd.xlane.f32.xlu0 %v2904
    %v2934 = vpop.xlane.xlu0 %2933
    %2935 = vadd.xlane.f32.xlu0 %v2905
    %v2936 = vpop.xlane.xlu0 %2935
    %2937 = vadd.xlane.f32.xlu0 %v2906
    %v2938 = vpop.xlane.xlu0 %2937
    %v2939 = vadd.f32 %v2908, 1e-12
    %v2940 = vadd.f32 %v2910, 1e-12
    %v2941 = vadd.f32 %v2912, 1e-12
    %v2942 = vadd.f32 %v2914, 1e-12
    %v2943 = vadd.f32 %v2916, 1e-12
    %v2944 = vadd.f32 %v2918, 1e-12
    %v2945 = vadd.f32 %v2920, 1e-12
    %v2946 = vadd.f32 %v2922, 1e-12
    %v2947 = vadd.f32 %v2924, 1e-12
    %v2948 = vadd.f32 %v2926, 1e-12
    %v2949 = vadd.f32 %v2928, 1e-12
    %v2950 = vadd.f32 %v2930, 1e-12
    %v2951 = vadd.f32 %v2932, 1e-12
    %v2952 = vadd.f32 %v2934, 1e-12
    %v2953 = vadd.f32 %v2936, 1e-12
    %v2954 = vadd.f32 %v2938, 1e-12
    %v2955 = vrsqrt.pop %v2939
    %v2956 = vmul.f32 %v2955, %v2939
    %v2957 = vmul.f32 %v2956, %v2955
    %v2958 = vmul.f32 0.5, %v2957
    %v2959 = vsub.f32 1.5, %v2958
    %v2960 = vmul.f32 %v2955, %v2959
    %vm2961 = vweird.f32 %v2939
    %vm2962 = vweird.f32 %v2955
    %vm2963 = vmor %vm2961, %vm2962
    %v2964 = vsel %vm2963, %v2955, %v2960
    %v2965 = vrsqrt.pop %v2940
    %v2966 = vmul.f32 %v2965, %v2940
    %v2967 = vmul.f32 %v2966, %v2965
    %v2968 = vmul.f32 0.5, %v2967
    %v2969 = vsub.f32 1.5, %v2968
    %v2970 = vmul.f32 %v2965, %v2969
    %vm2971 = vweird.f32 %v2940
    %vm2972 = vweird.f32 %v2965
    %vm2973 = vmor %vm2971, %vm2972
    %v2974 = vsel %vm2973, %v2965, %v2970
    %v2975 = vrsqrt.pop %v2941
    %v2976 = vmul.f32 %v2975, %v2941
    %v2977 = vmul.f32 %v2976, %v2975
    %v2978 = vmul.f32 0.5, %v2977
    %v2979 = vsub.f32 1.5, %v2978
    %v2980 = vmul.f32 %v2975, %v2979
    %vm2981 = vweird.f32 %v2941
    %vm2982 = vweird.f32 %v2975
    %vm2983 = vmor %vm2981, %vm2982
    %v2984 = vsel %vm2983, %v2975, %v2980
    %v2985 = vrsqrt.pop %v2942
    %v2986 = vmul.f32 %v2985, %v2942
    %v2987 = vmul.f32 %v2986, %v2985
    %v2988 = vmul.f32 0.5, %v2987
    %v2989 = vsub.f32 1.5, %v2988
    %v2990 = vmul.f32 %v2985, %v2989
    %vm2991 = vweird.f32 %v2942
    %vm2992 = vweird.f32 %v2985
    %vm2993 = vmor %vm2991, %vm2992
    %v2994 = vsel %vm2993, %v2985, %v2990
    %v2995 = vrsqrt.pop %v2943
    %v2996 = vmul.f32 %v2995, %v2943
    %v2997 = vmul.f32 %v2996, %v2995
    %v2998 = vmul.f32 0.5, %v2997
    %v2999 = vsub.f32 1.5, %v2998
    %v3000 = vmul.f32 %v2995, %v2999
    %vm3001 = vweird.f32 %v2943
    %vm3002 = vweird.f32 %v2995
    %vm3003 = vmor %vm3001, %vm3002
    %v3004 = vsel %vm3003, %v2995, %v3000
    %v3005 = vrsqrt.pop %v2944
    %v3006 = vmul.f32 %v3005, %v2944
    %v3007 = vmul.f32 %v3006, %v3005
    %v3008 = vmul.f32 0.5, %v3007
    %v3009 = vsub.f32 1.5, %v3008
    %v3010 = vmul.f32 %v3005, %v3009
    %vm3011 = vweird.f32 %v2944
    %vm3012 = vweird.f32 %v3005
    %vm3013 = vmor %vm3011, %vm3012
    %v3014 = vsel %vm3013, %v3005, %v3010
    %v3015 = vrsqrt.pop %v2945
    %v3016 = vmul.f32 %v3015, %v2945
    %v3017 = vmul.f32 %v3016, %v3015
    %v3018 = vmul.f32 0.5, %v3017
    %v3019 = vsub.f32 1.5, %v3018
    %v3020 = vmul.f32 %v3015, %v3019
    %vm3021 = vweird.f32 %v2945
    %vm3022 = vweird.f32 %v3015
    %vm3023 = vmor %vm3021, %vm3022
    %v3024 = vsel %vm3023, %v3015, %v3020
    %v3025 = vrsqrt.pop %v2946
    %v3026 = vmul.f32 %v3025, %v2946
    %v3027 = vmul.f32 %v3026, %v3025
    %v3028 = vmul.f32 0.5, %v3027
    %v3029 = vsub.f32 1.5, %v3028
    %v3030 = vmul.f32 %v3025, %v3029
    %vm3031 = vweird.f32 %v2946
    %vm3032 = vweird.f32 %v3025
    %vm3033 = vmor %vm3031, %vm3032
    %v3034 = vsel %vm3033, %v3025, %v3030
    %v3035 = vrsqrt.pop %v2947
    %v3036 = vmul.f32 %v3035, %v2947
    %v3037 = vmul.f32 %v3036, %v3035
    %v3038 = vmul.f32 0.5, %v3037
    %v3039 = vsub.f32 1.5, %v3038
    %v3040 = vmul.f32 %v3035, %v3039
    %vm3041 = vweird.f32 %v2947
    %vm3042 = vweird.f32 %v3035
    %vm3043 = vmor %vm3041, %vm3042
    %v3044 = vsel %vm3043, %v3035, %v3040
    %v3045 = vrsqrt.pop %v2948
    %v3046 = vmul.f32 %v3045, %v2948
    %v3047 = vmul.f32 %v3046, %v3045
    %v3048 = vmul.f32 0.5, %v3047
    %v3049 = vsub.f32 1.5, %v3048
    %v3050 = vmul.f32 %v3045, %v3049
    %vm3051 = vweird.f32 %v2948
    %vm3052 = vweird.f32 %v3045
    %vm3053 = vmor %vm3051, %vm3052
    %v3054 = vsel %vm3053, %v3045, %v3050
    %v3055 = vrsqrt.pop %v2949
    %v3056 = vmul.f32 %v3055, %v2949
    %v3057 = vmul.f32 %v3056, %v3055
    %v3058 = vmul.f32 0.5, %v3057
    %v3059 = vsub.f32 1.5, %v3058
    %v3060 = vmul.f32 %v3055, %v3059
    %vm3061 = vweird.f32 %v2949
    %vm3062 = vweird.f32 %v3055
    %vm3063 = vmor %vm3061, %vm3062
    %v3064 = vsel %vm3063, %v3055, %v3060
    %v3065 = vrsqrt.pop %v2950
    %v3066 = vmul.f32 %v3065, %v2950
    %v3067 = vmul.f32 %v3066, %v3065
    %v3068 = vmul.f32 0.5, %v3067
    %v3069 = vsub.f32 1.5, %v3068
    %v3070 = vmul.f32 %v3065, %v3069
    %vm3071 = vweird.f32 %v2950
    %vm3072 = vweird.f32 %v3065
    %vm3073 = vmor %vm3071, %vm3072
    %v3074 = vsel %vm3073, %v3065, %v3070
    %v3075 = vrsqrt.pop %v2951
    %v3076 = vmul.f32 %v3075, %v2951
    %v3077 = vmul.f32 %v3076, %v3075
    %v3078 = vmul.f32 0.5, %v3077
    %v3079 = vsub.f32 1.5, %v3078
    %v3080 = vmul.f32 %v3075, %v3079
    %vm3081 = vweird.f32 %v2951
    %vm3082 = vweird.f32 %v3075
    %vm3083 = vmor %vm3081, %vm3082
    %v3084 = vsel %vm3083, %v3075, %v3080
    %v3085 = vrsqrt.pop %v2952
    %v3086 = vmul.f32 %v3085, %v2952
    %v3087 = vmul.f32 %v3086, %v3085
    %v3088 = vmul.f32 0.5, %v3087
    %v3089 = vsub.f32 1.5, %v3088
    %v3090 = vmul.f32 %v3085, %v3089
    %vm3091 = vweird.f32 %v2952
    %vm3092 = vweird.f32 %v3085
    %vm3093 = vmor %vm3091, %vm3092
    %v3094 = vsel %vm3093, %v3085, %v3090
    %v3095 = vrsqrt.pop %v2953
    %v3096 = vmul.f32 %v3095, %v2953
    %v3097 = vmul.f32 %v3096, %v3095
    %v3098 = vmul.f32 0.5, %v3097
    %v3099 = vsub.f32 1.5, %v3098
    %v3100 = vmul.f32 %v3095, %v3099
    %vm3101 = vweird.f32 %v2953
    %vm3102 = vweird.f32 %v3095
    %vm3103 = vmor %vm3101, %vm3102
    %v3104 = vsel %vm3103, %v3095, %v3100
    %v3105 = vrsqrt.pop %v2954
    %v3106 = vmul.f32 %v3105, %v2954
    %v3107 = vmul.f32 %v3106, %v3105
    %v3108 = vmul.f32 0.5, %v3107
    %v3109 = vsub.f32 1.5, %v3108
    %v3110 = vmul.f32 %v3105, %v3109
    %vm3111 = vweird.f32 %v2954
    %vm3112 = vweird.f32 %v3105
    %vm3113 = vmor %vm3111, %vm3112
    %v3114 = vsel %vm3113, %v3105, %v3110
    %v3115 = vmul.f32 %v2859, %v2964
    %v3116 = vmul.f32 %v2860, %v2974
    %v3117 = vmul.f32 %v2861, %v2984
    %v3118 = vmul.f32 %v2862, %v2994
    %v3119 = vmul.f32 %v2863, %v3004
    %v3120 = vmul.f32 %v2864, %v3014
    %v3121 = vmul.f32 %v2865, %v3024
    %v3122 = vmul.f32 %v2866, %v3034
    %v3123 = vmul.f32 %v2867, %v3044
    %v3124 = vmul.f32 %v2868, %v3054
    %v3125 = vmul.f32 %v2869, %v3064
    %v3126 = vmul.f32 %v2870, %v3074
    %v3127 = vmul.f32 %v2871, %v3084
    %v3128 = vmul.f32 %v2872, %v3094
    %v3129 = vmul.f32 %v2873, %v3104
    %v3130 = vmul.f32 %v2874, %v3114
    %v3131 = vmul.f32 %v2875, %v2875
    %v3132 = vmul.f32 %v2876, %v2876
    %v3133 = vmul.f32 %v2877, %v2877
    %v3134 = vmul.f32 %v2878, %v2878
    %v3135 = vmul.f32 %v2879, %v2879
    %v3136 = vmul.f32 %v2880, %v2880
    %v3137 = vmul.f32 %v2881, %v2881
    %v3138 = vmul.f32 %v2882, %v2882
    %v3139 = vmul.f32 %v2883, %v2883
    %v3140 = vmul.f32 %v2884, %v2884
    %v3141 = vmul.f32 %v2885, %v2885
    %v3142 = vmul.f32 %v2886, %v2886
    %v3143 = vmul.f32 %v2887, %v2887
    %v3144 = vmul.f32 %v2888, %v2888
    %v3145 = vmul.f32 %v2889, %v2889
    %v3146 = vmul.f32 %v2890, %v2890
    %3147 = vadd.xlane.f32.xlu0 %v3131
    %v3148 = vpop.xlane.xlu0 %3147
    %3149 = vadd.xlane.f32.xlu0 %v3132
    %v3150 = vpop.xlane.xlu0 %3149
    %3151 = vadd.xlane.f32.xlu0 %v3133
    %v3152 = vpop.xlane.xlu0 %3151
    %3153 = vadd.xlane.f32.xlu0 %v3134
    %v3154 = vpop.xlane.xlu0 %3153
    %3155 = vadd.xlane.f32.xlu0 %v3135
    %v3156 = vpop.xlane.xlu0 %3155
    %3157 = vadd.xlane.f32.xlu0 %v3136
    %v3158 = vpop.xlane.xlu0 %3157
    %3159 = vadd.xlane.f32.xlu0 %v3137
    %v3160 = vpop.xlane.xlu0 %3159
    %3161 = vadd.xlane.f32.xlu0 %v3138
    %v3162 = vpop.xlane.xlu0 %3161
    %3163 = vadd.xlane.f32.xlu0 %v3139
    %v3164 = vpop.xlane.xlu0 %3163
    %3165 = vadd.xlane.f32.xlu0 %v3140
    %v3166 = vpop.xlane.xlu0 %3165
    %3167 = vadd.xlane.f32.xlu0 %v3141
    %v3168 = vpop.xlane.xlu0 %3167
    %3169 = vadd.xlane.f32.xlu0 %v3142
    %v3170 = vpop.xlane.xlu0 %3169
    %3171 = vadd.xlane.f32.xlu0 %v3143
    %v3172 = vpop.xlane.xlu0 %3171
    %3173 = vadd.xlane.f32.xlu0 %v3144
    %v3174 = vpop.xlane.xlu0 %3173
    %3175 = vadd.xlane.f32.xlu0 %v3145
    %v3176 = vpop.xlane.xlu0 %3175
    %3177 = vadd.xlane.f32.xlu0 %v3146
    %v3178 = vpop.xlane.xlu0 %3177
    %v3179 = vadd.f32 %v3148, 1e-12
    %v3180 = vadd.f32 %v3150, 1e-12
    %v3181 = vadd.f32 %v3152, 1e-12
    %v3182 = vadd.f32 %v3154, 1e-12
    %v3183 = vadd.f32 %v3156, 1e-12
    %v3184 = vadd.f32 %v3158, 1e-12
    %v3185 = vadd.f32 %v3160, 1e-12
    %v3186 = vadd.f32 %v3162, 1e-12
    %v3187 = vadd.f32 %v3164, 1e-12
    %v3188 = vadd.f32 %v3166, 1e-12
    %v3189 = vadd.f32 %v3168, 1e-12
    %v3190 = vadd.f32 %v3170, 1e-12
    %v3191 = vadd.f32 %v3172, 1e-12
    %v3192 = vadd.f32 %v3174, 1e-12
    %v3193 = vadd.f32 %v3176, 1e-12
    %v3194 = vadd.f32 %v3178, 1e-12
    %v3195 = vrsqrt.pop %v3179
    %v3196 = vmul.f32 %v3195, %v3179
    %v3197 = vmul.f32 %v3196, %v3195
    %v3198 = vmul.f32 0.5, %v3197
    %v3199 = vsub.f32 1.5, %v3198
    %v3200 = vmul.f32 %v3195, %v3199
    %vm3201 = vweird.f32 %v3179
    %vm3202 = vweird.f32 %v3195
    %vm3203 = vmor %vm3201, %vm3202
    %v3204 = vsel %vm3203, %v3195, %v3200
    %v3205 = vrsqrt.pop %v3180
    %v3206 = vmul.f32 %v3205, %v3180
    %v3207 = vmul.f32 %v3206, %v3205
    %v3208 = vmul.f32 0.5, %v3207
    %v3209 = vsub.f32 1.5, %v3208
    %v3210 = vmul.f32 %v3205, %v3209
    %vm3211 = vweird.f32 %v3180
    %vm3212 = vweird.f32 %v3205
    %vm3213 = vmor %vm3211, %vm3212
    %v3214 = vsel %vm3213, %v3205, %v3210
    %v3215 = vrsqrt.pop %v3181
    %v3216 = vmul.f32 %v3215, %v3181
    %v3217 = vmul.f32 %v3216, %v3215
    %v3218 = vmul.f32 0.5, %v3217
    %v3219 = vsub.f32 1.5, %v3218
    %v3220 = vmul.f32 %v3215, %v3219
    %vm3221 = vweird.f32 %v3181
    %vm3222 = vweird.f32 %v3215
    %vm3223 = vmor %vm3221, %vm3222
    %v3224 = vsel %vm3223, %v3215, %v3220
    %v3225 = vrsqrt.pop %v3182
    %v3226 = vmul.f32 %v3225, %v3182
    %v3227 = vmul.f32 %v3226, %v3225
    %v3228 = vmul.f32 0.5, %v3227
    %v3229 = vsub.f32 1.5, %v3228
    %v3230 = vmul.f32 %v3225, %v3229
    %vm3231 = vweird.f32 %v3182
    %vm3232 = vweird.f32 %v3225
    %vm3233 = vmor %vm3231, %vm3232
    %v3234 = vsel %vm3233, %v3225, %v3230
    %v3235 = vrsqrt.pop %v3183
    %v3236 = vmul.f32 %v3235, %v3183
    %v3237 = vmul.f32 %v3236, %v3235
    %v3238 = vmul.f32 0.5, %v3237
    %v3239 = vsub.f32 1.5, %v3238
    %v3240 = vmul.f32 %v3235, %v3239
    %vm3241 = vweird.f32 %v3183
    %vm3242 = vweird.f32 %v3235
    %vm3243 = vmor %vm3241, %vm3242
    %v3244 = vsel %vm3243, %v3235, %v3240
    %v3245 = vrsqrt.pop %v3184
    %v3246 = vmul.f32 %v3245, %v3184
    %v3247 = vmul.f32 %v3246, %v3245
    %v3248 = vmul.f32 0.5, %v3247
    %v3249 = vsub.f32 1.5, %v3248
    %v3250 = vmul.f32 %v3245, %v3249
    %vm3251 = vweird.f32 %v3184
    %vm3252 = vweird.f32 %v3245
    %vm3253 = vmor %vm3251, %vm3252
    %v3254 = vsel %vm3253, %v3245, %v3250
    %v3255 = vrsqrt.pop %v3185
    %v3256 = vmul.f32 %v3255, %v3185
    %v3257 = vmul.f32 %v3256, %v3255
    %v3258 = vmul.f32 0.5, %v3257
    %v3259 = vsub.f32 1.5, %v3258
    %v3260 = vmul.f32 %v3255, %v3259
    %vm3261 = vweird.f32 %v3185
    %vm3262 = vweird.f32 %v3255
    %vm3263 = vmor %vm3261, %vm3262
    %v3264 = vsel %vm3263, %v3255, %v3260
    %v3265 = vrsqrt.pop %v3186
    %v3266 = vmul.f32 %v3265, %v3186
    %v3267 = vmul.f32 %v3266, %v3265
    %v3268 = vmul.f32 0.5, %v3267
    %v3269 = vsub.f32 1.5, %v3268
    %v3270 = vmul.f32 %v3265, %v3269
    %vm3271 = vweird.f32 %v3186
    %vm3272 = vweird.f32 %v3265
    %vm3273 = vmor %vm3271, %vm3272
    %v3274 = vsel %vm3273, %v3265, %v3270
    %v3275 = vrsqrt.pop %v3187
    %v3276 = vmul.f32 %v3275, %v3187
    %v3277 = vmul.f32 %v3276, %v3275
    %v3278 = vmul.f32 0.5, %v3277
    %v3279 = vsub.f32 1.5, %v3278
    %v3280 = vmul.f32 %v3275, %v3279
    %vm3281 = vweird.f32 %v3187
    %vm3282 = vweird.f32 %v3275
    %vm3283 = vmor %vm3281, %vm3282
    %v3284 = vsel %vm3283, %v3275, %v3280
    %v3285 = vrsqrt.pop %v3188
    %v3286 = vmul.f32 %v3285, %v3188
    %v3287 = vmul.f32 %v3286, %v3285
    %v3288 = vmul.f32 0.5, %v3287
    %v3289 = vsub.f32 1.5, %v3288
    %v3290 = vmul.f32 %v3285, %v3289
    %vm3291 = vweird.f32 %v3188
    %vm3292 = vweird.f32 %v3285
    %vm3293 = vmor %vm3291, %vm3292
    %v3294 = vsel %vm3293, %v3285, %v3290
    %v3295 = vrsqrt.pop %v3189
    %v3296 = vmul.f32 %v3295, %v3189
    %v3297 = vmul.f32 %v3296, %v3295
    %v3298 = vmul.f32 0.5, %v3297
    %v3299 = vsub.f32 1.5, %v3298
    %v3300 = vmul.f32 %v3295, %v3299
    %vm3301 = vweird.f32 %v3189
    %vm3302 = vweird.f32 %v3295
    %vm3303 = vmor %vm3301, %vm3302
    %v3304 = vsel %vm3303, %v3295, %v3300
    %v3305 = vrsqrt.pop %v3190
    %v3306 = vmul.f32 %v3305, %v3190
    %v3307 = vmul.f32 %v3306, %v3305
    %v3308 = vmul.f32 0.5, %v3307
    %v3309 = vsub.f32 1.5, %v3308
    %v3310 = vmul.f32 %v3305, %v3309
    %vm3311 = vweird.f32 %v3190
    %vm3312 = vweird.f32 %v3305
    %vm3313 = vmor %vm3311, %vm3312
    %v3314 = vsel %vm3313, %v3305, %v3310
    %v3315 = vrsqrt.pop %v3191
    %v3316 = vmul.f32 %v3315, %v3191
    %v3317 = vmul.f32 %v3316, %v3315
    %v3318 = vmul.f32 0.5, %v3317
    %v3319 = vsub.f32 1.5, %v3318
    %v3320 = vmul.f32 %v3315, %v3319
    %vm3321 = vweird.f32 %v3191
    %vm3322 = vweird.f32 %v3315
    %vm3323 = vmor %vm3321, %vm3322
    %v3324 = vsel %vm3323, %v3315, %v3320
    %v3325 = vrsqrt.pop %v3192
    %v3326 = vmul.f32 %v3325, %v3192
    %v3327 = vmul.f32 %v3326, %v3325
    %v3328 = vmul.f32 0.5, %v3327
    %v3329 = vsub.f32 1.5, %v3328
    %v3330 = vmul.f32 %v3325, %v3329
    %vm3331 = vweird.f32 %v3192
    %vm3332 = vweird.f32 %v3325
    %vm3333 = vmor %vm3331, %vm3332
    %v3334 = vsel %vm3333, %v3325, %v3330
    %v3335 = vrsqrt.pop %v3193
    %v3336 = vmul.f32 %v3335, %v3193
    %v3337 = vmul.f32 %v3336, %v3335
    %v3338 = vmul.f32 0.5, %v3337
    %v3339 = vsub.f32 1.5, %v3338
    %v3340 = vmul.f32 %v3335, %v3339
    %vm3341 = vweird.f32 %v3193
    %vm3342 = vweird.f32 %v3335
    %vm3343 = vmor %vm3341, %vm3342
    %v3344 = vsel %vm3343, %v3335, %v3340
    %v3345 = vrsqrt.pop %v3194
    %v3346 = vmul.f32 %v3345, %v3194
    %v3347 = vmul.f32 %v3346, %v3345
    %v3348 = vmul.f32 0.5, %v3347
    %v3349 = vsub.f32 1.5, %v3348
    %v3350 = vmul.f32 %v3345, %v3349
    %vm3351 = vweird.f32 %v3194
    %vm3352 = vweird.f32 %v3345
    %vm3353 = vmor %vm3351, %vm3352
    %v3354 = vsel %vm3353, %v3345, %v3350
    %v3355 = vmul.f32 %v2875, %v3204
    %v3356 = vmul.f32 %v2876, %v3214
    %v3357 = vmul.f32 %v2877, %v3224
    %v3358 = vmul.f32 %v2878, %v3234
    %v3359 = vmul.f32 %v2879, %v3244
    %v3360 = vmul.f32 %v2880, %v3254
    %v3361 = vmul.f32 %v2881, %v3264
    %v3362 = vmul.f32 %v2882, %v3274
    %v3363 = vmul.f32 %v2883, %v3284
    %v3364 = vmul.f32 %v2884, %v3294
    %v3365 = vmul.f32 %v2885, %v3304
    %v3366 = vmul.f32 %v2886, %v3314
    %v3367 = vmul.f32 %v2887, %v3324
    %v3368 = vmul.f32 %v2888, %v3334
    %v3369 = vmul.f32 %v2889, %v3344
    %v3370 = vmul.f32 %v2890, %v3354
    %v3371 = vadd.f32 %v371, %v3115
    %v3372 = vadd.f32 %v373, %v3116
    %v3373 = vadd.f32 %v376, %v3117
    %v3374 = vadd.f32 %v378, %v3118
    %v3375 = vadd.f32 %v381, %v3119
    %v3376 = vadd.f32 %v383, %v3120
    %v3377 = vadd.f32 %v386, %v3121
    %v3378 = vadd.f32 %v388, %v3122
    %v3379 = vadd.f32 %v391, %v3123
    %v3380 = vadd.f32 %v393, %v3124
    %v3381 = vadd.f32 %v396, %v3125
    %v3382 = vadd.f32 %v398, %v3126
    %v3383 = vadd.f32 %v401, %v3127
    %v3384 = vadd.f32 %v403, %v3128
    %v3385 = vadd.f32 %v406, %v3129
    %v3386 = vadd.f32 %v408, %v3130
    %v3387 = vadd.f32 %v552, %v3355
    %v3388 = vadd.f32 %v554, %v3356
    %v3389 = vadd.f32 %v557, %v3357
    %v3390 = vadd.f32 %v559, %v3358
    %v3391 = vadd.f32 %v562, %v3359
    %v3392 = vadd.f32 %v564, %v3360
    %v3393 = vadd.f32 %v567, %v3361
    %v3394 = vadd.f32 %v569, %v3362
    %v3395 = vadd.f32 %v572, %v3363
    %v3396 = vadd.f32 %v574, %v3364
    %v3397 = vadd.f32 %v577, %v3365
    %v3398 = vadd.f32 %v579, %v3366
    %v3399 = vadd.f32 %v582, %v3367
    %v3400 = vadd.f32 %v584, %v3368
    %v3401 = vadd.f32 %v587, %v3369
    %v3402 = vadd.f32 %v589, %v3370
    %3403 = vmatpush.xpose.msra.mxu0 %v3402
    %3404 = vmatpush.xpose.msra.mxu0 %v3401
    %3405 = vmatpush.xpose.msra.mxu0 %v3400
    %3406 = vmatpush.xpose.msra.mxu0 %v3399
    %3407 = vmatpush.xpose.msra.mxu0 %v3398
    %3408 = vmatpush.xpose.msra.mxu0 %v3397
    %3409 = vmatpush.xpose.msra.mxu0 %v3396
    %3410 = vmatpush.xpose.msra.mxu0 %v3395
    %3411 = vmatpush.xpose.msra.mxu0 %v3394
    %3412 = vmatpush.xpose.msra.mxu0 %v3393
    %3413 = vmatpush.xpose.msra.mxu0 %v3392
    %3414 = vmatpush.xpose.msra.mxu0 %v3391
    %3415 = vmatpush.xpose.msra.mxu0 %v3390
    %3416 = vmatpush.xpose.msra.mxu0 %v3389
    %3417 = vmatpush.xpose.msra.mxu0 %v3388
    %3418 = vmatpush.xpose.msra.mxu0 %v3387
    %3419 = vmatmul.f32.gmra.mxu0 %v3371
    %v3420 = vpop.f32.mrf.mxu0
    %v3421 = vadd.f32 0.0, %v3420
    %3422 = vmatmul.f32.gmra.mxu0 %v3372
    %v3423 = vpop.f32.mrf.mxu0
    %v3424 = vadd.f32 0.0, %v3423
    %3425 = vmatmul.f32.gmra.mxu0 %v3373
    %v3426 = vpop.f32.mrf.mxu0
    %v3427 = vadd.f32 0.0, %v3426
    %3428 = vmatmul.f32.gmra.mxu0 %v3374
    %v3429 = vpop.f32.mrf.mxu0
    %v3430 = vadd.f32 0.0, %v3429
    %3431 = vmatmul.f32.gmra.mxu0 %v3375
    %v3432 = vpop.f32.mrf.mxu0
    %v3433 = vadd.f32 0.0, %v3432
    %3434 = vmatmul.f32.gmra.mxu0 %v3376
    %v3435 = vpop.f32.mrf.mxu0
    %v3436 = vadd.f32 0.0, %v3435
    %3437 = vmatmul.f32.gmra.mxu0 %v3377
    %v3438 = vpop.f32.mrf.mxu0
    %v3439 = vadd.f32 0.0, %v3438
    %3440 = vmatmul.f32.gmra.mxu0 %v3378
    %v3441 = vpop.f32.mrf.mxu0
    %v3442 = vadd.f32 0.0, %v3441
    %3443 = vmatmul.f32.gmra.mxu0 %v3379
    %v3444 = vpop.f32.mrf.mxu0
    %v3445 = vadd.f32 0.0, %v3444
    %3446 = vmatmul.f32.gmra.mxu0 %v3380
    %v3447 = vpop.f32.mrf.mxu0
    %v3448 = vadd.f32 0.0, %v3447
    %3449 = vmatmul.f32.gmra.mxu0 %v3381
    %v3450 = vpop.f32.mrf.mxu0
    %v3451 = vadd.f32 0.0, %v3450
    %3452 = vmatmul.f32.gmra.mxu0 %v3382
    %v3453 = vpop.f32.mrf.mxu0
    %v3454 = vadd.f32 0.0, %v3453
    %3455 = vmatmul.f32.gmra.mxu0 %v3383
    %v3456 = vpop.f32.mrf.mxu0
    %v3457 = vadd.f32 0.0, %v3456
    %3458 = vmatmul.f32.gmra.mxu0 %v3384
    %v3459 = vpop.f32.mrf.mxu0
    %v3460 = vadd.f32 0.0, %v3459
    %3461 = vmatmul.f32.gmra.mxu0 %v3385
    %v3462 = vpop.f32.mrf.mxu0
    %v3463 = vadd.f32 0.0, %v3462
    %3464 = vmatmul.f32.gmra.mxu0 %v3386
    %v3465 = vpop.f32.mrf.mxu0
    %v3466 = vadd.f32 0.0, %v3465
    %3467 = vdwg.mxu0
    %v3468 = vlaneseq
    %v3469 = vshrl.u32 %v3468, 7
    %v3470 = vadd.s32 %v3469, 8
    %v3471 = vadd.s32 %v3469, 16
    %v3472 = vadd.s32 %v3469, 24
    %v3473 = vadd.s32 %v3469, 32
    %v3474 = vadd.s32 %v3469, 40
    %v3475 = vadd.s32 %v3469, 48
    %v3476 = vadd.s32 %v3469, 56
    %v3477 = vadd.s32 %v3469, 64
    %v3478 = vadd.s32 %v3469, 72
    %v3479 = vadd.s32 %v3469, 80
    %v3480 = vadd.s32 %v3469, 88
    %v3481 = vadd.s32 %v3469, 96
    %v3482 = vadd.s32 %v3469, 104
    %v3483 = vadd.s32 %v3469, 112
    %v3484 = vadd.s32 %v3469, 120
    %v3485 = vld [vmem:[%s19] sm:$0x1]
    %v3486 = vperm.slane %v3485, 0
    %vm3487 = vcmp.eq.s32.totalorder %v3469, %v3486
    %vm3488 = vcmp.eq.s32.totalorder %v3470, %v3486
    %vm3489 = vcmp.eq.s32.totalorder %v3471, %v3486
    %vm3490 = vcmp.eq.s32.totalorder %v3472, %v3486
    %vm3491 = vcmp.eq.s32.totalorder %v3473, %v3486
    %vm3492 = vcmp.eq.s32.totalorder %v3474, %v3486
    %vm3493 = vcmp.eq.s32.totalorder %v3475, %v3486
    %vm3494 = vcmp.eq.s32.totalorder %v3476, %v3486
    %vm3495 = vcmp.eq.s32.totalorder %v3477, %v3486
    %vm3496 = vcmp.eq.s32.totalorder %v3478, %v3486
    %vm3497 = vcmp.eq.s32.totalorder %v3479, %v3486
    %vm3498 = vcmp.eq.s32.totalorder %v3480, %v3486
    %vm3499 = vcmp.eq.s32.totalorder %v3481, %v3486
    %vm3500 = vcmp.eq.s32.totalorder %v3482, %v3486
    %vm3501 = vcmp.eq.s32.totalorder %v3483, %v3486
    %vm3502 = vcmp.eq.s32.totalorder %v3484, %v3486
    %v3503 = vsel %vm3487, 1, 0
    %v3504 = vsel %vm3488, 1, 0
    %v3505 = vsel %vm3489, 1, 0
    %v3506 = vsel %vm3490, 1, 0
    %v3507 = vsel %vm3491, 1, 0
    %v3508 = vsel %vm3492, 1, 0
    %v3509 = vsel %vm3493, 1, 0
    %v3510 = vsel %vm3494, 1, 0
    %v3511 = vsel %vm3495, 1, 0
    %v3512 = vsel %vm3496, 1, 0
    %v3513 = vsel %vm3497, 1, 0
    %v3514 = vsel %vm3498, 1, 0
    %v3515 = vsel %vm3499, 1, 0
    %v3516 = vsel %vm3500, 1, 0
    %v3517 = vsel %vm3501, 1, 0
    %v3518 = vsel %vm3502, 1, 0
    %v3519 = vcvt.s32.f32 %v3503
    %v3520 = vcvt.s32.f32 %v3504
    %v3521 = vcvt.s32.f32 %v3505
    %v3522 = vcvt.s32.f32 %v3506
    %v3523 = vcvt.s32.f32 %v3507
    %v3524 = vcvt.s32.f32 %v3508
    %v3525 = vcvt.s32.f32 %v3509
    %v3526 = vcvt.s32.f32 %v3510
    %v3527 = vcvt.s32.f32 %v3511
    %v3528 = vcvt.s32.f32 %v3512
    %v3529 = vcvt.s32.f32 %v3513
    %v3530 = vcvt.s32.f32 %v3514
    %v3531 = vcvt.s32.f32 %v3515
    %v3532 = vcvt.s32.f32 %v3516
    %v3533 = vcvt.s32.f32 %v3517
    %v3534 = vcvt.s32.f32 %v3518
    %v3535 = vld [vmem:[%s18] sm:$0xff]
    %v3536 = vld [vmem:[%s18 + $0x8] sm:$0xff]
    %v3537 = vld [vmem:[%s18 + $0x10] sm:$0xff]
    %v3538 = vld [vmem:[%s18 + $0x18] sm:$0xff]
    %v3539 = vld [vmem:[%s18 + $0x20] sm:$0xff]
    %v3540 = vld [vmem:[%s18 + $0x28] sm:$0xff]
    %v3541 = vld [vmem:[%s18 + $0x30] sm:$0xff]
    %v3542 = vld [vmem:[%s18 + $0x38] sm:$0xff]
    %v3543 = vld [vmem:[%s18 + $0x40] sm:$0xff]
    %v3544 = vld [vmem:[%s18 + $0x48] sm:$0xff]
    %v3545 = vld [vmem:[%s18 + $0x50] sm:$0xff]
    %v3546 = vld [vmem:[%s18 + $0x58] sm:$0xff]
    %v3547 = vld [vmem:[%s18 + $0x60] sm:$0xff]
    %v3548 = vld [vmem:[%s18 + $0x68] sm:$0xff]
    %v3549 = vld [vmem:[%s18 + $0x70] sm:$0xff]
    %v3550 = vld [vmem:[%s18 + $0x78] sm:$0xff]
    %3552 = vset.pattern.permute.xlu0 0
    %3553 = vperm.xlu0 %3552, %v3535
    %v3554 = vpop.permute.xlu0 %3553
    %3557 = vset.pattern.permute.xlu0 0
    %3558 = vperm.xlu0 %3557, %v3536
    %v3559 = vpop.permute.xlu0 %3558
    %3562 = vset.pattern.permute.xlu0 0
    %3563 = vperm.xlu0 %3562, %v3537
    %v3564 = vpop.permute.xlu0 %3563
    %3567 = vset.pattern.permute.xlu0 0
    %3568 = vperm.xlu0 %3567, %v3538
    %v3569 = vpop.permute.xlu0 %3568
    %3572 = vset.pattern.permute.xlu0 0
    %3573 = vperm.xlu0 %3572, %v3539
    %v3574 = vpop.permute.xlu0 %3573
    %3577 = vset.pattern.permute.xlu0 0
    %3578 = vperm.xlu0 %3577, %v3540
    %v3579 = vpop.permute.xlu0 %3578
    %3582 = vset.pattern.permute.xlu0 0
    %3583 = vperm.xlu0 %3582, %v3541
    %v3584 = vpop.permute.xlu0 %3583
    %3587 = vset.pattern.permute.xlu0 0
    %3588 = vperm.xlu0 %3587, %v3542
    %v3589 = vpop.permute.xlu0 %3588
    %3592 = vset.pattern.permute.xlu0 0
    %3593 = vperm.xlu0 %3592, %v3543
    %v3594 = vpop.permute.xlu0 %3593
    %3597 = vset.pattern.permute.xlu0 0
    %3598 = vperm.xlu0 %3597, %v3544
    %v3599 = vpop.permute.xlu0 %3598
    %3602 = vset.pattern.permute.xlu0 0
    %3603 = vperm.xlu0 %3602, %v3545
    %v3604 = vpop.permute.xlu0 %3603
    %3607 = vset.pattern.permute.xlu0 0
    %3608 = vperm.xlu0 %3607, %v3546
    %v3609 = vpop.permute.xlu0 %3608
    %3612 = vset.pattern.permute.xlu0 0
    %3613 = vperm.xlu0 %3612, %v3547
    %v3614 = vpop.permute.xlu0 %3613
    %3617 = vset.pattern.permute.xlu0 0
    %3618 = vperm.xlu0 %3617, %v3548
    %v3619 = vpop.permute.xlu0 %3618
    %3622 = vset.pattern.permute.xlu0 0
    %3623 = vperm.xlu0 %3622, %v3549
    %v3624 = vpop.permute.xlu0 %3623
    %3627 = vset.pattern.permute.xlu0 0
    %3628 = vperm.xlu0 %3627, %v3550
    %v3629 = vpop.permute.xlu0 %3628
    %3631 = vmatpush.msra.mxu0 %v3534
    %3632 = vmatpush.msra.mxu0 %v3533
    %3633 = vmatpush.msra.mxu0 %v3532
    %3634 = vmatpush.msra.mxu0 %v3531
    %3635 = vmatpush.msra.mxu0 %v3530
    %3636 = vmatpush.msra.mxu0 %v3529
    %3637 = vmatpush.msra.mxu0 %v3528
    %3638 = vmatpush.msra.mxu0 %v3527
    %3639 = vmatpush.msra.mxu0 %v3526
    %3640 = vmatpush.msra.mxu0 %v3525
    %3641 = vmatpush.msra.mxu0 %v3524
    %3642 = vmatpush.msra.mxu0 %v3523
    %3643 = vmatpush.msra.mxu0 %v3522
    %3644 = vmatpush.msra.mxu0 %v3521
    %3645 = vmatpush.msra.mxu0 %v3520
    %3646 = vmatpush.msra.mxu0 %v3519
    %3647 = vmatmul.f32.gmra.mxu0 %v3421
    %v3648 = vpop.f32.mrf.mxu0
    %v3649 = vadd.f32 %v3554, %v3648
    %3650 = vmatmul.f32.gmra.mxu0 %v3424
    %v3651 = vpop.f32.mrf.mxu0
    %v3652 = vadd.f32 %v3559, %v3651
    %3653 = vmatmul.f32.gmra.mxu0 %v3427
    %v3654 = vpop.f32.mrf.mxu0
    %v3655 = vadd.f32 %v3564, %v3654
    %3656 = vmatmul.f32.gmra.mxu0 %v3430
    %v3657 = vpop.f32.mrf.mxu0
    %v3658 = vadd.f32 %v3569, %v3657
    %3659 = vmatmul.f32.gmra.mxu0 %v3433
    %v3660 = vpop.f32.mrf.mxu0
    %v3661 = vadd.f32 %v3574, %v3660
    %3662 = vmatmul.f32.gmra.mxu0 %v3436
    %v3663 = vpop.f32.mrf.mxu0
    %v3664 = vadd.f32 %v3579, %v3663
    %3665 = vmatmul.f32.gmra.mxu0 %v3439
    %v3666 = vpop.f32.mrf.mxu0
    %v3667 = vadd.f32 %v3584, %v3666
    %3668 = vmatmul.f32.gmra.mxu0 %v3442
    %v3669 = vpop.f32.mrf.mxu0
    %v3670 = vadd.f32 %v3589, %v3669
    %3671 = vmatmul.f32.gmra.mxu0 %v3445
    %v3672 = vpop.f32.mrf.mxu0
    %v3673 = vadd.f32 %v3594, %v3672
    %3674 = vmatmul.f32.gmra.mxu0 %v3448
    %v3675 = vpop.f32.mrf.mxu0
    %v3676 = vadd.f32 %v3599, %v3675
    %3677 = vmatmul.f32.gmra.mxu0 %v3451
    %v3678 = vpop.f32.mrf.mxu0
    %v3679 = vadd.f32 %v3604, %v3678
    %3680 = vmatmul.f32.gmra.mxu0 %v3454
    %v3681 = vpop.f32.mrf.mxu0
    %v3682 = vadd.f32 %v3609, %v3681
    %3683 = vmatmul.f32.gmra.mxu0 %v3457
    %v3684 = vpop.f32.mrf.mxu0
    %v3685 = vadd.f32 %v3614, %v3684
    %3686 = vmatmul.f32.gmra.mxu0 %v3460
    %v3687 = vpop.f32.mrf.mxu0
    %v3688 = vadd.f32 %v3619, %v3687
    %3689 = vmatmul.f32.gmra.mxu0 %v3463
    %v3690 = vpop.f32.mrf.mxu0
    %v3691 = vadd.f32 %v3624, %v3690
    %3692 = vmatmul.f32.gmra.mxu0 %v3466
    %v3693 = vpop.f32.mrf.mxu0
    %v3694 = vadd.f32 %v3629, %v3693
    %3695 = vdwg.mxu0
    %v3696 = vld [vmem:[%s20] sm:$0x1]
    %v3697 = vperm.slane %v3696, 0
    %vm3698 = vcmp.eq.s32.totalorder %v3469, %v3697
    %vm3699 = vcmp.eq.s32.totalorder %v3470, %v3697
    %vm3700 = vcmp.eq.s32.totalorder %v3471, %v3697
    %vm3701 = vcmp.eq.s32.totalorder %v3472, %v3697
    %vm3702 = vcmp.eq.s32.totalorder %v3473, %v3697
    %vm3703 = vcmp.eq.s32.totalorder %v3474, %v3697
    %vm3704 = vcmp.eq.s32.totalorder %v3475, %v3697
    %vm3705 = vcmp.eq.s32.totalorder %v3476, %v3697
    %vm3706 = vcmp.eq.s32.totalorder %v3477, %v3697
    %vm3707 = vcmp.eq.s32.totalorder %v3478, %v3697
    %vm3708 = vcmp.eq.s32.totalorder %v3479, %v3697
    %vm3709 = vcmp.eq.s32.totalorder %v3480, %v3697
    %vm3710 = vcmp.eq.s32.totalorder %v3481, %v3697
    %vm3711 = vcmp.eq.s32.totalorder %v3482, %v3697
    %vm3712 = vcmp.eq.s32.totalorder %v3483, %v3697
    %vm3713 = vcmp.eq.s32.totalorder %v3484, %v3697
    %v3714 = vsel %vm3698, 1, 0
    %v3715 = vsel %vm3699, 1, 0
    %v3716 = vsel %vm3700, 1, 0
    %v3717 = vsel %vm3701, 1, 0
    %v3718 = vsel %vm3702, 1, 0
    %v3719 = vsel %vm3703, 1, 0
    %v3720 = vsel %vm3704, 1, 0
    %v3721 = vsel %vm3705, 1, 0
    %v3722 = vsel %vm3706, 1, 0
    %v3723 = vsel %vm3707, 1, 0
    %v3724 = vsel %vm3708, 1, 0
    %v3725 = vsel %vm3709, 1, 0
    %v3726 = vsel %vm3710, 1, 0
    %v3727 = vsel %vm3711, 1, 0
    %v3728 = vsel %vm3712, 1, 0
    %v3729 = vsel %vm3713, 1, 0
    %v3730 = vcvt.s32.f32 %v3714
    %v3731 = vcvt.s32.f32 %v3715
    %v3732 = vcvt.s32.f32 %v3716
    %v3733 = vcvt.s32.f32 %v3717
    %v3734 = vcvt.s32.f32 %v3718
    %v3735 = vcvt.s32.f32 %v3719
    %v3736 = vcvt.s32.f32 %v3720
    %v3737 = vcvt.s32.f32 %v3721
    %v3738 = vcvt.s32.f32 %v3722
    %v3739 = vcvt.s32.f32 %v3723
    %v3740 = vcvt.s32.f32 %v3724
    %v3741 = vcvt.s32.f32 %v3725
    %v3742 = vcvt.s32.f32 %v3726
    %v3743 = vcvt.s32.f32 %v3727
    %v3744 = vcvt.s32.f32 %v3728
    %v3745 = vcvt.s32.f32 %v3729
    %v3746 = vmul.f32 %v3649, %v3730
    %v3747 = vmul.f32 %v3652, %v3731
    %v3748 = vmul.f32 %v3655, %v3732
    %v3749 = vmul.f32 %v3658, %v3733
    %v3750 = vmul.f32 %v3661, %v3734
    %v3751 = vmul.f32 %v3664, %v3735
    %v3752 = vmul.f32 %v3667, %v3736
    %v3753 = vmul.f32 %v3670, %v3737
    %v3754 = vmul.f32 %v3673, %v3738
    %v3755 = vmul.f32 %v3676, %v3739
    %v3756 = vmul.f32 %v3679, %v3740
    %v3757 = vmul.f32 %v3682, %v3741
    %v3758 = vmul.f32 %v3685, %v3742
    %v3759 = vmul.f32 %v3688, %v3743
    %v3760 = vmul.f32 %v3691, %v3744
    %v3761 = vmul.f32 %v3694, %v3745
    %v3762 = vadd.f32 %v3746, %v3747
    %v3763 = vadd.f32 %v3762, %v3748
    %v3764 = vadd.f32 %v3763, %v3749
    %v3765 = vadd.f32 %v3764, %v3750
    %v3766 = vadd.f32 %v3765, %v3751
    %v3767 = vadd.f32 %v3766, %v3752
    %v3768 = vadd.f32 %v3767, %v3753
    %v3769 = vadd.f32 %v3768, %v3754
    %v3770 = vadd.f32 %v3769, %v3755
    %v3771 = vadd.f32 %v3770, %v3756
    %v3772 = vadd.f32 %v3771, %v3757
    %v3773 = vadd.f32 %v3772, %v3758
    %v3774 = vadd.f32 %v3773, %v3759
    %v3775 = vadd.f32 %v3774, %v3760
    %v3776 = vadd.f32 %v3775, %v3761
    %v3777 = vrot.slane %v3776, 4
    %v3778 = vadd.f32 %v3776, %v3777
    %v3779 = vrot.slane %v3778, 2
    %v3780 = vadd.f32 %v3778, %v3779
    %v3781 = vrot.slane %v3780, 1
    %v3782 = vadd.f32 %v3780, %v3781
    %3783 = vst [vmem:[%s21] sm:$0x1] %v3782
    // Predicated region
    $region130: #{pinsage_forward.1} parent=1 // pred_check
      _
    $region131: #{pinsage_forward.1} parent=1 // pred_check_branch
      %3785 = sbr.rel (0) target = $region133
    $region132: #{pinsage_forward.1} parent=1 // pred_region
      _
    $region133: #{pinsage_forward.1} parent=1 // pred_fallthru
      _
    // Predicated region
    $region134: #{pinsage_forward.1} parent=1 // pred_check
      _
    $region135: #{pinsage_forward.1} parent=1 // pred_check_branch
      %3787 = sbr.rel (0) target = $region137
    $region136: #{pinsage_forward.1} parent=1 // pred_region
      _
    $region137: #{pinsage_forward.1} parent=1 // pred_fallthru
      _
    %3788 = vsyncpa [#allocation3], 1
    %3789 = vsyncpa [#allocation5], 1
    %3790 = vsyncpa [#allocation8], 1
    %3791 = vsyncpa [#allocation11], 1
    %3792 = vsyncpa [#allocation14], 1
    %3793 = vsyncpa [#allocation17], 1

</llo_original>
